<compile_context>
chip_gen: v6e
topology: v6e:2x2x1
jax: 0.10.0
libtpu: 0.0.40
codegen_flags: <defaults>
</compile_context>

<pallas_src>
import functools
import math

import jax
import jax.numpy as jnp
from jax.experimental import pallas as pl
from jax.experimental.pallas import tpu as pltpu


CFG = dict(
    vocab_size=64,
    hidden_size=32,        # d_model
    num_heads=4,           # n_head
    intermediate_size=64,  # d_inner
    num_layers=2,          # n_layer
    num_labels=2,
)


# --------------------------- fused transformer + head -----------------------

def _xlnet_fused_kernel(
    x0_ref, mask_ref, segc_ref, segr_ref,
    qkvw_ref, wr_ref, sinq_ref, cosq_ref, coskT_ref, sinkT_ref,
    relbias_ref, segemb_ref, ow_ref, ln_ref,
    f1w_ref, f1b_ref, f2w_ref, f2b_ref,
    sumw_ref, sumb_ref, clsw_ref, clsb_ref, onehot_ref,
    logits_ref, probs_ref, nll_ref,
    h_scr,
    *, S, nh, Dh, ln_eps):
  H = nh * Dh
  F = H // 2
  scale = 1.0 / math.sqrt(Dh)
  layer = pl.program_id(1)
  n_layers = pl.num_programs(1)

  # first layer step for this batch element: seed the resident activations
  @pl.when(layer == 0)
  def _():
    h_scr[...] = x0_ref[0]

  x = h_scr[...]                                                  # (S, H) f32

  def layernorm(v, g, b):
    mu = jnp.mean(v, axis=-1, keepdims=True)
    var = jnp.mean((v - mu) * (v - mu), axis=-1, keepdims=True)
    return (v - mu) * jax.lax.rsqrt(var + ln_eps) * g + b

  # ---- fused QKV projection (MXU) ----
  qkv = jnp.dot(x, qkvw_ref[0], preferred_element_type=jnp.float32)   # (S, 3H)
  bias3 = relbias_ref[0]                                              # (3, H)
  q = qkv[:, 0:H]
  k = qkv[:, H:2 * H]
  v = qkv[:, 2 * H:3 * H]
  # AC/BD/EF are linear in q, so fold the 1/sqrt(Dh) scale in once
  qw = (q + bias3[0:1, :]) * scale      # + r_w_bias
  qr = (q + bias3[1:2, :]) * scale      # + r_r_bias
  qs = (q + bias3[2:3, :]) * scale      # + r_s_bias

  def split_heads(t):                                             # (S,H) -> (nh,S,Dh)
    return jnp.concatenate(
        [t[None, :, n * Dh:(n + 1) * Dh] for n in range(nh)], axis=0)

  qw_h = split_heads(qw)
  qr_h = split_heads(qr)
  qs_h = split_heads(qs)
  k_h = split_heads(k)
  v_h = split_heads(v)

  bdot = functools.partial(jax.lax.dot_general,
                           preferred_element_type=jnp.float32)

  # ---- content term AC: (q + r_w_bias) . k, batched over heads (MXU) ----
  ac = bdot(qw_h, k_h, (((2,), (2,)), ((0,), (0,))))              # (nh, S, S)

  # ---- position term BD via the sinusoid angle-difference identity (MXU) ----
  uv = bdot(qr_h, wr_ref[0], (((2,), (1,)), ((0,), (0,))))        # (nh, S, H)
  u_part = uv[:, :, 0:F]                                          # sin coefficients
  v_part = uv[:, :, F:H]                                          # cos coefficients
  sinq = sinq_ref[...]                                            # (S, F): sin(i*w)
  cosq = cosq_ref[...]                                            # (S, F): cos(i*w)
  a_t = (u_part * sinq + v_part * cosq).reshape(nh * S, F)
  b_t = (v_part * sinq - u_part * cosq).reshape(nh * S, F)
  bd = (jnp.dot(a_t, coskT_ref[...], preferred_element_type=jnp.float32) +
        jnp.dot(b_t, sinkT_ref[...], preferred_element_type=jnp.float32)
        ).reshape(nh, S, S)

  # ---- segment term EF: (q + r_s_bias) . seg_embed[same/diff] ----
  ef_pair = bdot(qs_h, segemb_ref[0], (((2,), (2,)), ((0,), (0,))))  # (nh, S, 2)
  seg_diff = (segc_ref[0] != segr_ref[0]).astype(jnp.float32)        # (S, S)
  ef_same = ef_pair[:, :, 0:1]
  ef_diff = ef_pair[:, :, 1:2]
  ef = ef_same + (ef_diff - ef_same) * seg_diff[None, :, :]          # (nh, S, S)

  # ---- softmax over keys (additive padding mask on the key axis) ----
  scores = ac + bd + ef + mask_ref[0]                             # (nh,S,S)+(1,S)
  scores = scores - jnp.max(scores, axis=-1, keepdims=True)
  p = jnp.exp(scores)
  p = p / jnp.sum(p, axis=-1, keepdims=True)

  # ---- context + output projection (per-head contraction, summed over heads) ----
  ctx = bdot(p, v_h, (((2,), (1,)), ((0,), (0,))))                # (nh, S, Dh)
  attn_out = jnp.sum(
      bdot(ctx, ow_ref[0], (((2,), (1,)), ((0,), (0,)))), axis=0)  # (S, H)

  ln = ln_ref[0]                                                  # (4, H)
  h1 = layernorm(attn_out + x, ln[0:1, :], ln[1:2, :])

  # ---- position-wise FFN (tanh-approx gelu) ----
  ff = jnp.dot(h1, f1w_ref[0], preferred_element_type=jnp.float32) + f1b_ref[0]
  ff = 0.5 * ff * (1.0 + jnp.tanh(0.7978845608028654 *
                                  (ff + 0.044715 * ff * ff * ff)))
  ff2 = jnp.dot(ff, f2w_ref[0], preferred_element_type=jnp.float32) + f2b_ref[0]
  x_new = layernorm(ff2 + h1, ln[2:3, :], ln[3:4, :])

  h_scr[...] = x_new

  # ---- fused classification head on the final layer step ----
  @pl.when(layer == n_layers - 1)
  def _():
    last = x_new[S - 1:S, :]                                      # (1, H) "last" token
    pooled = jnp.tanh(
        jnp.dot(last, sumw_ref[...], preferred_element_type=jnp.float32)
        + sumb_ref[...])
    logits = (jnp.dot(pooled, clsw_ref[...], preferred_element_type=jnp.float32)
              + clsb_ref[...])                                    # (1, NL)
    m = jnp.max(logits, axis=-1, keepdims=True)
    e = jnp.exp(logits - m)
    se = jnp.sum(e, axis=-1, keepdims=True)
    logp = (logits - m) - jnp.log(se)
    logits_ref[...] = logits[None]
    probs_ref[...] = (e / se)[None]
    nll_ref[...] = (-jnp.sum(onehot_ref[0] * logp, axis=-1, keepdims=True))[None]


# ------------------------------ glue / params --------------------------------

def init_params(key, cfg):
  V = cfg["vocab_size"]
  H = cfg["hidden_size"]
  I = cfg["intermediate_size"]
  L = cfg["num_layers"]
  NL = cfg["num_labels"]
  ks = jax.random.split(key, 10)
  s = 0.02
  ln_one = jnp.concatenate([jnp.ones((1, H)), jnp.zeros((1, H)),
                            jnp.ones((1, H)), jnp.zeros((1, H))], axis=0)
  return {
      "word_emb": s * jax.random.normal(ks[0], (V, H), jnp.float32),
      "qkv_w": s * jax.random.normal(ks[1], (L, H, 3 * H), jnp.float32),
      "r_w": s * jax.random.normal(ks[2], (L, H, H), jnp.float32),       # rel-pos proj
      "rel_bias": s * jax.random.normal(ks[3], (L, 3, H), jnp.float32),  # r_w/r_r/r_s
      "seg_embed": s * jax.random.normal(ks[4], (L, 2, H), jnp.float32),
      "o_w": s * jax.random.normal(ks[5], (L, H, H), jnp.float32),
      "ln": jnp.broadcast_to(ln_one, (L, 4, H)).astype(jnp.float32),
      "ffn1_w": s * jax.random.normal(ks[6], (L, H, I), jnp.float32),
      "ffn1_b": jnp.zeros((L, 1, I), jnp.float32),
      "ffn2_w": s * jax.random.normal(ks[7], (L, I, H), jnp.float32),
      "ffn2_b": jnp.zeros((L, 1, H), jnp.float32),
      "sum_w": s * jax.random.normal(ks[8], (H, H), jnp.float32),
      "sum_b": jnp.zeros((1, H), jnp.float32),
      "cls_w": s * jax.random.normal(ks[9], (H, NL), jnp.float32),
      "cls_b": jnp.zeros((1, NL), jnp.float32),
  }


def xlnet_forward(params, batch_seqs, batch_seq_masks, batch_seq_segments,
                  labels, cfg):
  B, S = batch_seqs.shape
  H = cfg["hidden_size"]
  nh = cfg["num_heads"]
  Dh = H // nh
  F = H // 2
  I = cfg["intermediate_size"]
  L = cfg["num_layers"]
  NL = cfg["num_labels"]

  # ---- glue: embedding gather, masks, parameter re-layout (O(params)+O(B*S)) ----
  x0 = jnp.take(params["word_emb"], batch_seqs, axis=0)                 # (B, S, H)
  mask_add = ((1.0 - batch_seq_masks.astype(jnp.float32)) * -1e9).reshape(B, 1, S)
  seg_f = batch_seq_segments.astype(jnp.float32)
  seg_col = seg_f.reshape(B, S, 1)
  seg_row = seg_f.reshape(B, 1, S)
  onehot = jax.nn.one_hot(labels, NL, dtype=jnp.float32).reshape(B, 1, NL)

  # sinusoid tables for the relative-position (BD) term
  inv_freq = 1.0 / (10000.0 ** (jnp.arange(0, H, 2, dtype=jnp.float32) / H))  # (F,)
  ang = jnp.arange(S, dtype=jnp.float32)[:, None] * inv_freq[None, :]         # (S, F)
  sin_q = jnp.sin(ang)
  cos_q = jnp.cos(ang)
  sinT_k = sin_q.T                                                            # (F, S)
  cosT_k = cos_q.T

  # head-major parameter views (weight-only preprocessing, folded by XLA)
  wr_heads = jnp.transpose(params["r_w"], (0, 2, 1)).reshape(L, nh, Dh, H)
  o_heads = params["o_w"].reshape(L, nh, Dh, H)
  segemb_h = jnp.transpose(params["seg_embed"].reshape(L, 2, nh, Dh), (0, 2, 1, 3))

  batch3 = lambda b, l: (b, 0, 0)
  layer3 = lambda b, l: (l, 0, 0)
  layer4 = lambda b, l: (l, 0, 0, 0)
  const2 = lambda b, l: (0, 0)

  kern = functools.partial(_xlnet_fused_kernel, S=S, nh=nh, Dh=Dh, ln_eps=1e-12)

  logits3, probs3, nll3 = pl.pallas_call(
      kern,
      out_shape=(jax.ShapeDtypeStruct((B, 1, NL), jnp.float32),
                 jax.ShapeDtypeStruct((B, 1, NL), jnp.float32),
                 jax.ShapeDtypeStruct((B, 1, 1), jnp.float32)),
      grid=(B, L),
      in_specs=[
          pl.BlockSpec((1, S, H), batch3),        # embeddings
          pl.BlockSpec((1, 1, S), batch3),        # additive key padding mask
          pl.BlockSpec((1, S, 1), batch3),        # segment ids (column form)
          pl.BlockSpec((1, 1, S), batch3),        # segment ids (row form)
          pl.BlockSpec((1, H, 3 * H), layer3),    # fused QKV weight
          pl.BlockSpec((1, nh, Dh, H), layer4),   # rel-pos projection, head-major
          pl.BlockSpec((S, F), const2),           # sin(i*w)
          pl.BlockSpec((S, F), const2),           # cos(i*w)
          pl.BlockSpec((F, S), const2),           # cos(j*w)^T
          pl.BlockSpec((F, S), const2),           # sin(j*w)^T
          pl.BlockSpec((1, 3, H), layer3),        # r_w / r_r / r_s biases
          pl.BlockSpec((1, nh, 2, Dh), layer4),   # seg_embed, head-major
          pl.BlockSpec((1, nh, Dh, H), layer4),   # attn output proj, head-major
          pl.BlockSpec((1, 4, H), layer3),        # 2x LayerNorm params
          pl.BlockSpec((1, H, I), layer3),        # FFN in
          pl.BlockSpec((1, 1, I), layer3),
          pl.BlockSpec((1, I, H), layer3),        # FFN out
          pl.BlockSpec((1, 1, H), layer3),
          pl.BlockSpec((H, H), const2),           # sequence-summary proj
          pl.BlockSpec((1, H), const2),
          pl.BlockSpec((H, NL), const2),          # classifier
          pl.BlockSpec((1, NL), const2),
          pl.BlockSpec((1, 1, NL), batch3),       # one-hot labels
      ],
      out_specs=(pl.BlockSpec((1, 1, NL), batch3),
                 pl.BlockSpec((1, 1, NL), batch3),
                 pl.BlockSpec((1, 1, 1), batch3)),
      scratch_shapes=[pltpu.VMEM((S, H), jnp.float32)],
      compiler_params=pltpu.CompilerParams(
          dimension_semantics=("parallel", "arbitrary"),
          vmem_limit_bytes=32 * 1024 * 1024),
  )(x0, mask_add, seg_col, seg_row,
    params["qkv_w"], wr_heads, sin_q, cos_q, cosT_k, sinT_k,
    params["rel_bias"], segemb_h, o_heads, params["ln"],
    params["ffn1_w"], params["ffn1_b"], params["ffn2_w"], params["ffn2_b"],
    params["sum_w"], params["sum_b"], params["cls_w"], params["cls_b"], onehot)

  logits = logits3.reshape(B, NL)
  probabilities = probs3.reshape(B, NL)
  loss = jnp.mean(nll3)                       # CrossEntropyLoss (mean over batch)
  return loss, logits, probabilities


# ----------------------------------- main ------------------------------------

if __name__ == "__main__":
  key = jax.random.PRNGKey(0)
  pkey, dkey = jax.random.split(key)
  params = init_params(pkey, CFG)

  B, S = 2, 8
  k1, k2 = jax.random.split(dkey)
  batch_seqs = jax.random.randint(k1, (B, S), 0, CFG["vocab_size"], dtype=jnp.int32)
  # XLNet is left-padded: pad tokens first, so the "last"-token summary is real.
  batch_seq_masks = jnp.concatenate(
      [jnp.zeros((B, 2), jnp.int32), jnp.ones((B, S - 2), jnp.int32)], axis=1)
  batch_seq_segments = jnp.concatenate(
      [jnp.zeros((B, S // 2), jnp.int32), jnp.ones((B, S // 2), jnp.int32)], axis=1)
  labels = jax.random.randint(k2, (B,), 0, CFG["num_labels"], dtype=jnp.int32)

  fwd = jax.jit(functools.partial(xlnet_forward, cfg=CFG))
  loss, logits, probs = fwd(params, batch_seqs, batch_seq_masks,
                            batch_seq_segments, labels)
  jax.block_until_ready((loss, logits, probs))

  assert logits.shape == (B, CFG["num_labels"])
  assert probs.shape == (B, CFG["num_labels"])
  assert loss.shape == ()
  assert bool(jnp.isfinite(loss))
  assert bool(jnp.all(jnp.isfinite(logits)))
  print("KERNEL_OK")
</pallas_src>

<mosaic_0001>
module attributes {stable_mosaic.version = 11 : i64} {
  func.func @_xlnet_fused_kernel(%arg0: i32, %arg1: i32, %arg2: memref<1x8x32xf32, #tpu.memory_space<vmem>>, %arg3: memref<1x1x8xf32, #tpu.memory_space<vmem>>, %arg4: memref<1x8x1xf32, #tpu.memory_space<vmem>>, %arg5: memref<1x1x8xf32, #tpu.memory_space<vmem>>, %arg6: memref<1x32x96xf32, #tpu.memory_space<vmem>>, %arg7: memref<1x4x8x32xf32, #tpu.memory_space<vmem>>, %arg8: memref<8x16xf32, #tpu.memory_space<vmem>>, %arg9: memref<8x16xf32, #tpu.memory_space<vmem>>, %arg10: memref<16x8xf32, #tpu.memory_space<vmem>>, %arg11: memref<16x8xf32, #tpu.memory_space<vmem>>, %arg12: memref<1x3x32xf32, #tpu.memory_space<vmem>>, %arg13: memref<1x4x2x8xf32, #tpu.memory_space<vmem>>, %arg14: memref<1x4x8x32xf32, #tpu.memory_space<vmem>>, %arg15: memref<1x4x32xf32, #tpu.memory_space<vmem>>, %arg16: memref<1x32x64xf32, #tpu.memory_space<vmem>>, %arg17: memref<1x1x64xf32, #tpu.memory_space<vmem>>, %arg18: memref<1x64x32xf32, #tpu.memory_space<vmem>>, %arg19: memref<1x1x32xf32, #tpu.memory_space<vmem>>, %arg20: memref<32x32xf32, #tpu.memory_space<vmem>>, %arg21: memref<1x32xf32, #tpu.memory_space<vmem>>, %arg22: memref<32x2xf32, #tpu.memory_space<vmem>>, %arg23: memref<1x2xf32, #tpu.memory_space<vmem>>, %arg24: memref<1x1x2xf32, #tpu.memory_space<vmem>>, %arg25: memref<1x1x2xf32, #tpu.memory_space<vmem>>, %arg26: memref<1x1x2xf32, #tpu.memory_space<vmem>>, %arg27: memref<1x1x1xf32, #tpu.memory_space<vmem>>, %arg28: memref<8x32xf32, #tpu.memory_space<vmem>>) attributes {dimension_semantics = [#tpu.dimension_semantics<parallel>, #tpu.dimension_semantics<arbitrary>], iteration_bounds = array<i64: 2, 2>, scalar_prefetch = 0 : i64, scratch_operands = 1 : i64, tpu.core_type = #tpu.core_type<tc>, window_params = [{transform_indices = @transform_0, window_bounds = array<i64: 1, 8, 32>}, {transform_indices = @transform_1, window_bounds = array<i64: 1, 1, 8>}, {transform_indices = @transform_2, window_bounds = array<i64: 1, 8, 1>}, {transform_indices = @transform_3, window_bounds = array<i64: 1, 1, 8>}, {transform_indices = @transform_4, window_bounds = array<i64: 1, 32, 96>}, {transform_indices = @transform_5, window_bounds = array<i64: 1, 4, 8, 32>}, {pipeline_mode = #tpu.pipeline_mode<synchronous>, transform_indices = @transform_6, window_bounds = array<i64: 8, 16>}, {pipeline_mode = #tpu.pipeline_mode<synchronous>, transform_indices = @transform_7, window_bounds = array<i64: 8, 16>}, {pipeline_mode = #tpu.pipeline_mode<synchronous>, transform_indices = @transform_8, window_bounds = array<i64: 16, 8>}, {pipeline_mode = #tpu.pipeline_mode<synchronous>, transform_indices = @transform_9, window_bounds = array<i64: 16, 8>}, {transform_indices = @transform_10, window_bounds = array<i64: 1, 3, 32>}, {transform_indices = @transform_11, window_bounds = array<i64: 1, 4, 2, 8>}, {transform_indices = @transform_12, window_bounds = array<i64: 1, 4, 8, 32>}, {transform_indices = @transform_13, window_bounds = array<i64: 1, 4, 32>}, {transform_indices = @transform_14, window_bounds = array<i64: 1, 32, 64>}, {transform_indices = @transform_15, window_bounds = array<i64: 1, 1, 64>}, {transform_indices = @transform_16, window_bounds = array<i64: 1, 64, 32>}, {transform_indices = @transform_17, window_bounds = array<i64: 1, 1, 32>}, {pipeline_mode = #tpu.pipeline_mode<synchronous>, transform_indices = @transform_18, window_bounds = array<i64: 32, 32>}, {pipeline_mode = #tpu.pipeline_mode<synchronous>, transform_indices = @transform_19, window_bounds = array<i64: 1, 32>}, {pipeline_mode = #tpu.pipeline_mode<synchronous>, transform_indices = @transform_20, window_bounds = array<i64: 32, 2>}, {pipeline_mode = #tpu.pipeline_mode<synchronous>, transform_indices = @transform_21, window_bounds = array<i64: 1, 2>}, {transform_indices = @transform_22, window_bounds = array<i64: 1, 1, 2>}, {transform_indices = @transform_23, window_bounds = array<i64: 1, 1, 2>}, {transform_indices = @transform_24, window_bounds = array<i64: 1, 1, 2>}, {transform_indices = @transform_25, window_bounds = array<i64: 1, 1, 1>}]} {
    %c0_i32 = arith.constant 0 : i32
    %0 = arith.cmpi eq, %arg1, %c0_i32 : i32
    %1 = arith.extui %0 : i1 to i32
    %c0_i32_0 = arith.constant 0 : i32
    %2 = arith.cmpi ne, %1, %c0_i32_0 : i32
    scf.if %2 {
      %c0_84 = arith.constant 0 : index
      %c0_85 = arith.constant 0 : index
      %c0_86 = arith.constant 0 : index
      %231 = vector.load %arg2[%c0_84, %c0_85, %c0_86] : memref<1x8x32xf32, #tpu.memory_space<vmem>>, vector<1x8x32xf32>
      %232 = vector.shape_cast %231 : vector<1x8x32xf32> to vector<8x32xf32>
      %c0_87 = arith.constant 0 : index
      %c0_88 = arith.constant 0 : index
      %233 = vector.load %arg28[%c0_87, %c0_88] : memref<8x32xf32, #tpu.memory_space<vmem>>, vector<8x32xf32>
      tpu.vector_store %arg28[%c0_87, %c0_88], %232 {strides = array<i32>} : memref<8x32xf32, #tpu.memory_space<vmem>>, vector<8x32xf32>,
    } else {
    }
    %c0 = arith.constant 0 : index
    %c0_1 = arith.constant 0 : index
    %3 = vector.load %arg28[%c0, %c0_1] : memref<8x32xf32, #tpu.memory_space<vmem>>, vector<8x32xf32>
    %c0_2 = arith.constant 0 : index
    %c0_3 = arith.constant 0 : index
    %c0_4 = arith.constant 0 : index
    %4 = vector.load %arg6[%c0_2, %c0_3, %c0_4] : memref<1x32x96xf32, #tpu.memory_space<vmem>>, vector<1x32x96xf32>
    %5 = vector.shape_cast %4 : vector<1x32x96xf32> to vector<32x96xf32>
    %cst = arith.constant dense<0.000000e+00> : vector<8x96xf32>
    %6 = tpu.matmul %3, %5, %cst {dimension_numbers = #tpu.dot_dimension_numbers<[1], [0], [0], [1], [0, 0, 1, 1], [], []>} : vector<8x32xf32>, vector<32x96xf32>, vector<8x96xf32> -> vector<8x96xf32>
    %c0_5 = arith.constant 0 : index
    %c0_6 = arith.constant 0 : index
    %c0_7 = arith.constant 0 : index
    %7 = vector.load %arg12[%c0_5, %c0_6, %c0_7] : memref<1x3x32xf32, #tpu.memory_space<vmem>>, vector<1x3x32xf32>
    %8 = vector.shape_cast %7 : vector<1x3x32xf32> to vector<3x32xf32>
    %9 = vector.extract_strided_slice %6 {offsets = [0, 0], sizes = [8, 32], strides = [1, 1]} : vector<8x96xf32> to vector<8x32xf32>
    %10 = vector.extract_strided_slice %6 {offsets = [0, 32], sizes = [8, 32], strides = [1, 1]} : vector<8x96xf32> to vector<8x32xf32>
    %11 = vector.extract_strided_slice %6 {offsets = [0, 64], sizes = [8, 32], strides = [1, 1]} : vector<8x96xf32> to vector<8x32xf32>
    %12 = vector.extract_strided_slice %8 {offsets = [0, 0], sizes = [1, 32], strides = [1, 1]} : vector<3x32xf32> to vector<1x32xf32>
    %13 = vector.broadcast %12 : vector<1x32xf32> to vector<8x32xf32>
    %14 = arith.addf %9, %13 : vector<8x32xf32>
    %cst_8 = arith.constant 0.353553385 : f32
    %15 = vector.broadcast %cst_8 : f32 to vector<8x32xf32>
    %16 = arith.mulf %14, %15 : vector<8x32xf32>
    %17 = vector.extract_strided_slice %8 {offsets = [1, 0], sizes = [1, 32], strides = [1, 1]} : vector<3x32xf32> to vector<1x32xf32>
    %18 = vector.broadcast %17 : vector<1x32xf32> to vector<8x32xf32>
    %19 = arith.addf %9, %18 : vector<8x32xf32>
    %cst_9 = arith.constant 0.353553385 : f32
    %20 = vector.broadcast %cst_9 : f32 to vector<8x32xf32>
    %21 = arith.mulf %19, %20 : vector<8x32xf32>
    %22 = vector.extract_strided_slice %8 {offsets = [2, 0], sizes = [1, 32], strides = [1, 1]} : vector<3x32xf32> to vector<1x32xf32>
    %23 = vector.broadcast %22 : vector<1x32xf32> to vector<8x32xf32>
    %24 = arith.addf %9, %23 : vector<8x32xf32>
    %cst_10 = arith.constant 0.353553385 : f32
    %25 = vector.broadcast %cst_10 : f32 to vector<8x32xf32>
    %26 = arith.mulf %24, %25 : vector<8x32xf32>
    %27 = vector.extract_strided_slice %16 {offsets = [0, 0], sizes = [8, 8], strides = [1, 1]} : vector<8x32xf32> to vector<8x8xf32>
    %28 = vector.shape_cast %27 : vector<8x8xf32> to vector<1x8x8xf32>
    %29 = vector.extract_strided_slice %16 {offsets = [0, 8], sizes = [8, 8], strides = [1, 1]} : vector<8x32xf32> to vector<8x8xf32>
    %30 = vector.shape_cast %29 : vector<8x8xf32> to vector<1x8x8xf32>
    %31 = vector.extract_strided_slice %16 {offsets = [0, 16], sizes = [8, 8], strides = [1, 1]} : vector<8x32xf32> to vector<8x8xf32>
    %32 = vector.shape_cast %31 : vector<8x8xf32> to vector<1x8x8xf32>
    %33 = vector.extract_strided_slice %16 {offsets = [0, 24], sizes = [8, 8], strides = [1, 1]} : vector<8x32xf32> to vector<8x8xf32>
    %34 = vector.shape_cast %33 : vector<8x8xf32> to vector<1x8x8xf32>
    %35 = tpu.concatenate %28, %30, %32, %34 in 0 : vector<1x8x8xf32>, vector<1x8x8xf32>, vector<1x8x8xf32>, vector<1x8x8xf32> -> vector<4x8x8xf32>
    %36 = vector.extract_strided_slice %21 {offsets = [0, 0], sizes = [8, 8], strides = [1, 1]} : vector<8x32xf32> to vector<8x8xf32>
    %37 = vector.shape_cast %36 : vector<8x8xf32> to vector<1x8x8xf32>
    %38 = vector.extract_strided_slice %21 {offsets = [0, 8], sizes = [8, 8], strides = [1, 1]} : vector<8x32xf32> to vector<8x8xf32>
    %39 = vector.shape_cast %38 : vector<8x8xf32> to vector<1x8x8xf32>
    %40 = vector.extract_strided_slice %21 {offsets = [0, 16], sizes = [8, 8], strides = [1, 1]} : vector<8x32xf32> to vector<8x8xf32>
    %41 = vector.shape_cast %40 : vector<8x8xf32> to vector<1x8x8xf32>
    %42 = vector.extract_strided_slice %21 {offsets = [0, 24], sizes = [8, 8], strides = [1, 1]} : vector<8x32xf32> to vector<8x8xf32>
    %43 = vector.shape_cast %42 : vector<8x8xf32> to vector<1x8x8xf32>
    %44 = tpu.concatenate %37, %39, %41, %43 in 0 : vector<1x8x8xf32>, vector<1x8x8xf32>, vector<1x8x8xf32>, vector<1x8x8xf32> -> vector<4x8x8xf32>
    %45 = vector.extract_strided_slice %26 {offsets = [0, 0], sizes = [8, 8], strides = [1, 1]} : vector<8x32xf32> to vector<8x8xf32>
    %46 = vector.shape_cast %45 : vector<8x8xf32> to vector<1x8x8xf32>
    %47 = vector.extract_strided_slice %26 {offsets = [0, 8], sizes = [8, 8], strides = [1, 1]} : vector<8x32xf32> to vector<8x8xf32>
    %48 = vector.shape_cast %47 : vector<8x8xf32> to vector<1x8x8xf32>
    %49 = vector.extract_strided_slice %26 {offsets = [0, 16], sizes = [8, 8], strides = [1, 1]} : vector<8x32xf32> to vector<8x8xf32>
    %50 = vector.shape_cast %49 : vector<8x8xf32> to vector<1x8x8xf32>
    %51 = vector.extract_strided_slice %26 {offsets = [0, 24], sizes = [8, 8], strides = [1, 1]} : vector<8x32xf32> to vector<8x8xf32>
    %52 = vector.shape_cast %51 : vector<8x8xf32> to vector<1x8x8xf32>
    %53 = tpu.concatenate %46, %48, %50, %52 in 0 : vector<1x8x8xf32>, vector<1x8x8xf32>, vector<1x8x8xf32>, vector<1x8x8xf32> -> vector<4x8x8xf32>
    %54 = vector.extract_strided_slice %10 {offsets = [0, 0], sizes = [8, 8], strides = [1, 1]} : vector<8x32xf32> to vector<8x8xf32>
    %55 = vector.shape_cast %54 : vector<8x8xf32> to vector<1x8x8xf32>
    %56 = vector.extract_strided_slice %10 {offsets = [0, 8], sizes = [8, 8], strides = [1, 1]} : vector<8x32xf32> to vector<8x8xf32>
    %57 = vector.shape_cast %56 : vector<8x8xf32> to vector<1x8x8xf32>
    %58 = vector.extract_strided_slice %10 {offsets = [0, 16], sizes = [8, 8], strides = [1, 1]} : vector<8x32xf32> to vector<8x8xf32>
    %59 = vector.shape_cast %58 : vector<8x8xf32> to vector<1x8x8xf32>
    %60 = vector.extract_strided_slice %10 {offsets = [0, 24], sizes = [8, 8], strides = [1, 1]} : vector<8x32xf32> to vector<8x8xf32>
    %61 = vector.shape_cast %60 : vector<8x8xf32> to vector<1x8x8xf32>
    %62 = tpu.concatenate %55, %57, %59, %61 in 0 : vector<1x8x8xf32>, vector<1x8x8xf32>, vector<1x8x8xf32>, vector<1x8x8xf32> -> vector<4x8x8xf32>
    %63 = vector.extract_strided_slice %11 {offsets = [0, 0], sizes = [8, 8], strides = [1, 1]} : vector<8x32xf32> to vector<8x8xf32>
    %64 = vector.shape_cast %63 : vector<8x8xf32> to vector<1x8x8xf32>
    %65 = vector.extract_strided_slice %11 {offsets = [0, 8], sizes = [8, 8], strides = [1, 1]} : vector<8x32xf32> to vector<8x8xf32>
    %66 = vector.shape_cast %65 : vector<8x8xf32> to vector<1x8x8xf32>
    %67 = vector.extract_strided_slice %11 {offsets = [0, 16], sizes = [8, 8], strides = [1, 1]} : vector<8x32xf32> to vector<8x8xf32>
    %68 = vector.shape_cast %67 : vector<8x8xf32> to vector<1x8x8xf32>
    %69 = vector.extract_strided_slice %11 {offsets = [0, 24], sizes = [8, 8], strides = [1, 1]} : vector<8x32xf32> to vector<8x8xf32>
    %70 = vector.shape_cast %69 : vector<8x8xf32> to vector<1x8x8xf32>
    %71 = tpu.concatenate %64, %66, %68, %70 in 0 : vector<1x8x8xf32>, vector<1x8x8xf32>, vector<1x8x8xf32>, vector<1x8x8xf32> -> vector<4x8x8xf32>
    %cst_11 = arith.constant dense<0.000000e+00> : vector<4x8x8xf32>
    %72 = tpu.matmul %35, %62, %cst_11 {dimension_numbers = #tpu.dot_dimension_numbers<[2], [2], [1], [1], [0, 0, 0, 1, 1, 1], [0], [0]>} : vector<4x8x8xf32>, vector<4x8x8xf32>, vector<4x8x8xf32> -> vector<4x8x8xf32>
    %c0_12 = arith.constant 0 : index
    %c0_13 = arith.constant 0 : index
    %c0_14 = arith.constant 0 : index
    %c0_15 = arith.constant 0 : index
    %73 = vector.load %arg7[%c0_12, %c0_13, %c0_14, %c0_15] : memref<1x4x8x32xf32, #tpu.memory_space<vmem>>, vector<1x4x8x32xf32>
    %74 = vector.shape_cast %73 : vector<1x4x8x32xf32> to vector<4x8x32xf32>
    %cst_16 = arith.constant dense<0.000000e+00> : vector<4x8x32xf32>
    %75 = tpu.matmul %44, %74, %cst_16 {dimension_numbers = #tpu.dot_dimension_numbers<[2], [1], [1], [2], [0, 0, 0, 1, 1, 2], [0], [0]>} : vector<4x8x8xf32>, vector<4x8x32xf32>, vector<4x8x32xf32> -> vector<4x8x32xf32>
    %76 = vector.extract_strided_slice %75 {offsets = [0, 0, 0], sizes = [4, 8, 16], strides = [1, 1, 1]} : vector<4x8x32xf32> to vector<4x8x16xf32>
    %77 = vector.extract_strided_slice %75 {offsets = [0, 0, 16], sizes = [4, 8, 16], strides = [1, 1, 1]} : vector<4x8x32xf32> to vector<4x8x16xf32>
    %c0_17 = arith.constant 0 : index
    %c0_18 = arith.constant 0 : index
    %78 = vector.load %arg8[%c0_17, %c0_18] : memref<8x16xf32, #tpu.memory_space<vmem>>, vector<8x16xf32>
    %c0_19 = arith.constant 0 : index
    %c0_20 = arith.constant 0 : index
    %79 = vector.load %arg9[%c0_19, %c0_20] : memref<8x16xf32, #tpu.memory_space<vmem>>, vector<8x16xf32>
    %80 = vector.shape_cast %78 : vector<8x16xf32> to vector<1x8x16xf32>
    %81 = vector.broadcast %80 : vector<1x8x16xf32> to vector<4x8x16xf32>
    %82 = arith.mulf %76, %81 : vector<4x8x16xf32>
    %83 = vector.shape_cast %79 : vector<8x16xf32> to vector<1x8x16xf32>
    %84 = vector.broadcast %83 : vector<1x8x16xf32> to vector<4x8x16xf32>
    %85 = arith.mulf %77, %84 : vector<4x8x16xf32>
    %86 = arith.addf %82, %85 : vector<4x8x16xf32>
    %87 = vector.shape_cast %86 : vector<4x8x16xf32> to vector<32x16xf32>
    %88 = vector.shape_cast %78 : vector<8x16xf32> to vector<1x8x16xf32>
    %89 = vector.broadcast %88 : vector<1x8x16xf32> to vector<4x8x16xf32>
    %90 = arith.mulf %77, %89 : vector<4x8x16xf32>
    %91 = vector.shape_cast %79 : vector<8x16xf32> to vector<1x8x16xf32>
    %92 = vector.broadcast %91 : vector<1x8x16xf32> to vector<4x8x16xf32>
    %93 = arith.mulf %76, %92 : vector<4x8x16xf32>
    %94 = arith.subf %90, %93 : vector<4x8x16xf32>
    %95 = vector.shape_cast %94 : vector<4x8x16xf32> to vector<32x16xf32>
    %c0_21 = arith.constant 0 : index
    %c0_22 = arith.constant 0 : index
    %96 = vector.load %arg10[%c0_21, %c0_22] : memref<16x8xf32, #tpu.memory_space<vmem>>, vector<16x8xf32>
    %cst_23 = arith.constant dense<0.000000e+00> : vector<32x8xf32>
    %97 = tpu.matmul %87, %96, %cst_23 {dimension_numbers = #tpu.dot_dimension_numbers<[1], [0], [0], [1], [0, 0, 1, 1], [], []>} : vector<32x16xf32>, vector<16x8xf32>, vector<32x8xf32> -> vector<32x8xf32>
    %c0_24 = arith.constant 0 : index
    %c0_25 = arith.constant 0 : index
    %98 = vector.load %arg11[%c0_24, %c0_25] : memref<16x8xf32, #tpu.memory_space<vmem>>, vector<16x8xf32>
    %cst_26 = arith.constant dense<0.000000e+00> : vector<32x8xf32>
    %99 = tpu.matmul %95, %98, %cst_26 {dimension_numbers = #tpu.dot_dimension_numbers<[1], [0], [0], [1], [0, 0, 1, 1], [], []>} : vector<32x16xf32>, vector<16x8xf32>, vector<32x8xf32> -> vector<32x8xf32>
    %100 = arith.addf %97, %99 : vector<32x8xf32>
    %101 = vector.shape_cast %100 : vector<32x8xf32> to vector<4x8x8xf32>
    %c0_27 = arith.constant 0 : index
    %c0_28 = arith.constant 0 : index
    %c0_29 = arith.constant 0 : index
    %c0_30 = arith.constant 0 : index
    %102 = vector.load %arg13[%c0_27, %c0_28, %c0_29, %c0_30] : memref<1x4x2x8xf32, #tpu.memory_space<vmem>>, vector<1x4x2x8xf32>
    %103 = vector.shape_cast %102 : vector<1x4x2x8xf32> to vector<4x2x8xf32>
    %cst_31 = arith.constant dense<0.000000e+00> : vector<4x8x2xf32>
    %104 = tpu.matmul %53, %103, %cst_31 {dimension_numbers = #tpu.dot_dimension_numbers<[2], [2], [1], [1], [0, 0, 0, 1, 1, 1], [0], [0]>} : vector<4x8x8xf32>, vector<4x2x8xf32>, vector<4x8x2xf32> -> vector<4x8x2xf32>
    %c0_32 = arith.constant 0 : index
    %c0_33 = arith.constant 0 : index
    %c0_34 = arith.constant 0 : index
    %105 = vector.load %arg4[%c0_32, %c0_33, %c0_34] : memref<1x8x1xf32, #tpu.memory_space<vmem>>, vector<1x8x1xf32>
    %106 = vector.shape_cast %105 : vector<1x8x1xf32> to vector<8x1xf32>
    %c0_35 = arith.constant 0 : index
    %c0_36 = arith.constant 0 : index
    %c0_37 = arith.constant 0 : index
    %107 = vector.load %arg5[%c0_35, %c0_36, %c0_37] : memref<1x1x8xf32, #tpu.memory_space<vmem>>, vector<1x1x8xf32>
    %108 = vector.shape_cast %107 : vector<1x1x8xf32> to vector<1x8xf32>
    %109 = vector.broadcast %106 : vector<8x1xf32> to vector<8x8xf32>
    %110 = vector.broadcast %108 : vector<1x8xf32> to vector<8x8xf32>
    %111 = arith.cmpf one, %109, %110 : vector<8x8xf32>
    %112 = arith.extui %111 : vector<8x8xi1> to vector<8x8xi32>
    %113 = arith.sitofp %112 : vector<8x8xi32> to vector<8x8xf32>
    %114 = vector.extract_strided_slice %104 {offsets = [0, 0, 0], sizes = [4, 8, 1], strides = [1, 1, 1]} : vector<4x8x2xf32> to vector<4x8x1xf32>
    %115 = vector.extract_strided_slice %104 {offsets = [0, 0, 1], sizes = [4, 8, 1], strides = [1, 1, 1]} : vector<4x8x2xf32> to vector<4x8x1xf32>
    %116 = arith.subf %115, %114 : vector<4x8x1xf32>
    %117 = vector.shape_cast %113 : vector<8x8xf32> to vector<1x8x8xf32>
    %118 = vector.broadcast %116 : vector<4x8x1xf32> to vector<4x8x8xf32>
    %119 = vector.broadcast %117 : vector<1x8x8xf32> to vector<4x8x8xf32>
    %120 = arith.mulf %118, %119 : vector<4x8x8xf32>
    %121 = vector.broadcast %114 : vector<4x8x1xf32> to vector<4x8x8xf32>
    %122 = arith.addf %121, %120 : vector<4x8x8xf32>
    %123 = arith.addf %72, %101 : vector<4x8x8xf32>
    %124 = arith.addf %123, %122 : vector<4x8x8xf32>
    %c0_38 = arith.constant 0 : index
    %c0_39 = arith.constant 0 : index
    %c0_40 = arith.constant 0 : index
    %125 = vector.load %arg3[%c0_38, %c0_39, %c0_40] : memref<1x1x8xf32, #tpu.memory_space<vmem>>, vector<1x1x8xf32>
    %126 = vector.shape_cast %125 : vector<1x1x8xf32> to vector<1x8xf32>
    %127 = vector.shape_cast %126 : vector<1x8xf32> to vector<1x1x8xf32>
    %128 = vector.broadcast %127 : vector<1x1x8xf32> to vector<4x8x8xf32>
    %129 = arith.addf %124, %128 : vector<4x8x8xf32>
    %cst_41 = arith.constant dense<0xFF800000> : vector<4x8xf32>
    %130 = vector.multi_reduction <maximumf>, %129, %cst_41 [2] : vector<4x8x8xf32> to vector<4x8xf32>
    %131 = vector.shape_cast %130 : vector<4x8xf32> to vector<4x8x1xf32>
    %132 = vector.broadcast %131 : vector<4x8x1xf32> to vector<4x8x8xf32>
    %133 = arith.subf %129, %132 : vector<4x8x8xf32>
    %134 = math.exp %133 : vector<4x8x8xf32>
    %cst_42 = arith.constant dense<0.000000e+00> : vector<4x8xf32>
    %135 = vector.multi_reduction <add>, %134, %cst_42 [2] : vector<4x8x8xf32> to vector<4x8xf32>
    %136 = vector.shape_cast %135 : vector<4x8xf32> to vector<4x8x1xf32>
    %137 = vector.broadcast %136 : vector<4x8x1xf32> to vector<4x8x8xf32>
    %138 = arith.divf %134, %137 : vector<4x8x8xf32>
    %cst_43 = arith.constant dense<0.000000e+00> : vector<4x8x8xf32>
    %139 = tpu.matmul %138, %71, %cst_43 {dimension_numbers = #tpu.dot_dimension_numbers<[2], [1], [1], [2], [0, 0, 0, 1, 1, 2], [0], [0]>} : vector<4x8x8xf32>, vector<4x8x8xf32>, vector<4x8x8xf32> -> vector<4x8x8xf32>
    %c0_44 = arith.constant 0 : index
    %c0_45 = arith.constant 0 : index
    %c0_46 = arith.constant 0 : index
    %c0_47 = arith.constant 0 : index
    %140 = vector.load %arg14[%c0_44, %c0_45, %c0_46, %c0_47] : memref<1x4x8x32xf32, #tpu.memory_space<vmem>>, vector<1x4x8x32xf32>
    %141 = vector.shape_cast %140 : vector<1x4x8x32xf32> to vector<4x8x32xf32>
    %cst_48 = arith.constant dense<0.000000e+00> : vector<4x8x32xf32>
    %142 = tpu.matmul %139, %141, %cst_48 {dimension_numbers = #tpu.dot_dimension_numbers<[2], [1], [1], [2], [0, 0, 0, 1, 1, 2], [0], [0]>} : vector<4x8x8xf32>, vector<4x8x32xf32>, vector<4x8x32xf32> -> vector<4x8x32xf32>
    %cst_49 = arith.constant dense<0.000000e+00> : vector<8x32xf32>
    %143 = vector.multi_reduction <add>, %142, %cst_49 [0] : vector<4x8x32xf32> to vector<8x32xf32>
    %c0_50 = arith.constant 0 : index
    %c0_51 = arith.constant 0 : index
    %c0_52 = arith.constant 0 : index
    %144 = vector.load %arg15[%c0_50, %c0_51, %c0_52] : memref<1x4x32xf32, #tpu.memory_space<vmem>>, vector<1x4x32xf32>
    %145 = vector.shape_cast %144 : vector<1x4x32xf32> to vector<4x32xf32>
    %146 = arith.addf %143, %3 : vector<8x32xf32>
    %147 = vector.extract_strided_slice %145 {offsets = [0, 0], sizes = [1, 32], strides = [1, 1]} : vector<4x32xf32> to vector<1x32xf32>
    %148 = vector.extract_strided_slice %145 {offsets = [1, 0], sizes = [1, 32], strides = [1, 1]} : vector<4x32xf32> to vector<1x32xf32>
    %cst_53 = arith.constant dense<0.000000e+00> : vector<8xf32>
    %149 = vector.multi_reduction <add>, %146, %cst_53 [1] : vector<8x32xf32> to vector<8xf32>
    %150 = vector.shape_cast %149 : vector<8xf32> to vector<8x1xf32>
    %cst_54 = arith.constant 3.200000e+01 : f32
    %151 = vector.broadcast %cst_54 : f32 to vector<8x1xf32>
    %152 = arith.divf %150, %151 : vector<8x1xf32>
    %153 = vector.broadcast %152 : vector<8x1xf32> to vector<8x32xf32>
    %154 = arith.subf %146, %153 : vector<8x32xf32>
    %155 = vector.broadcast %152 : vector<8x1xf32> to vector<8x32xf32>
    %156 = arith.subf %146, %155 : vector<8x32xf32>
    %157 = arith.mulf %154, %156 : vector<8x32xf32>
    %cst_55 = arith.constant dense<0.000000e+00> : vector<8xf32>
    %158 = vector.multi_reduction <add>, %157, %cst_55 [1] : vector<8x32xf32> to vector<8xf32>
    %159 = vector.shape_cast %158 : vector<8xf32> to vector<8x1xf32>
    %cst_56 = arith.constant 3.200000e+01 : f32
    %160 = vector.broadcast %cst_56 : f32 to vector<8x1xf32>
    %161 = arith.divf %159, %160 : vector<8x1xf32>
    %162 = vector.broadcast %152 : vector<8x1xf32> to vector<8x32xf32>
    %163 = arith.subf %146, %162 : vector<8x32xf32>
    %cst_57 = arith.constant 9.99999996E-13 : f32
    %164 = vector.broadcast %cst_57 : f32 to vector<8x1xf32>
    %165 = arith.addf %161, %164 : vector<8x1xf32>
    %166 = math.rsqrt %165 : vector<8x1xf32>
    %167 = vector.broadcast %166 : vector<8x1xf32> to vector<8x32xf32>
    %168 = arith.mulf %163, %167 : vector<8x32xf32>
    %169 = vector.broadcast %147 : vector<1x32xf32> to vector<8x32xf32>
    %170 = arith.mulf %168, %169 : vector<8x32xf32>
    %171 = vector.broadcast %148 : vector<1x32xf32> to vector<8x32xf32>
    %172 = arith.addf %170, %171 : vector<8x32xf32>
    %c0_58 = arith.constant 0 : index
    %c0_59 = arith.constant 0 : index
    %c0_60 = arith.constant 0 : index
    %173 = vector.load %arg16[%c0_58, %c0_59, %c0_60] : memref<1x32x64xf32, #tpu.memory_space<vmem>>, vector<1x32x64xf32>
    %174 = vector.shape_cast %173 : vector<1x32x64xf32> to vector<32x64xf32>
    %cst_61 = arith.constant dense<0.000000e+00> : vector<8x64xf32>
    %175 = tpu.matmul %172, %174, %cst_61 {dimension_numbers = #tpu.dot_dimension_numbers<[1], [0], [0], [1], [0, 0, 1, 1], [], []>} : vector<8x32xf32>, vector<32x64xf32>, vector<8x64xf32> -> vector<8x64xf32>
    %c0_62 = arith.constant 0 : index
    %c0_63 = arith.constant 0 : index
    %c0_64 = arith.constant 0 : index
    %176 = vector.load %arg17[%c0_62, %c0_63, %c0_64] : memref<1x1x64xf32, #tpu.memory_space<vmem>>, vector<1x1x64xf32>
    %177 = vector.shape_cast %176 : vector<1x1x64xf32> to vector<1x64xf32>
    %178 = vector.broadcast %177 : vector<1x64xf32> to vector<8x64xf32>
    %179 = arith.addf %175, %178 : vector<8x64xf32>
    %cst_65 = arith.constant 5.000000e-01 : f32
    %180 = vector.broadcast %cst_65 : f32 to vector<8x64xf32>
    %181 = arith.mulf %180, %179 : vector<8x64xf32>
    %cst_66 = arith.constant 4.471500e-02 : f32
    %182 = vector.broadcast %cst_66 : f32 to vector<8x64xf32>
    %183 = arith.mulf %182, %179 : vector<8x64xf32>
    %184 = arith.mulf %183, %179 : vector<8x64xf32>
    %185 = arith.mulf %184, %179 : vector<8x64xf32>
    %186 = arith.addf %179, %185 : vector<8x64xf32>
    %cst_67 = arith.constant 0.797884583 : f32
    %187 = vector.broadcast %cst_67 : f32 to vector<8x64xf32>
    %188 = arith.mulf %187, %186 : vector<8x64xf32>
    %189 = math.tanh %188 : vector<8x64xf32>
    %cst_68 = arith.constant 1.000000e+00 : f32
    %190 = vector.broadcast %cst_68 : f32 to vector<8x64xf32>
    %191 = arith.addf %190, %189 : vector<8x64xf32>
    %192 = arith.mulf %181, %191 : vector<8x64xf32>
    %c0_69 = arith.constant 0 : index
    %c0_70 = arith.constant 0 : index
    %c0_71 = arith.constant 0 : index
    %193 = vector.load %arg18[%c0_69, %c0_70, %c0_71] : memref<1x64x32xf32, #tpu.memory_space<vmem>>, vector<1x64x32xf32>
    %194 = vector.shape_cast %193 : vector<1x64x32xf32> to vector<64x32xf32>
    %cst_72 = arith.constant dense<0.000000e+00> : vector<8x32xf32>
    %195 = tpu.matmul %192, %194, %cst_72 {dimension_numbers = #tpu.dot_dimension_numbers<[1], [0], [0], [1], [0, 0, 1, 1], [], []>} : vector<8x64xf32>, vector<64x32xf32>, vector<8x32xf32> -> vector<8x32xf32>
    %c0_73 = arith.constant 0 : index
    %c0_74 = arith.constant 0 : index
    %c0_75 = arith.constant 0 : index
    %196 = vector.load %arg19[%c0_73, %c0_74, %c0_75] : memref<1x1x32xf32, #tpu.memory_space<vmem>>, vector<1x1x32xf32>
    %197 = vector.shape_cast %196 : vector<1x1x32xf32> to vector<1x32xf32>
    %198 = vector.broadcast %197 : vector<1x32xf32> to vector<8x32xf32>
    %199 = arith.addf %195, %198 : vector<8x32xf32>
    %200 = arith.addf %199, %172 : vector<8x32xf32>
    %201 = vector.extract_strided_slice %145 {offsets = [2, 0], sizes = [1, 32], strides = [1, 1]} : vector<4x32xf32> to vector<1x32xf32>
    %202 = vector.extract_strided_slice %145 {offsets = [3, 0], sizes = [1, 32], strides = [1, 1]} : vector<4x32xf32> to vector<1x32xf32>
    %cst_76 = arith.constant dense<0.000000e+00> : vector<8xf32>
    %203 = vector.multi_reduction <add>, %200, %cst_76 [1] : vector<8x32xf32> to vector<8xf32>
    %204 = vector.shape_cast %203 : vector<8xf32> to vector<8x1xf32>
    %cst_77 = arith.constant 3.200000e+01 : f32
    %205 = vector.broadcast %cst_77 : f32 to vector<8x1xf32>
    %206 = arith.divf %204, %205 : vector<8x1xf32>
    %207 = vector.broadcast %206 : vector<8x1xf32> to vector<8x32xf32>
    %208 = arith.subf %200, %207 : vector<8x32xf32>
    %209 = vector.broadcast %206 : vector<8x1xf32> to vector<8x32xf32>
    %210 = arith.subf %200, %209 : vector<8x32xf32>
    %211 = arith.mulf %208, %210 : vector<8x32xf32>
    %cst_78 = arith.constant dense<0.000000e+00> : vector<8xf32>
    %212 = vector.multi_reduction <add>, %211, %cst_78 [1] : vector<8x32xf32> to vector<8xf32>
    %213 = vector.shape_cast %212 : vector<8xf32> to vector<8x1xf32>
    %cst_79 = arith.constant 3.200000e+01 : f32
    %214 = vector.broadcast %cst_79 : f32 to vector<8x1xf32>
    %215 = arith.divf %213, %214 : vector<8x1xf32>
    %216 = vector.broadcast %206 : vector<8x1xf32> to vector<8x32xf32>
    %217 = arith.subf %200, %216 : vector<8x32xf32>
    %cst_80 = arith.constant 9.99999996E-13 : f32
    %218 = vector.broadcast %cst_80 : f32 to vector<8x1xf32>
    %219 = arith.addf %215, %218 : vector<8x1xf32>
    %220 = math.rsqrt %219 : vector<8x1xf32>
    %221 = vector.broadcast %220 : vector<8x1xf32> to vector<8x32xf32>
    %222 = arith.mulf %217, %221 : vector<8x32xf32>
    %223 = vector.broadcast %201 : vector<1x32xf32> to vector<8x32xf32>
    %224 = arith.mulf %222, %223 : vector<8x32xf32>
    %225 = vector.broadcast %202 : vector<1x32xf32> to vector<8x32xf32>
    %226 = arith.addf %224, %225 : vector<8x32xf32>
    %c0_81 = arith.constant 0 : index
    %c0_82 = arith.constant 0 : index
    %227 = vector.load %arg28[%c0_81, %c0_82] : memref<8x32xf32, #tpu.memory_space<vmem>>, vector<8x32xf32>
    tpu.vector_store %arg28[%c0_81, %c0_82], %226 {strides = array<i32>} : memref<8x32xf32, #tpu.memory_space<vmem>>, vector<8x32xf32>,
    %c1_i32 = arith.constant 1 : i32
    %228 = arith.cmpi eq, %arg1, %c1_i32 : i32
    %229 = arith.extui %228 : i1 to i32
    %c0_i32_83 = arith.constant 0 : i32
    %230 = arith.cmpi ne, %229, %c0_i32_83 : i32
    scf.if %230 {
      %231 = vector.extract_strided_slice %226 {offsets = [7, 0], sizes = [1, 32], strides = [1, 1]} : vector<8x32xf32> to vector<1x32xf32>
      %c0_84 = arith.constant 0 : index
      %c0_85 = arith.constant 0 : index
      %232 = vector.load %arg20[%c0_84, %c0_85] : memref<32x32xf32, #tpu.memory_space<vmem>>, vector<32x32xf32>
      %cst_86 = arith.constant dense<0.000000e+00> : vector<1x32xf32>
      %233 = tpu.matmul %231, %232, %cst_86 {dimension_numbers = #tpu.dot_dimension_numbers<[1], [0], [0], [1], [0, 0, 1, 1], [], []>} : vector<1x32xf32>, vector<32x32xf32>, vector<1x32xf32> -> vector<1x32xf32>
      %c0_87 = arith.constant 0 : index
      %c0_88 = arith.constant 0 : index
      %234 = vector.load %arg21[%c0_87, %c0_88] : memref<1x32xf32, #tpu.memory_space<vmem>>, vector<1x32xf32>
      %235 = arith.addf %233, %234 : vector<1x32xf32>
      %236 = math.tanh %235 : vector<1x32xf32>
      %c0_89 = arith.constant 0 : index
      %c0_90 = arith.constant 0 : index
      %237 = vector.load %arg22[%c0_89, %c0_90] : memref<32x2xf32, #tpu.memory_space<vmem>>, vector<32x2xf32>
      %cst_91 = arith.constant dense<0.000000e+00> : vector<1x2xf32>
      %238 = tpu.matmul %236, %237, %cst_91 {dimension_numbers = #tpu.dot_dimension_numbers<[1], [0], [0], [1], [0, 0, 1, 1], [], []>} : vector<1x32xf32>, vector<32x2xf32>, vector<1x2xf32> -> vector<1x2xf32>
      %c0_92 = arith.constant 0 : index
      %c0_93 = arith.constant 0 : index
      %239 = vector.load %arg23[%c0_92, %c0_93] : memref<1x2xf32, #tpu.memory_space<vmem>>, vector<1x2xf32>
      %240 = arith.addf %238, %239 : vector<1x2xf32>
      %cst_94 = arith.constant dense<0xFF800000> : vector<1xf32>
      %241 = vector.multi_reduction <maximumf>, %240, %cst_94 [1] : vector<1x2xf32> to vector<1xf32>
      %242 = vector.shape_cast %241 : vector<1xf32> to vector<1x1xf32>
      %243 = vector.broadcast %242 : vector<1x1xf32> to vector<1x2xf32>
      %244 = arith.subf %240, %243 : vector<1x2xf32>
      %245 = math.exp %244 : vector<1x2xf32>
      %cst_95 = arith.constant dense<0.000000e+00> : vector<1xf32>
      %246 = vector.multi_reduction <add>, %245, %cst_95 [1] : vector<1x2xf32> to vector<1xf32>
      %247 = vector.shape_cast %246 : vector<1xf32> to vector<1x1xf32>
      %248 = vector.broadcast %242 : vector<1x1xf32> to vector<1x2xf32>
      %249 = arith.subf %240, %248 : vector<1x2xf32>
      %250 = math.log %247 : vector<1x1xf32>
      %251 = vector.broadcast %250 : vector<1x1xf32> to vector<1x2xf32>
      %252 = arith.subf %249, %251 : vector<1x2xf32>
      %253 = vector.shape_cast %240 : vector<1x2xf32> to vector<1x1x2xf32>
      %c0_96 = arith.constant 0 : index
      %c0_97 = arith.constant 0 : index
      %c0_98 = arith.constant 0 : index
      %254 = vector.load %arg25[%c0_96, %c0_97, %c0_98] : memref<1x1x2xf32, #tpu.memory_space<vmem>>, vector<1x1x2xf32>
      tpu.vector_store %arg25[%c0_96, %c0_97, %c0_98], %253 {strides = array<i32>} : memref<1x1x2xf32, #tpu.memory_space<vmem>>, vector<1x1x2xf32>,
      %255 = vector.broadcast %247 : vector<1x1xf32> to vector<1x2xf32>
      %256 = arith.divf %245, %255 : vector<1x2xf32>
      %257 = vector.shape_cast %256 : vector<1x2xf32> to vector<1x1x2xf32>
      %c0_99 = arith.constant 0 : index
      %c0_100 = arith.constant 0 : index
      %c0_101 = arith.constant 0 : index
      %258 = vector.load %arg26[%c0_99, %c0_100, %c0_101] : memref<1x1x2xf32, #tpu.memory_space<vmem>>, vector<1x1x2xf32>
      tpu.vector_store %arg26[%c0_99, %c0_100, %c0_101], %257 {strides = array<i32>} : memref<1x1x2xf32, #tpu.memory_space<vmem>>, vector<1x1x2xf32>,
      %c0_102 = arith.constant 0 : index
      %c0_103 = arith.constant 0 : index
      %c0_104 = arith.constant 0 : index
      %259 = vector.load %arg24[%c0_102, %c0_103, %c0_104] : memref<1x1x2xf32, #tpu.memory_space<vmem>>, vector<1x1x2xf32>
      %260 = vector.shape_cast %259 : vector<1x1x2xf32> to vector<1x2xf32>
      %261 = arith.mulf %260, %252 : vector<1x2xf32>
      %cst_105 = arith.constant dense<0.000000e+00> : vector<1xf32>
      %262 = vector.multi_reduction <add>, %261, %cst_105 [1] : vector<1x2xf32> to vector<1xf32>
      %263 = vector.shape_cast %262 : vector<1xf32> to vector<1x1xf32>
      %cst_106 = arith.constant 0.000000e+00 : f32
      %264 = vector.broadcast %cst_106 : f32 to vector<1x1xf32>
      %265 = arith.subf %264, %263 : vector<1x1xf32>
      %266 = vector.shape_cast %265 : vector<1x1xf32> to vector<1x1x1xf32>
      %c0_107 = arith.constant 0 : index
      %c0_108 = arith.constant 0 : index
      %c0_109 = arith.constant 0 : index
      %267 = vector.load %arg27[%c0_107, %c0_108, %c0_109] : memref<1x1x1xf32, #tpu.memory_space<vmem>>, vector<1x1x1xf32>
      tpu.vector_store %arg27[%c0_107, %c0_108, %c0_109], %266 {strides = array<i32>} : memref<1x1x1xf32, #tpu.memory_space<vmem>>, vector<1x1x1xf32>,
    } else {
    }
    return
  }
  func.func @transform_0(%arg0: i32, %arg1: i32) -> (i32, i32, i32) {
    %c0_i32 = arith.constant 0 : i32
    %c0_i32_0 = arith.constant 0 : i32
    %c0_i32_1 = arith.constant 0 : i32
    return %arg0, %c0_i32, %c0_i32_0 : i32, i32, i32
  }
  func.func @transform_1(%arg0: i32, %arg1: i32) -> (i32, i32, i32) {
    %c0_i32 = arith.constant 0 : i32
    %c0_i32_0 = arith.constant 0 : i32
    %c0_i32_1 = arith.constant 0 : i32
    return %arg0, %c0_i32, %c0_i32_0 : i32, i32, i32
  }
  func.func @transform_2(%arg0: i32, %arg1: i32) -> (i32, i32, i32) {
    %c0_i32 = arith.constant 0 : i32
    %c0_i32_0 = arith.constant 0 : i32
    %c0_i32_1 = arith.constant 0 : i32
    return %arg0, %c0_i32, %c0_i32_0 : i32, i32, i32
  }
  func.func @transform_3(%arg0: i32, %arg1: i32) -> (i32, i32, i32) {
    %c0_i32 = arith.constant 0 : i32
    %c0_i32_0 = arith.constant 0 : i32
    %c0_i32_1 = arith.constant 0 : i32
    return %arg0, %c0_i32, %c0_i32_0 : i32, i32, i32
  }
  func.func @transform_4(%arg0: i32, %arg1: i32) -> (i32, i32, i32) {
    %c0_i32 = arith.constant 0 : i32
    %c0_i32_0 = arith.constant 0 : i32
    %c0_i32_1 = arith.constant 0 : i32
    return %arg1, %c0_i32, %c0_i32_0 : i32, i32, i32
  }
  func.func @transform_5(%arg0: i32, %arg1: i32) -> (i32, i32, i32, i32) {
    %c0_i32 = arith.constant 0 : i32
    %c0_i32_0 = arith.constant 0 : i32
    %c0_i32_1 = arith.constant 0 : i32
    %c0_i32_2 = arith.constant 0 : i32
    return %arg1, %c0_i32, %c0_i32_0, %c0_i32_1 : i32, i32, i32, i32
  }
  func.func @transform_6(%arg0: i32, %arg1: i32) -> (i32, i32) {
    %c0_i32 = arith.constant 0 : i32
    %c0_i32_0 = arith.constant 0 : i32
    %c0_i32_1 = arith.constant 0 : i32
    return %c0_i32, %c0_i32_0 : i32, i32
  }
  func.func @transform_7(%arg0: i32, %arg1: i32) -> (i32, i32) {
    %c0_i32 = arith.constant 0 : i32
    %c0_i32_0 = arith.constant 0 : i32
    %c0_i32_1 = arith.constant 0 : i32
    return %c0_i32, %c0_i32_0 : i32, i32
  }
  func.func @transform_8(%arg0: i32, %arg1: i32) -> (i32, i32) {
    %c0_i32 = arith.constant 0 : i32
    %c0_i32_0 = arith.constant 0 : i32
    %c0_i32_1 = arith.constant 0 : i32
    return %c0_i32, %c0_i32_0 : i32, i32
  }
  func.func @transform_9(%arg0: i32, %arg1: i32) -> (i32, i32) {
    %c0_i32 = arith.constant 0 : i32
    %c0_i32_0 = arith.constant 0 : i32
    %c0_i32_1 = arith.constant 0 : i32
    return %c0_i32, %c0_i32_0 : i32, i32
  }
  func.func @transform_10(%arg0: i32, %arg1: i32) -> (i32, i32, i32) {
    %c0_i32 = arith.constant 0 : i32
    %c0_i32_0 = arith.constant 0 : i32
    %c0_i32_1 = arith.constant 0 : i32
    return %arg1, %c0_i32, %c0_i32_0 : i32, i32, i32
  }
  func.func @transform_11(%arg0: i32, %arg1: i32) -> (i32, i32, i32, i32) {
    %c0_i32 = arith.constant 0 : i32
    %c0_i32_0 = arith.constant 0 : i32
    %c0_i32_1 = arith.constant 0 : i32
    %c0_i32_2 = arith.constant 0 : i32
    return %arg1, %c0_i32, %c0_i32_0, %c0_i32_1 : i32, i32, i32, i32
  }
  func.func @transform_12(%arg0: i32, %arg1: i32) -> (i32, i32, i32, i32) {
    %c0_i32 = arith.constant 0 : i32
    %c0_i32_0 = arith.constant 0 : i32
    %c0_i32_1 = arith.constant 0 : i32
    %c0_i32_2 = arith.constant 0 : i32
    return %arg1, %c0_i32, %c0_i32_0, %c0_i32_1 : i32, i32, i32, i32
  }
  func.func @transform_13(%arg0: i32, %arg1: i32) -> (i32, i32, i32) {
    %c0_i32 = arith.constant 0 : i32
    %c0_i32_0 = arith.constant 0 : i32
    %c0_i32_1 = arith.constant 0 : i32
    return %arg1, %c0_i32, %c0_i32_0 : i32, i32, i32
  }
  func.func @transform_14(%arg0: i32, %arg1: i32) -> (i32, i32, i32) {
    %c0_i32 = arith.constant 0 : i32
    %c0_i32_0 = arith.constant 0 : i32
    %c0_i32_1 = arith.constant 0 : i32
    return %arg1, %c0_i32, %c0_i32_0 : i32, i32, i32
  }
  func.func @transform_15(%arg0: i32, %arg1: i32) -> (i32, i32, i32) {
    %c0_i32 = arith.constant 0 : i32
    %c0_i32_0 = arith.constant 0 : i32
    %c0_i32_1 = arith.constant 0 : i32
    return %arg1, %c0_i32, %c0_i32_0 : i32, i32, i32
  }
  func.func @transform_16(%arg0: i32, %arg1: i32) -> (i32, i32, i32) {
    %c0_i32 = arith.constant 0 : i32
    %c0_i32_0 = arith.constant 0 : i32
    %c0_i32_1 = arith.constant 0 : i32
    return %arg1, %c0_i32, %c0_i32_0 : i32, i32, i32
  }
  func.func @transform_17(%arg0: i32, %arg1: i32) -> (i32, i32, i32) {
    %c0_i32 = arith.constant 0 : i32
    %c0_i32_0 = arith.constant 0 : i32
    %c0_i32_1 = arith.constant 0 : i32
    return %arg1, %c0_i32, %c0_i32_0 : i32, i32, i32
  }
  func.func @transform_18(%arg0: i32, %arg1: i32) -> (i32, i32) {
    %c0_i32 = arith.constant 0 : i32
    %c0_i32_0 = arith.constant 0 : i32
    %c0_i32_1 = arith.constant 0 : i32
    return %c0_i32, %c0_i32_0 : i32, i32
  }
  func.func @transform_19(%arg0: i32, %arg1: i32) -> (i32, i32) {
    %c0_i32 = arith.constant 0 : i32
    %c0_i32_0 = arith.constant 0 : i32
    %c0_i32_1 = arith.constant 0 : i32
    return %c0_i32, %c0_i32_0 : i32, i32
  }
  func.func @transform_20(%arg0: i32, %arg1: i32) -> (i32, i32) {
    %c0_i32 = arith.constant 0 : i32
    %c0_i32_0 = arith.constant 0 : i32
    %c0_i32_1 = arith.constant 0 : i32
    return %c0_i32, %c0_i32_0 : i32, i32
  }
  func.func @transform_21(%arg0: i32, %arg1: i32) -> (i32, i32) {
    %c0_i32 = arith.constant 0 : i32
    %c0_i32_0 = arith.constant 0 : i32
    %c0_i32_1 = arith.constant 0 : i32
    return %c0_i32, %c0_i32_0 : i32, i32
  }
  func.func @transform_22(%arg0: i32, %arg1: i32) -> (i32, i32, i32) {
    %c0_i32 = arith.constant 0 : i32
    %c0_i32_0 = arith.constant 0 : i32
    %c0_i32_1 = arith.constant 0 : i32
    return %arg0, %c0_i32, %c0_i32_0 : i32, i32, i32
  }
  func.func @transform_23(%arg0: i32, %arg1: i32) -> (i32, i32, i32) {
    %c0_i32 = arith.constant 0 : i32
    %c0_i32_0 = arith.constant 0 : i32
    %c0_i32_1 = arith.constant 0 : i32
    return %arg0, %c0_i32, %c0_i32_0 : i32, i32, i32
  }
  func.func @transform_24(%arg0: i32, %arg1: i32) -> (i32, i32, i32) {
    %c0_i32 = arith.constant 0 : i32
    %c0_i32_0 = arith.constant 0 : i32
    %c0_i32_1 = arith.constant 0 : i32
    return %arg0, %c0_i32, %c0_i32_0 : i32, i32, i32
  }
  func.func @transform_25(%arg0: i32, %arg1: i32) -> (i32, i32, i32) {
    %c0_i32 = arith.constant 0 : i32
    %c0_i32_0 = arith.constant 0 : i32
    %c0_i32_1 = arith.constant 0 : i32
    return %arg0, %c0_i32, %c0_i32_0 : i32, i32, i32
  }
}

</mosaic_0001>

<llo_original>
// kernel: xlnet_forward.1
$region0: #{xlnet_forward.1}
  #allocation0 [shape = 'u32[]', space=smem, size = 0x4, offset = 0x4, fixed_abs, tag = 'smem constant byte address 0x4 - core index']
  #allocation1 [shape = 'u32[144,128]{1,0:T(1,128)}', space=vmem, size = 0x12000, scoped, tag = 'internal scratch']
  #allocation2 [shape = 'f32[8,32]{1,0:T(8,128)}', space=vmem, size = 0x1000, scoped, tag = 'scratch operand']
  %s0 = inlined_call_operand.vmem [shape: f32[2,8,32], index: 0, kind: input, shape index: {}]
  %s1 = inlined_call_operand.vmem [shape: f32[2,1,8], index: 1, kind: input, shape index: {}]
  %s2 = inlined_call_operand.vmem [shape: f32[2,8,1], index: 2, kind: input, shape index: {}]
  %s3 = inlined_call_operand.vmem [shape: f32[2,1,8], index: 3, kind: input, shape index: {}]
  %s4 = inlined_call_operand.vmem [shape: f32[2,32,96], index: 4, kind: input, shape index: {}]
  %s5 = inlined_call_operand.vmem [shape: f32[2,4,8,32], index: 5, kind: input, shape index: {}]
  %s6 = inlined_call_operand.vmem [shape: f32[8,16], index: 6, kind: input, shape index: {}]
  %s7 = inlined_call_operand.vmem [shape: f32[8,16], index: 7, kind: input, shape index: {}]
  %s8 = inlined_call_operand.vmem [shape: f32[16,8], index: 8, kind: input, shape index: {}]
  %s9 = inlined_call_operand.vmem [shape: f32[16,8], index: 9, kind: input, shape index: {}]
  %s10 = inlined_call_operand.vmem [shape: f32[2,3,32], index: 10, kind: input, shape index: {}]
  %s11 = inlined_call_operand.vmem [shape: f32[2,4,2,8], index: 11, kind: input, shape index: {}]
  %s12 = inlined_call_operand.vmem [shape: f32[2,4,8,32], index: 12, kind: input, shape index: {}]
  %s13 = inlined_call_operand.vmem [shape: f32[2,4,32], index: 13, kind: input, shape index: {}]
  %s14 = inlined_call_operand.vmem [shape: f32[2,32,64], index: 14, kind: input, shape index: {}]
  %s15 = inlined_call_operand.vmem [shape: f32[2,1,64], index: 15, kind: input, shape index: {}]
  %s16 = inlined_call_operand.vmem [shape: f32[2,64,32], index: 16, kind: input, shape index: {}]
  %s17 = inlined_call_operand.vmem [shape: f32[2,1,32], index: 17, kind: input, shape index: {}]
  %s18 = inlined_call_operand.vmem [shape: f32[32,32], index: 18, kind: input, shape index: {}]
  %s19 = inlined_call_operand.vmem [shape: f32[1,32], index: 19, kind: input, shape index: {}]
  %s20 = inlined_call_operand.vmem [shape: f32[32,2], index: 20, kind: input, shape index: {}]
  %s21 = inlined_call_operand.vmem [shape: f32[1,2], index: 21, kind: input, shape index: {}]
  %s22 = inlined_call_operand.vmem [shape: f32[2,1,2], index: 22, kind: input, shape index: {}]
  %s23 = inlined_call_operand.hbm [shape: f32[2,1,2], index: 23, kind: output, shape index: {0}]
  %s24 = inlined_call_operand.hbm [shape: f32[2,1,2], index: 24, kind: output, shape index: {1}]
  %s25 = inlined_call_operand.vmem [shape: f32[2,1,1], index: 25, kind: output, shape index: {2}]
  %26 = xla_tuple %s23, %s24, %s25
  %s27 = sld [smem:[#allocation0]]
  $region149: #{xlnet_forward.1} parent=0
    _
  %s29 = ssub.s32 1, %s27
  %s30 = scalar_select 0, %s29, %s27
  $region1: #{xlnet_forward.1} parent=0
    #allocation3 [shape = 'u8[1024]{0}', space=vmem, size = 0x400, scoped, tag = 'output window, operand 0']
    #allocation4 [shape = 's32[2]{0}', space=sflag, size = 0x8, scoped, tag = 'scoped memory for xlnet_forward.1']
    #allocation5 [shape = 'u8[1024]{0}', space=vmem, size = 0x400, scoped, tag = 'output window, operand 1']
    #allocation6 [shape = 's32[2]{0}', space=sflag, size = 0x8, scoped, tag = 'scoped memory for xlnet_forward.1']
    %31 = vsyncpa [#allocation4], 0
    %s32 = scalar_lea.sflag [#allocation4], 1
    %33 = vsyncpa %s32, 0
    %34 = vsyncpa [#allocation6], 0
    %s35 = scalar_lea.sflag [#allocation6], 1
    %36 = vsyncpa %s35, 0
    loop: start=0, step=1, limit=6
    $region2: #{xlnet_forward.1} parent=1 // loop_pre_header
      _
    $region3: #{xlnet_forward.1} parent=1 // loop_header
      %s38 = sphi 0, %s42
      %p39 = scmp.ge.s32.totalorder %s38, 6
      %s45 = sphi 0, %s57
      %s46 = sphi 0, %s53
      %s47 = sphi 0, %s45
      %s48 = sphi 0, %s46
      %s49 = sphi 0, %s47
      %s50 = sphi 0, %s48
      %s60 = sphi 0, %s62
      %s63 = sphi 0, %s60
      %s64 = sphi 0, %s63
      %s80 = sphi 0, %s64
      %s86 = sphi 0, %s88
      %s89 = sphi 0, %s86
      %s90 = sphi 0, %s89
      %s106 = sphi 0, %s90
      %s112 = sphi 0, %s114
      %s115 = sphi 0, %s112
      %s116 = sphi 0, %s115
      %s132 = sphi 0, %s116
      %s138 = sphi 0, %s140
      %s141 = sphi 0, %s138
      %s142 = sphi 0, %s141
      %s158 = sphi 0, %s142
      %s164 = sphi 0, %s166
      %s167 = sphi 0, %s164
      %s168 = sphi 0, %s167
      %s184 = sphi 0, %s168
      %s190 = sphi 0, %s192
      %s193 = sphi 0, %s190
      %s194 = sphi 0, %s193
      %s210 = sphi 0, %s194
      %s214 = sphi 0, %s214
      %s216 = sphi 0, %s214
      %s217 = sphi 0, %s216
      %s231 = sphi 0, %s217
      %s235 = sphi 0, %s235
      %s237 = sphi 0, %s235
      %s238 = sphi 0, %s237
      %s252 = sphi 0, %s238
      %s256 = sphi 0, %s256
      %s258 = sphi 0, %s256
      %s259 = sphi 0, %s258
      %s273 = sphi 0, %s259
      %s277 = sphi 0, %s277
      %s279 = sphi 0, %s277
      %s280 = sphi 0, %s279
      %s294 = sphi 0, %s280
      %s300 = sphi 0, %s302
      %s303 = sphi 0, %s300
      %s304 = sphi 0, %s303
      %s320 = sphi 0, %s304
      %s326 = sphi 0, %s328
      %s329 = sphi 0, %s326
      %s330 = sphi 0, %s329
      %s346 = sphi 0, %s330
      %s352 = sphi 0, %s354
      %s355 = sphi 0, %s352
      %s356 = sphi 0, %s355
      %s372 = sphi 0, %s356
      %s378 = sphi 0, %s380
      %s381 = sphi 0, %s378
      %s382 = sphi 0, %s381
      %s398 = sphi 0, %s382
      %s404 = sphi 0, %s406
      %s407 = sphi 0, %s404
      %s408 = sphi 0, %s407
      %s424 = sphi 0, %s408
      %s430 = sphi 0, %s432
      %s433 = sphi 0, %s430
      %s434 = sphi 0, %s433
      %s450 = sphi 0, %s434
      %s456 = sphi 0, %s458
      %s459 = sphi 0, %s456
      %s460 = sphi 0, %s459
      %s476 = sphi 0, %s460
      %s482 = sphi 0, %s484
      %s485 = sphi 0, %s482
      %s486 = sphi 0, %s485
      %s502 = sphi 0, %s486
      %s506 = sphi 0, %s506
      %s508 = sphi 0, %s506
      %s509 = sphi 0, %s508
      %s523 = sphi 0, %s509
      %s527 = sphi 0, %s527
      %s529 = sphi 0, %s527
      %s530 = sphi 0, %s529
      %s544 = sphi 0, %s530
      %s548 = sphi 0, %s548
      %s550 = sphi 0, %s548
      %s551 = sphi 0, %s550
      %s565 = sphi 0, %s551
      %s569 = sphi 0, %s569
      %s571 = sphi 0, %s569
      %s572 = sphi 0, %s571
      %s586 = sphi 0, %s572
      %s592 = sphi 0, %s594
      %s595 = sphi 0, %s592
      %s596 = sphi 0, %s595
      %s612 = sphi 0, %s596
      %s618 = sphi 0, %s620
      %s621 = sphi 0, %s618
      %s622 = sphi 0, %s621
      %s638 = sphi 0, %s622
      %s644 = sphi 0, %s646
      %s647 = sphi 0, %s644
      %s648 = sphi 0, %s647
      %s664 = sphi 0, %s648
      %s670 = sphi 0, %s672
      %s673 = sphi 0, %s670
      %s674 = sphi 0, %s673
      %s690 = sphi 0, %s674
    $region4: #{xlnet_forward.1} parent=1 // loop_header_branch
      %41 = sbr.rel (%p39) target = $region8
    $region5: #{xlnet_forward.1} parent=1 // loop_body
      %s43 = ssub.s32 %s38, 1
      %s44 = ssub.s32 %s38, 2
      %s51 = sadd.s32 1, %s46
      %p52 = scmp.ge.s32.totalorder %s51, 2
      %s53 = scalar_select %p52, 0, %s51
      %s54 = sadd.s32 1, %s45
      %s55 = scalar_select %p52, %s54, %s45
      %p56 = scmp.ge.s32.totalorder %s55, 2
      %s57 = scalar_select %p56, 0, %s55
      %s58 = ssub.s32 %s45, %s57
      %p59 = scmp.eq.s32.totalorder %s58, 0
      %s61 = sadd.s32 %s60, 1
      %s62 = scalar_select %p59, %s60, %s61
      %p65 = pneg %p59
      %p66 = scmp.eq.s32.totalorder %s38, 3
      %p67 = por %p65, %p66
      %p68 = scmp.ne.s32.totalorder %s60, %s63
      %p69 = scmp.eq.s32.totalorder %s38, 0
      %p70 = por %p68, %p69
      %p71 = scmp.ne.s32.totalorder %s60, %s63
      %p72 = scmp.eq.s32.totalorder %s43, 3
      %p73 = por %p71, %p72
      %p74 = scmp.ne.s32.totalorder %s63, %s64
      %p75 = scmp.eq.s32.totalorder %s43, 0
      %p76 = por %p74, %p75
      %p77 = scmp.ne.s32.totalorder %s63, %s64
      %p78 = scmp.eq.s32.totalorder %s44, 3
      %p79 = por %p77, %p78
      %p81 = scmp.ne.s32.totalorder %s64, %s80
      %p82 = scmp.eq.s32.totalorder %s44, 0
      %p83 = por %p81, %p82
      %s84 = ssub.s32 %s45, %s57
      %p85 = scmp.eq.s32.totalorder %s84, 0
      %s87 = sadd.s32 %s86, 1
      %s88 = scalar_select %p85, %s86, %s87
      %p91 = pneg %p85
      %p92 = scmp.eq.s32.totalorder %s38, 3
      %p93 = por %p91, %p92
      %p94 = scmp.ne.s32.totalorder %s86, %s89
      %p95 = scmp.eq.s32.totalorder %s38, 0
      %p96 = por %p94, %p95
      %p97 = scmp.ne.s32.totalorder %s86, %s89
      %p98 = scmp.eq.s32.totalorder %s43, 3
      %p99 = por %p97, %p98
      %p100 = scmp.ne.s32.totalorder %s89, %s90
      %p101 = scmp.eq.s32.totalorder %s43, 0
      %p102 = por %p100, %p101
      %p103 = scmp.ne.s32.totalorder %s89, %s90
      %p104 = scmp.eq.s32.totalorder %s44, 3
      %p105 = por %p103, %p104
      %p107 = scmp.ne.s32.totalorder %s90, %s106
      %p108 = scmp.eq.s32.totalorder %s44, 0
      %p109 = por %p107, %p108
      %s110 = ssub.s32 %s45, %s57
      %p111 = scmp.eq.s32.totalorder %s110, 0
      %s113 = sadd.s32 %s112, 1
      %s114 = scalar_select %p111, %s112, %s113
      %p117 = pneg %p111
      %p118 = scmp.eq.s32.totalorder %s38, 3
      %p119 = por %p117, %p118
      %p120 = scmp.ne.s32.totalorder %s112, %s115
      %p121 = scmp.eq.s32.totalorder %s38, 0
      %p122 = por %p120, %p121
      %p123 = scmp.ne.s32.totalorder %s112, %s115
      %p124 = scmp.eq.s32.totalorder %s43, 3
      %p125 = por %p123, %p124
      %p126 = scmp.ne.s32.totalorder %s115, %s116
      %p127 = scmp.eq.s32.totalorder %s43, 0
      %p128 = por %p126, %p127
      %p129 = scmp.ne.s32.totalorder %s115, %s116
      %p130 = scmp.eq.s32.totalorder %s44, 3
      %p131 = por %p129, %p130
      %p133 = scmp.ne.s32.totalorder %s116, %s132
      %p134 = scmp.eq.s32.totalorder %s44, 0
      %p135 = por %p133, %p134
      %s136 = ssub.s32 %s45, %s57
      %p137 = scmp.eq.s32.totalorder %s136, 0
      %s139 = sadd.s32 %s138, 1
      %s140 = scalar_select %p137, %s138, %s139
      %p143 = pneg %p137
      %p144 = scmp.eq.s32.totalorder %s38, 3
      %p145 = por %p143, %p144
      %p146 = scmp.ne.s32.totalorder %s138, %s141
      %p147 = scmp.eq.s32.totalorder %s38, 0
      %p148 = por %p146, %p147
      %p149 = scmp.ne.s32.totalorder %s138, %s141
      %p150 = scmp.eq.s32.totalorder %s43, 3
      %p151 = por %p149, %p150
      %p152 = scmp.ne.s32.totalorder %s141, %s142
      %p153 = scmp.eq.s32.totalorder %s43, 0
      %p154 = por %p152, %p153
      %p155 = scmp.ne.s32.totalorder %s141, %s142
      %p156 = scmp.eq.s32.totalorder %s44, 3
      %p157 = por %p155, %p156
      %p159 = scmp.ne.s32.totalorder %s142, %s158
      %p160 = scmp.eq.s32.totalorder %s44, 0
      %p161 = por %p159, %p160
      %s162 = ssub.s32 %s46, %s53
      %p163 = scmp.eq.s32.totalorder %s162, 0
      %s165 = sadd.s32 %s164, 1
      %s166 = scalar_select %p163, %s164, %s165
      %p169 = pneg %p163
      %p170 = scmp.eq.s32.totalorder %s38, 3
      %p171 = por %p169, %p170
      %p172 = scmp.ne.s32.totalorder %s164, %s167
      %p173 = scmp.eq.s32.totalorder %s38, 0
      %p174 = por %p172, %p173
      %p175 = scmp.ne.s32.totalorder %s164, %s167
      %p176 = scmp.eq.s32.totalorder %s43, 3
      %p177 = por %p175, %p176
      %p178 = scmp.ne.s32.totalorder %s167, %s168
      %p179 = scmp.eq.s32.totalorder %s43, 0
      %p180 = por %p178, %p179
      %p181 = scmp.ne.s32.totalorder %s167, %s168
      %p182 = scmp.eq.s32.totalorder %s44, 3
      %p183 = por %p181, %p182
      %p185 = scmp.ne.s32.totalorder %s168, %s184
      %p186 = scmp.eq.s32.totalorder %s44, 0
      %p187 = por %p185, %p186
      %s188 = ssub.s32 %s46, %s53
      %p189 = scmp.eq.s32.totalorder %s188, 0
      %s191 = sadd.s32 %s190, 1
      %s192 = scalar_select %p189, %s190, %s191
      %p195 = pneg %p189
      %p196 = scmp.eq.s32.totalorder %s38, 3
      %p197 = por %p195, %p196
      %p198 = scmp.ne.s32.totalorder %s190, %s193
      %p199 = scmp.eq.s32.totalorder %s38, 0
      %p200 = por %p198, %p199
      %p201 = scmp.ne.s32.totalorder %s190, %s193
      %p202 = scmp.eq.s32.totalorder %s43, 3
      %p203 = por %p201, %p202
      %p204 = scmp.ne.s32.totalorder %s193, %s194
      %p205 = scmp.eq.s32.totalorder %s43, 0
      %p206 = por %p204, %p205
      %p207 = scmp.ne.s32.totalorder %s193, %s194
      %p208 = scmp.eq.s32.totalorder %s44, 3
      %p209 = por %p207, %p208
      %p211 = scmp.ne.s32.totalorder %s194, %s210
      %p212 = scmp.eq.s32.totalorder %s44, 0
      %p213 = por %p211, %p212
      %s215 = sadd.s32 %s214, 1
      %p218 = scmp.eq.s32.totalorder %s38, 3
      %p219 = scmp.ne.s32.totalorder %s214, %s216
      %p220 = scmp.eq.s32.totalorder %s38, 0
      %p221 = por %p219, %p220
      %p222 = scmp.ne.s32.totalorder %s214, %s216
      %p223 = scmp.eq.s32.totalorder %s43, 3
      %p224 = por %p222, %p223
      %p225 = scmp.ne.s32.totalorder %s216, %s217
      %p226 = scmp.eq.s32.totalorder %s43, 0
      %p227 = por %p225, %p226
      %p228 = scmp.ne.s32.totalorder %s216, %s217
      %p229 = scmp.eq.s32.totalorder %s44, 3
      %p230 = por %p228, %p229
      %p232 = scmp.ne.s32.totalorder %s217, %s231
      %p233 = scmp.eq.s32.totalorder %s44, 0
      %p234 = por %p232, %p233
      %s236 = sadd.s32 %s235, 1
      %p239 = scmp.eq.s32.totalorder %s38, 3
      %p240 = scmp.ne.s32.totalorder %s235, %s237
      %p241 = scmp.eq.s32.totalorder %s38, 0
      %p242 = por %p240, %p241
      %p243 = scmp.ne.s32.totalorder %s235, %s237
      %p244 = scmp.eq.s32.totalorder %s43, 3
      %p245 = por %p243, %p244
      %p246 = scmp.ne.s32.totalorder %s237, %s238
      %p247 = scmp.eq.s32.totalorder %s43, 0
      %p248 = por %p246, %p247
      %p249 = scmp.ne.s32.totalorder %s237, %s238
      %p250 = scmp.eq.s32.totalorder %s44, 3
      %p251 = por %p249, %p250
      %p253 = scmp.ne.s32.totalorder %s238, %s252
      %p254 = scmp.eq.s32.totalorder %s44, 0
      %p255 = por %p253, %p254
      %s257 = sadd.s32 %s256, 1
      %p260 = scmp.eq.s32.totalorder %s38, 3
      %p261 = scmp.ne.s32.totalorder %s256, %s258
      %p262 = scmp.eq.s32.totalorder %s38, 0
      %p263 = por %p261, %p262
      %p264 = scmp.ne.s32.totalorder %s256, %s258
      %p265 = scmp.eq.s32.totalorder %s43, 3
      %p266 = por %p264, %p265
      %p267 = scmp.ne.s32.totalorder %s258, %s259
      %p268 = scmp.eq.s32.totalorder %s43, 0
      %p269 = por %p267, %p268
      %p270 = scmp.ne.s32.totalorder %s258, %s259
      %p271 = scmp.eq.s32.totalorder %s44, 3
      %p272 = por %p270, %p271
      %p274 = scmp.ne.s32.totalorder %s259, %s273
      %p275 = scmp.eq.s32.totalorder %s44, 0
      %p276 = por %p274, %p275
      %s278 = sadd.s32 %s277, 1
      %p281 = scmp.eq.s32.totalorder %s38, 3
      %p282 = scmp.ne.s32.totalorder %s277, %s279
      %p283 = scmp.eq.s32.totalorder %s38, 0
      %p284 = por %p282, %p283
      %p285 = scmp.ne.s32.totalorder %s277, %s279
      %p286 = scmp.eq.s32.totalorder %s43, 3
      %p287 = por %p285, %p286
      %p288 = scmp.ne.s32.totalorder %s279, %s280
      %p289 = scmp.eq.s32.totalorder %s43, 0
      %p290 = por %p288, %p289
      %p291 = scmp.ne.s32.totalorder %s279, %s280
      %p292 = scmp.eq.s32.totalorder %s44, 3
      %p293 = por %p291, %p292
      %p295 = scmp.ne.s32.totalorder %s280, %s294
      %p296 = scmp.eq.s32.totalorder %s44, 0
      %p297 = por %p295, %p296
      %s298 = ssub.s32 %s46, %s53
      %p299 = scmp.eq.s32.totalorder %s298, 0
      %s301 = sadd.s32 %s300, 1
      %s302 = scalar_select %p299, %s300, %s301
      %p305 = pneg %p299
      %p306 = scmp.eq.s32.totalorder %s38, 3
      %p307 = por %p305, %p306
      %p308 = scmp.ne.s32.totalorder %s300, %s303
      %p309 = scmp.eq.s32.totalorder %s38, 0
      %p310 = por %p308, %p309
      %p311 = scmp.ne.s32.totalorder %s300, %s303
      %p312 = scmp.eq.s32.totalorder %s43, 3
      %p313 = por %p311, %p312
      %p314 = scmp.ne.s32.totalorder %s303, %s304
      %p315 = scmp.eq.s32.totalorder %s43, 0
      %p316 = por %p314, %p315
      %p317 = scmp.ne.s32.totalorder %s303, %s304
      %p318 = scmp.eq.s32.totalorder %s44, 3
      %p319 = por %p317, %p318
      %p321 = scmp.ne.s32.totalorder %s304, %s320
      %p322 = scmp.eq.s32.totalorder %s44, 0
      %p323 = por %p321, %p322
      %s324 = ssub.s32 %s46, %s53
      %p325 = scmp.eq.s32.totalorder %s324, 0
      %s327 = sadd.s32 %s326, 1
      %s328 = scalar_select %p325, %s326, %s327
      %p331 = pneg %p325
      %p332 = scmp.eq.s32.totalorder %s38, 3
      %p333 = por %p331, %p332
      %p334 = scmp.ne.s32.totalorder %s326, %s329
      %p335 = scmp.eq.s32.totalorder %s38, 0
      %p336 = por %p334, %p335
      %p337 = scmp.ne.s32.totalorder %s326, %s329
      %p338 = scmp.eq.s32.totalorder %s43, 3
      %p339 = por %p337, %p338
      %p340 = scmp.ne.s32.totalorder %s329, %s330
      %p341 = scmp.eq.s32.totalorder %s43, 0
      %p342 = por %p340, %p341
      %p343 = scmp.ne.s32.totalorder %s329, %s330
      %p344 = scmp.eq.s32.totalorder %s44, 3
      %p345 = por %p343, %p344
      %p347 = scmp.ne.s32.totalorder %s330, %s346
      %p348 = scmp.eq.s32.totalorder %s44, 0
      %p349 = por %p347, %p348
      %s350 = ssub.s32 %s46, %s53
      %p351 = scmp.eq.s32.totalorder %s350, 0
      %s353 = sadd.s32 %s352, 1
      %s354 = scalar_select %p351, %s352, %s353
      %p357 = pneg %p351
      %p358 = scmp.eq.s32.totalorder %s38, 3
      %p359 = por %p357, %p358
      %p360 = scmp.ne.s32.totalorder %s352, %s355
      %p361 = scmp.eq.s32.totalorder %s38, 0
      %p362 = por %p360, %p361
      %p363 = scmp.ne.s32.totalorder %s352, %s355
      %p364 = scmp.eq.s32.totalorder %s43, 3
      %p365 = por %p363, %p364
      %p366 = scmp.ne.s32.totalorder %s355, %s356
      %p367 = scmp.eq.s32.totalorder %s43, 0
      %p368 = por %p366, %p367
      %p369 = scmp.ne.s32.totalorder %s355, %s356
      %p370 = scmp.eq.s32.totalorder %s44, 3
      %p371 = por %p369, %p370
      %p373 = scmp.ne.s32.totalorder %s356, %s372
      %p374 = scmp.eq.s32.totalorder %s44, 0
      %p375 = por %p373, %p374
      %s376 = ssub.s32 %s46, %s53
      %p377 = scmp.eq.s32.totalorder %s376, 0
      %s379 = sadd.s32 %s378, 1
      %s380 = scalar_select %p377, %s378, %s379
      %p383 = pneg %p377
      %p384 = scmp.eq.s32.totalorder %s38, 3
      %p385 = por %p383, %p384
      %p386 = scmp.ne.s32.totalorder %s378, %s381
      %p387 = scmp.eq.s32.totalorder %s38, 0
      %p388 = por %p386, %p387
      %p389 = scmp.ne.s32.totalorder %s378, %s381
      %p390 = scmp.eq.s32.totalorder %s43, 3
      %p391 = por %p389, %p390
      %p392 = scmp.ne.s32.totalorder %s381, %s382
      %p393 = scmp.eq.s32.totalorder %s43, 0
      %p394 = por %p392, %p393
      %p395 = scmp.ne.s32.totalorder %s381, %s382
      %p396 = scmp.eq.s32.totalorder %s44, 3
      %p397 = por %p395, %p396
      %p399 = scmp.ne.s32.totalorder %s382, %s398
      %p400 = scmp.eq.s32.totalorder %s44, 0
      %p401 = por %p399, %p400
      %s402 = ssub.s32 %s46, %s53
      %p403 = scmp.eq.s32.totalorder %s402, 0
      %s405 = sadd.s32 %s404, 1
      %s406 = scalar_select %p403, %s404, %s405
      %p409 = pneg %p403
      %p410 = scmp.eq.s32.totalorder %s38, 3
      %p411 = por %p409, %p410
      %p412 = scmp.ne.s32.totalorder %s404, %s407
      %p413 = scmp.eq.s32.totalorder %s38, 0
      %p414 = por %p412, %p413
      %p415 = scmp.ne.s32.totalorder %s404, %s407
      %p416 = scmp.eq.s32.totalorder %s43, 3
      %p417 = por %p415, %p416
      %p418 = scmp.ne.s32.totalorder %s407, %s408
      %p419 = scmp.eq.s32.totalorder %s43, 0
      %p420 = por %p418, %p419
      %p421 = scmp.ne.s32.totalorder %s407, %s408
      %p422 = scmp.eq.s32.totalorder %s44, 3
      %p423 = por %p421, %p422
      %p425 = scmp.ne.s32.totalorder %s408, %s424
      %p426 = scmp.eq.s32.totalorder %s44, 0
      %p427 = por %p425, %p426
      %s428 = ssub.s32 %s46, %s53
      %p429 = scmp.eq.s32.totalorder %s428, 0
      %s431 = sadd.s32 %s430, 1
      %s432 = scalar_select %p429, %s430, %s431
      %p435 = pneg %p429
      %p436 = scmp.eq.s32.totalorder %s38, 3
      %p437 = por %p435, %p436
      %p438 = scmp.ne.s32.totalorder %s430, %s433
      %p439 = scmp.eq.s32.totalorder %s38, 0
      %p440 = por %p438, %p439
      %p441 = scmp.ne.s32.totalorder %s430, %s433
      %p442 = scmp.eq.s32.totalorder %s43, 3
      %p443 = por %p441, %p442
      %p444 = scmp.ne.s32.totalorder %s433, %s434
      %p445 = scmp.eq.s32.totalorder %s43, 0
      %p446 = por %p444, %p445
      %p447 = scmp.ne.s32.totalorder %s433, %s434
      %p448 = scmp.eq.s32.totalorder %s44, 3
      %p449 = por %p447, %p448
      %p451 = scmp.ne.s32.totalorder %s434, %s450
      %p452 = scmp.eq.s32.totalorder %s44, 0
      %p453 = por %p451, %p452
      %s454 = ssub.s32 %s46, %s53
      %p455 = scmp.eq.s32.totalorder %s454, 0
      %s457 = sadd.s32 %s456, 1
      %s458 = scalar_select %p455, %s456, %s457
      %p461 = pneg %p455
      %p462 = scmp.eq.s32.totalorder %s38, 3
      %p463 = por %p461, %p462
      %p464 = scmp.ne.s32.totalorder %s456, %s459
      %p465 = scmp.eq.s32.totalorder %s38, 0
      %p466 = por %p464, %p465
      %p467 = scmp.ne.s32.totalorder %s456, %s459
      %p468 = scmp.eq.s32.totalorder %s43, 3
      %p469 = por %p467, %p468
      %p470 = scmp.ne.s32.totalorder %s459, %s460
      %p471 = scmp.eq.s32.totalorder %s43, 0
      %p472 = por %p470, %p471
      %p473 = scmp.ne.s32.totalorder %s459, %s460
      %p474 = scmp.eq.s32.totalorder %s44, 3
      %p475 = por %p473, %p474
      %p477 = scmp.ne.s32.totalorder %s460, %s476
      %p478 = scmp.eq.s32.totalorder %s44, 0
      %p479 = por %p477, %p478
      %s480 = ssub.s32 %s46, %s53
      %p481 = scmp.eq.s32.totalorder %s480, 0
      %s483 = sadd.s32 %s482, 1
      %s484 = scalar_select %p481, %s482, %s483
      %p487 = pneg %p481
      %p488 = scmp.eq.s32.totalorder %s38, 3
      %p489 = por %p487, %p488
      %p490 = scmp.ne.s32.totalorder %s482, %s485
      %p491 = scmp.eq.s32.totalorder %s38, 0
      %p492 = por %p490, %p491
      %p493 = scmp.ne.s32.totalorder %s482, %s485
      %p494 = scmp.eq.s32.totalorder %s43, 3
      %p495 = por %p493, %p494
      %p496 = scmp.ne.s32.totalorder %s485, %s486
      %p497 = scmp.eq.s32.totalorder %s43, 0
      %p498 = por %p496, %p497
      %p499 = scmp.ne.s32.totalorder %s485, %s486
      %p500 = scmp.eq.s32.totalorder %s44, 3
      %p501 = por %p499, %p500
      %p503 = scmp.ne.s32.totalorder %s486, %s502
      %p504 = scmp.eq.s32.totalorder %s44, 0
      %p505 = por %p503, %p504
      %s507 = sadd.s32 %s506, 1
      %p510 = scmp.eq.s32.totalorder %s38, 3
      %p511 = scmp.ne.s32.totalorder %s506, %s508
      %p512 = scmp.eq.s32.totalorder %s38, 0
      %p513 = por %p511, %p512
      %p514 = scmp.ne.s32.totalorder %s506, %s508
      %p515 = scmp.eq.s32.totalorder %s43, 3
      %p516 = por %p514, %p515
      %p517 = scmp.ne.s32.totalorder %s508, %s509
      %p518 = scmp.eq.s32.totalorder %s43, 0
      %p519 = por %p517, %p518
      %p520 = scmp.ne.s32.totalorder %s508, %s509
      %p521 = scmp.eq.s32.totalorder %s44, 3
      %p522 = por %p520, %p521
      %p524 = scmp.ne.s32.totalorder %s509, %s523
      %p525 = scmp.eq.s32.totalorder %s44, 0
      %p526 = por %p524, %p525
      %s528 = sadd.s32 %s527, 1
      %p531 = scmp.eq.s32.totalorder %s38, 3
      %p532 = scmp.ne.s32.totalorder %s527, %s529
      %p533 = scmp.eq.s32.totalorder %s38, 0
      %p534 = por %p532, %p533
      %p535 = scmp.ne.s32.totalorder %s527, %s529
      %p536 = scmp.eq.s32.totalorder %s43, 3
      %p537 = por %p535, %p536
      %p538 = scmp.ne.s32.totalorder %s529, %s530
      %p539 = scmp.eq.s32.totalorder %s43, 0
      %p540 = por %p538, %p539
      %p541 = scmp.ne.s32.totalorder %s529, %s530
      %p542 = scmp.eq.s32.totalorder %s44, 3
      %p543 = por %p541, %p542
      %p545 = scmp.ne.s32.totalorder %s530, %s544
      %p546 = scmp.eq.s32.totalorder %s44, 0
      %p547 = por %p545, %p546
      %s549 = sadd.s32 %s548, 1
      %p552 = scmp.eq.s32.totalorder %s38, 3
      %p553 = scmp.ne.s32.totalorder %s548, %s550
      %p554 = scmp.eq.s32.totalorder %s38, 0
      %p555 = por %p553, %p554
      %p556 = scmp.ne.s32.totalorder %s548, %s550
      %p557 = scmp.eq.s32.totalorder %s43, 3
      %p558 = por %p556, %p557
      %p559 = scmp.ne.s32.totalorder %s550, %s551
      %p560 = scmp.eq.s32.totalorder %s43, 0
      %p561 = por %p559, %p560
      %p562 = scmp.ne.s32.totalorder %s550, %s551
      %p563 = scmp.eq.s32.totalorder %s44, 3
      %p564 = por %p562, %p563
      %p566 = scmp.ne.s32.totalorder %s551, %s565
      %p567 = scmp.eq.s32.totalorder %s44, 0
      %p568 = por %p566, %p567
      %s570 = sadd.s32 %s569, 1
      %p573 = scmp.eq.s32.totalorder %s38, 3
      %p574 = scmp.ne.s32.totalorder %s569, %s571
      %p575 = scmp.eq.s32.totalorder %s38, 0
      %p576 = por %p574, %p575
      %p577 = scmp.ne.s32.totalorder %s569, %s571
      %p578 = scmp.eq.s32.totalorder %s43, 3
      %p579 = por %p577, %p578
      %p580 = scmp.ne.s32.totalorder %s571, %s572
      %p581 = scmp.eq.s32.totalorder %s43, 0
      %p582 = por %p580, %p581
      %p583 = scmp.ne.s32.totalorder %s571, %s572
      %p584 = scmp.eq.s32.totalorder %s44, 3
      %p585 = por %p583, %p584
      %p587 = scmp.ne.s32.totalorder %s572, %s586
      %p588 = scmp.eq.s32.totalorder %s44, 0
      %p589 = por %p587, %p588
      %s590 = ssub.s32 %s45, %s57
      %p591 = scmp.eq.s32.totalorder %s590, 0
      %s593 = sadd.s32 %s592, 1
      %s594 = scalar_select %p591, %s592, %s593
      %p597 = pneg %p591
      %p598 = scmp.eq.s32.totalorder %s38, 3
      %p599 = por %p597, %p598
      %p600 = scmp.ne.s32.totalorder %s592, %s595
      %p601 = scmp.eq.s32.totalorder %s38, 0
      %p602 = por %p600, %p601
      %p603 = scmp.ne.s32.totalorder %s592, %s595
      %p604 = scmp.eq.s32.totalorder %s43, 3
      %p605 = por %p603, %p604
      %p606 = scmp.ne.s32.totalorder %s595, %s596
      %p607 = scmp.eq.s32.totalorder %s43, 0
      %p608 = por %p606, %p607
      %p609 = scmp.ne.s32.totalorder %s595, %s596
      %p610 = scmp.eq.s32.totalorder %s44, 3
      %p611 = por %p609, %p610
      %p613 = scmp.ne.s32.totalorder %s596, %s612
      %p614 = scmp.eq.s32.totalorder %s44, 0
      %p615 = por %p613, %p614
      %s616 = ssub.s32 %s45, %s57
      %p617 = scmp.eq.s32.totalorder %s616, 0
      %s619 = sadd.s32 %s618, 1
      %s620 = scalar_select %p617, %s618, %s619
      %p623 = pneg %p617
      %p624 = scmp.eq.s32.totalorder %s38, 3
      %p625 = por %p623, %p624
      %p626 = scmp.ne.s32.totalorder %s618, %s621
      %p627 = scmp.eq.s32.totalorder %s38, 0
      %p628 = por %p626, %p627
      %p629 = scmp.ne.s32.totalorder %s618, %s621
      %p630 = scmp.eq.s32.totalorder %s43, 3
      %p631 = por %p629, %p630
      %p632 = scmp.ne.s32.totalorder %s621, %s622
      %p633 = scmp.eq.s32.totalorder %s43, 0
      %p634 = por %p632, %p633
      %p635 = scmp.ne.s32.totalorder %s621, %s622
      %p636 = scmp.eq.s32.totalorder %s44, 3
      %p637 = por %p635, %p636
      %p639 = scmp.ne.s32.totalorder %s622, %s638
      %p640 = scmp.eq.s32.totalorder %s44, 0
      %p641 = por %p639, %p640
      %s642 = ssub.s32 %s45, %s57
      %p643 = scmp.eq.s32.totalorder %s642, 0
      %s645 = sadd.s32 %s644, 1
      %s646 = scalar_select %p643, %s644, %s645
      %p649 = pneg %p643
      %p650 = scmp.eq.s32.totalorder %s38, 3
      %p651 = por %p649, %p650
      %p652 = scmp.ne.s32.totalorder %s644, %s647
      %p653 = scmp.eq.s32.totalorder %s38, 0
      %p654 = por %p652, %p653
      %p655 = scmp.ne.s32.totalorder %s644, %s647
      %p656 = scmp.eq.s32.totalorder %s43, 3
      %p657 = por %p655, %p656
      %p658 = scmp.ne.s32.totalorder %s647, %s648
      %p659 = scmp.eq.s32.totalorder %s43, 0
      %p660 = por %p658, %p659
      %p661 = scmp.ne.s32.totalorder %s647, %s648
      %p662 = scmp.eq.s32.totalorder %s44, 3
      %p663 = por %p661, %p662
      %p665 = scmp.ne.s32.totalorder %s648, %s664
      %p666 = scmp.eq.s32.totalorder %s44, 0
      %p667 = por %p665, %p666
      %s668 = ssub.s32 %s45, %s57
      %p669 = scmp.eq.s32.totalorder %s668, 0
      %s671 = sadd.s32 %s670, 1
      %s672 = scalar_select %p669, %s670, %s671
      %p675 = pneg %p669
      %p676 = scmp.eq.s32.totalorder %s38, 3
      %p677 = por %p675, %p676
      %p678 = scmp.ne.s32.totalorder %s670, %s673
      %p679 = scmp.eq.s32.totalorder %s38, 0
      %p680 = por %p678, %p679
      %p681 = scmp.ne.s32.totalorder %s670, %s673
      %p682 = scmp.eq.s32.totalorder %s43, 3
      %p683 = por %p681, %p682
      %p684 = scmp.ne.s32.totalorder %s673, %s674
      %p685 = scmp.eq.s32.totalorder %s43, 0
      %p686 = por %p684, %p685
      %p687 = scmp.ne.s32.totalorder %s673, %s674
      %p688 = scmp.eq.s32.totalorder %s44, 3
      %p689 = por %p687, %p688
      %p691 = scmp.ne.s32.totalorder %s674, %s690
      %p692 = scmp.eq.s32.totalorder %s44, 0
      %p693 = por %p691, %p692
      %p694 = scmp.le.s32.totalorder 1, %s38
      %p695 = scmp.lt.s32.totalorder %s38, 5
      %p696 = pnand %p694, %p695
      %p697 = pneg %p696
      // Predicated region
      $region9: #{xlnet_forward.1} parent=5 // pred_check
        _
      $region10: #{xlnet_forward.1} parent=5 // pred_check_branch
        %699 = sbr.rel (%p696) target = $region12
      $region11: #{xlnet_forward.1} parent=5 // pred_region
        %s700 = ssub.s32 %s38, 1
        // Predicated region
        $region13: #{xlnet_forward.1} parent=11 // pred_check
          %p701 = pneg %p227
        $region14: #{xlnet_forward.1} parent=11 // pred_check_branch
          %703 = sbr.rel (%p701) target = $region16
        $region15: #{xlnet_forward.1} parent=11 // pred_region
          _
        $region16: #{xlnet_forward.1} parent=11 // pred_fallthru
          _
        // Predicated region
        $region17: #{xlnet_forward.1} parent=11 // pred_check
          %p704 = pneg %p248
        $region18: #{xlnet_forward.1} parent=11 // pred_check_branch
          %706 = sbr.rel (%p704) target = $region20
        $region19: #{xlnet_forward.1} parent=11 // pred_region
          _
        $region20: #{xlnet_forward.1} parent=11 // pred_fallthru
          _
        // Predicated region
        $region21: #{xlnet_forward.1} parent=11 // pred_check
          %p707 = pneg %p269
        $region22: #{xlnet_forward.1} parent=11 // pred_check_branch
          %709 = sbr.rel (%p707) target = $region24
        $region23: #{xlnet_forward.1} parent=11 // pred_region
          _
        $region24: #{xlnet_forward.1} parent=11 // pred_fallthru
          _
        // Predicated region
        $region25: #{xlnet_forward.1} parent=11 // pred_check
          %p710 = pneg %p290
        $region26: #{xlnet_forward.1} parent=11 // pred_check_branch
          %712 = sbr.rel (%p710) target = $region28
        $region27: #{xlnet_forward.1} parent=11 // pred_region
          _
        $region28: #{xlnet_forward.1} parent=11 // pred_fallthru
          _
        // Predicated region
        $region29: #{xlnet_forward.1} parent=11 // pred_check
          %p713 = pneg %p519
        $region30: #{xlnet_forward.1} parent=11 // pred_check_branch
          %715 = sbr.rel (%p713) target = $region32
        $region31: #{xlnet_forward.1} parent=11 // pred_region
          _
        $region32: #{xlnet_forward.1} parent=11 // pred_fallthru
          _
        // Predicated region
        $region33: #{xlnet_forward.1} parent=11 // pred_check
          %p716 = pneg %p540
        $region34: #{xlnet_forward.1} parent=11 // pred_check_branch
          %718 = sbr.rel (%p716) target = $region36
        $region35: #{xlnet_forward.1} parent=11 // pred_region
          _
        $region36: #{xlnet_forward.1} parent=11 // pred_fallthru
          _
        // Predicated region
        $region37: #{xlnet_forward.1} parent=11 // pred_check
          %p719 = pneg %p561
        $region38: #{xlnet_forward.1} parent=11 // pred_check_branch
          %721 = sbr.rel (%p719) target = $region40
        $region39: #{xlnet_forward.1} parent=11 // pred_region
          _
        $region40: #{xlnet_forward.1} parent=11 // pred_fallthru
          _
        // Predicated region
        $region41: #{xlnet_forward.1} parent=11 // pred_check
          %p722 = pneg %p582
        $region42: #{xlnet_forward.1} parent=11 // pred_check_branch
          %724 = sbr.rel (%p722) target = $region44
        $region43: #{xlnet_forward.1} parent=11 // pred_region
          _
        $region44: #{xlnet_forward.1} parent=11 // pred_fallthru
          _
      $region12: #{xlnet_forward.1} parent=5 // pred_fallthru
        _
      %p725 = scmp.lt.s32.totalorder %s38, 4
      // Predicated region
      $region45: #{xlnet_forward.1} parent=5 // pred_check
        %p726 = pneg %p725
      $region46: #{xlnet_forward.1} parent=5 // pred_check_branch
        %728 = sbr.rel (%p726) target = $region48
      $region47: #{xlnet_forward.1} parent=5 // pred_region
        // Predicated region
        $region49: #{xlnet_forward.1} parent=47 // pred_check
          %p729 = pneg %p70
        $region50: #{xlnet_forward.1} parent=47 // pred_check_branch
          %731 = sbr.rel (%p729) target = $region52
        $region51: #{xlnet_forward.1} parent=47 // pred_region
          %p732 = scmp.lt.s32.totalorder %s45, 1
          %s733 = scalar_select %p732, %s45, 1
          %s734 = smul.addr %s733, 8
          %s735 = scalar_lea.vmem %s0, %s734
        $region52: #{xlnet_forward.1} parent=47 // pred_fallthru
          _
        // Predicated region
        $region53: #{xlnet_forward.1} parent=47 // pred_check
          %p736 = pneg %p96
        $region54: #{xlnet_forward.1} parent=47 // pred_check_branch
          %738 = sbr.rel (%p736) target = $region56
        $region55: #{xlnet_forward.1} parent=47 // pred_region
          %p739 = scmp.lt.s32.totalorder %s45, 1
          %s740 = scalar_select %p739, %s45, 1
          %s741 = scalar_lea.vmem %s1, %s740
        $region56: #{xlnet_forward.1} parent=47 // pred_fallthru
          _
        // Predicated region
        $region57: #{xlnet_forward.1} parent=47 // pred_check
          %p742 = pneg %p122
        $region58: #{xlnet_forward.1} parent=47 // pred_check_branch
          %744 = sbr.rel (%p742) target = $region60
        $region59: #{xlnet_forward.1} parent=47 // pred_region
          %p745 = scmp.lt.s32.totalorder %s45, 1
          %s746 = scalar_select %p745, %s45, 1
          %s747 = smul.addr %s746, 8
          %s748 = scalar_lea.vmem %s2, %s747
        $region60: #{xlnet_forward.1} parent=47 // pred_fallthru
          _
        // Predicated region
        $region61: #{xlnet_forward.1} parent=47 // pred_check
          %p749 = pneg %p148
        $region62: #{xlnet_forward.1} parent=47 // pred_check_branch
          %751 = sbr.rel (%p749) target = $region64
        $region63: #{xlnet_forward.1} parent=47 // pred_region
          %p752 = scmp.lt.s32.totalorder %s45, 1
          %s753 = scalar_select %p752, %s45, 1
          %s754 = scalar_lea.vmem %s3, %s753
        $region64: #{xlnet_forward.1} parent=47 // pred_fallthru
          _
        // Predicated region
        $region65: #{xlnet_forward.1} parent=47 // pred_check
          %p755 = pneg %p174
        $region66: #{xlnet_forward.1} parent=47 // pred_check_branch
          %757 = sbr.rel (%p755) target = $region68
        $region67: #{xlnet_forward.1} parent=47 // pred_region
          %p758 = scmp.lt.s32.totalorder %s46, 1
          %s759 = scalar_select %p758, %s46, 1
          %s760 = smul.addr %s759, 4
          %s761 = smul.addr %s760, 8
          %s762 = scalar_lea.vmem %s4, %s761
        $region68: #{xlnet_forward.1} parent=47 // pred_fallthru
          _
        // Predicated region
        $region69: #{xlnet_forward.1} parent=47 // pred_check
          %p763 = pneg %p200
        $region70: #{xlnet_forward.1} parent=47 // pred_check_branch
          %765 = sbr.rel (%p763) target = $region72
        $region71: #{xlnet_forward.1} parent=47 // pred_region
          %p766 = scmp.lt.s32.totalorder %s46, 1
          %s767 = scalar_select %p766, %s46, 1
          %s768 = smul.addr %s767, 4
          %s769 = smul.addr %s768, 8
          %s770 = scalar_lea.vmem %s5, %s769
        $region72: #{xlnet_forward.1} parent=47 // pred_fallthru
          _
        // Predicated region
        $region73: #{xlnet_forward.1} parent=47 // pred_check
          %p771 = pneg %p310
        $region74: #{xlnet_forward.1} parent=47 // pred_check_branch
          %773 = sbr.rel (%p771) target = $region76
        $region75: #{xlnet_forward.1} parent=47 // pred_region
          %p774 = scmp.lt.s32.totalorder %s46, 1
          %s775 = scalar_select %p774, %s46, 1
          %s776 = smul.addr %s775, 4
          %s777 = scalar_lea.vmem %s10, %s776
        $region76: #{xlnet_forward.1} parent=47 // pred_fallthru
          _
        // Predicated region
        $region77: #{xlnet_forward.1} parent=47 // pred_check
          %p778 = pneg %p336
        $region78: #{xlnet_forward.1} parent=47 // pred_check_branch
          %780 = sbr.rel (%p778) target = $region80
        $region79: #{xlnet_forward.1} parent=47 // pred_region
          %p781 = scmp.lt.s32.totalorder %s46, 1
          %s782 = scalar_select %p781, %s46, 1
          %s783 = smul.addr %s782, 4
          %s784 = smul.addr %s783, 2
          %s785 = scalar_lea.vmem %s11, %s784
        $region80: #{xlnet_forward.1} parent=47 // pred_fallthru
          _
        // Predicated region
        $region81: #{xlnet_forward.1} parent=47 // pred_check
          %p786 = pneg %p362
        $region82: #{xlnet_forward.1} parent=47 // pred_check_branch
          %788 = sbr.rel (%p786) target = $region84
        $region83: #{xlnet_forward.1} parent=47 // pred_region
          %p789 = scmp.lt.s32.totalorder %s46, 1
          %s790 = scalar_select %p789, %s46, 1
          %s791 = smul.addr %s790, 4
          %s792 = smul.addr %s791, 8
          %s793 = scalar_lea.vmem %s12, %s792
        $region84: #{xlnet_forward.1} parent=47 // pred_fallthru
          _
        // Predicated region
        $region85: #{xlnet_forward.1} parent=47 // pred_check
          %p794 = pneg %p388
        $region86: #{xlnet_forward.1} parent=47 // pred_check_branch
          %796 = sbr.rel (%p794) target = $region88
        $region87: #{xlnet_forward.1} parent=47 // pred_region
          %p797 = scmp.lt.s32.totalorder %s46, 1
          %s798 = scalar_select %p797, %s46, 1
          %s799 = smul.addr %s798, 4
          %s800 = scalar_lea.vmem %s13, %s799
        $region88: #{xlnet_forward.1} parent=47 // pred_fallthru
          _
        // Predicated region
        $region89: #{xlnet_forward.1} parent=47 // pred_check
          %p801 = pneg %p414
        $region90: #{xlnet_forward.1} parent=47 // pred_check_branch
          %803 = sbr.rel (%p801) target = $region92
        $region91: #{xlnet_forward.1} parent=47 // pred_region
          %p804 = scmp.lt.s32.totalorder %s46, 1
          %s805 = scalar_select %p804, %s46, 1
          %s806 = smul.addr %s805, 4
          %s807 = smul.addr %s806, 8
          %s808 = scalar_lea.vmem %s14, %s807
        $region92: #{xlnet_forward.1} parent=47 // pred_fallthru
          _
        // Predicated region
        $region93: #{xlnet_forward.1} parent=47 // pred_check
          %p809 = pneg %p440
        $region94: #{xlnet_forward.1} parent=47 // pred_check_branch
          %811 = sbr.rel (%p809) target = $region96
        $region95: #{xlnet_forward.1} parent=47 // pred_region
          %p812 = scmp.lt.s32.totalorder %s46, 1
          %s813 = scalar_select %p812, %s46, 1
          %s814 = scalar_lea.vmem %s15, %s813
        $region96: #{xlnet_forward.1} parent=47 // pred_fallthru
          _
        // Predicated region
        $region97: #{xlnet_forward.1} parent=47 // pred_check
          %p815 = pneg %p466
        $region98: #{xlnet_forward.1} parent=47 // pred_check_branch
          %817 = sbr.rel (%p815) target = $region100
        $region99: #{xlnet_forward.1} parent=47 // pred_region
          %p818 = scmp.lt.s32.totalorder %s46, 1
          %s819 = scalar_select %p818, %s46, 1
          %s820 = smul.addr %s819, 8
          %s821 = smul.addr %s820, 8
          %s822 = scalar_lea.vmem %s16, %s821
        $region100: #{xlnet_forward.1} parent=47 // pred_fallthru
          _
        // Predicated region
        $region101: #{xlnet_forward.1} parent=47 // pred_check
          %p823 = pneg %p492
        $region102: #{xlnet_forward.1} parent=47 // pred_check_branch
          %825 = sbr.rel (%p823) target = $region104
        $region103: #{xlnet_forward.1} parent=47 // pred_region
          %p826 = scmp.lt.s32.totalorder %s46, 1
          %s827 = scalar_select %p826, %s46, 1
          %s828 = scalar_lea.vmem %s17, %s827
        $region104: #{xlnet_forward.1} parent=47 // pred_fallthru
          _
        // Predicated region
        $region105: #{xlnet_forward.1} parent=47 // pred_check
          %p829 = pneg %p602
        $region106: #{xlnet_forward.1} parent=47 // pred_check_branch
          %831 = sbr.rel (%p829) target = $region108
        $region107: #{xlnet_forward.1} parent=47 // pred_region
          %p832 = scmp.lt.s32.totalorder %s45, 1
          %s833 = scalar_select %p832, %s45, 1
          %s834 = scalar_lea.vmem %s22, %s833
        $region108: #{xlnet_forward.1} parent=47 // pred_fallthru
          _
      $region48: #{xlnet_forward.1} parent=5 // pred_fallthru
        _
      %p835 = scmp.le.s32.totalorder 1, %s38
      %p836 = scmp.lt.s32.totalorder %s38, 5
      %p837 = pnand %p835, %p836
      %p838 = pneg %p837
      // Predicated region
      $region109: #{xlnet_forward.1} parent=5 // pred_check
        _
      $region110: #{xlnet_forward.1} parent=5 // pred_check_branch
        %840 = sbr.rel (%p837) target = $region112
      $region111: #{xlnet_forward.1} parent=5 // pred_region
        %s841 = ssub.s32 %s38, 1
        %p842 = scmp.lt.s32.totalorder %s47, 1
        %s843 = scalar_select %p842, %s47, 1
        %s844 = smul.addr %s843, 8
        %s845 = scalar_lea.vmem %s0, %s844
        %p846 = pneg %p76
        %p847 = pneg %p73
        %p848 = scmp.lt.s32.totalorder %s47, 1
        %s849 = scalar_select %p848, %s47, 1
        %s850 = scalar_lea.vmem %s1, %s849
        %p851 = pneg %p102
        %p852 = pneg %p99
        %p853 = scmp.lt.s32.totalorder %s47, 1
        %s854 = scalar_select %p853, %s47, 1
        %s855 = smul.addr %s854, 8
        %s856 = scalar_lea.vmem %s2, %s855
        %p857 = pneg %p128
        %p858 = pneg %p125
        %p859 = scmp.lt.s32.totalorder %s47, 1
        %s860 = scalar_select %p859, %s47, 1
        %s861 = scalar_lea.vmem %s3, %s860
        %p862 = pneg %p154
        %p863 = pneg %p151
        %p864 = scmp.lt.s32.totalorder %s48, 1
        %s865 = scalar_select %p864, %s48, 1
        %s866 = smul.addr %s865, 4
        %s867 = smul.addr %s866, 8
        %s868 = scalar_lea.vmem %s4, %s867
        %p869 = pneg %p180
        %p870 = pneg %p177
        %p871 = scmp.lt.s32.totalorder %s48, 1
        %s872 = scalar_select %p871, %s48, 1
        %s873 = smul.addr %s872, 4
        %s874 = smul.addr %s873, 8
        %s875 = scalar_lea.vmem %s5, %s874
        %p876 = pneg %p206
        %p877 = pneg %p203
        %p878 = pneg %p227
        %p879 = pneg %p224
        %p880 = pneg %p248
        %p881 = pneg %p245
        %p882 = pneg %p269
        %p883 = pneg %p266
        %p884 = pneg %p290
        %p885 = pneg %p287
        %p886 = scmp.lt.s32.totalorder %s48, 1
        %s887 = scalar_select %p886, %s48, 1
        %s888 = smul.addr %s887, 4
        %s889 = scalar_lea.vmem %s10, %s888
        %p890 = pneg %p316
        %p891 = pneg %p313
        %p892 = scmp.lt.s32.totalorder %s48, 1
        %s893 = scalar_select %p892, %s48, 1
        %s894 = smul.addr %s893, 4
        %s895 = smul.addr %s894, 2
        %s896 = scalar_lea.vmem %s11, %s895
        %p897 = pneg %p342
        %p898 = pneg %p339
        %p899 = scmp.lt.s32.totalorder %s48, 1
        %s900 = scalar_select %p899, %s48, 1
        %s901 = smul.addr %s900, 4
        %s902 = smul.addr %s901, 8
        %s903 = scalar_lea.vmem %s12, %s902
        %p904 = pneg %p368
        %p905 = pneg %p365
        %p906 = scmp.lt.s32.totalorder %s48, 1
        %s907 = scalar_select %p906, %s48, 1
        %s908 = smul.addr %s907, 4
        %s909 = scalar_lea.vmem %s13, %s908
        %p910 = pneg %p394
        %p911 = pneg %p391
        %p912 = scmp.lt.s32.totalorder %s48, 1
        %s913 = scalar_select %p912, %s48, 1
        %s914 = smul.addr %s913, 4
        %s915 = smul.addr %s914, 8
        %s916 = scalar_lea.vmem %s14, %s915
        %p917 = pneg %p420
        %p918 = pneg %p417
        %p919 = scmp.lt.s32.totalorder %s48, 1
        %s920 = scalar_select %p919, %s48, 1
        %s921 = scalar_lea.vmem %s15, %s920
        %p922 = pneg %p446
        %p923 = pneg %p443
        %p924 = scmp.lt.s32.totalorder %s48, 1
        %s925 = scalar_select %p924, %s48, 1
        %s926 = smul.addr %s925, 8
        %s927 = smul.addr %s926, 8
        %s928 = scalar_lea.vmem %s16, %s927
        %p929 = pneg %p472
        %p930 = pneg %p469
        %p931 = scmp.lt.s32.totalorder %s48, 1
        %s932 = scalar_select %p931, %s48, 1
        %s933 = scalar_lea.vmem %s17, %s932
        %p934 = pneg %p498
        %p935 = pneg %p495
        %p936 = pneg %p519
        %p937 = pneg %p516
        %p938 = pneg %p540
        %p939 = pneg %p537
        %p940 = pneg %p561
        %p941 = pneg %p558
        %p942 = pneg %p582
        %p943 = pneg %p579
        %p944 = scmp.lt.s32.totalorder %s47, 1
        %s945 = scalar_select %p944, %s47, 1
        %s946 = scalar_lea.vmem %s22, %s945
        %p947 = pneg %p608
        %p948 = pneg %p605
        %p949 = pneg %p634
        %p950 = pneg %p631
        %s951 = sand.u32 %s621, 1
        %s952 = scalar_lea.sflag [#allocation4], %s951
        %s953 = sand.u32 %s621, 1
        %s954 = scalar_lea.vmem [#allocation3], %s953
        %p955 = pneg %p660
        %p956 = pneg %p657
        %s957 = sand.u32 %s647, 1
        %s958 = scalar_lea.sflag [#allocation6], %s957
        %s959 = sand.u32 %s647, 1
        %s960 = scalar_lea.vmem [#allocation5], %s959
        %p961 = pneg %p686
        %p962 = pneg %p683
        %p963 = scmp.lt.s32.totalorder %s47, 1
        %s964 = scalar_select %p963, %s47, 1
        %s965 = scalar_lea.vmem %s25, %s964
        %p966 = scmp.lt.s32.totalorder %s47, 1
        %s967 = scalar_select %p966, %s47, 1
        %s968 = smul.addr %s967, 8
        %s969 = scalar_lea.vmem %s0, %s968
        %p970 = scmp.lt.s32.totalorder %s47, 1
        %s971 = scalar_select %p970, %s47, 1
        %s972 = scalar_lea.vmem %s1, %s971
        %p973 = scmp.lt.s32.totalorder %s47, 1
        %s974 = scalar_select %p973, %s47, 1
        %s975 = smul.addr %s974, 8
        %s976 = scalar_lea.vmem %s2, %s975
        %p977 = scmp.lt.s32.totalorder %s47, 1
        %s978 = scalar_select %p977, %s47, 1
        %s979 = scalar_lea.vmem %s3, %s978
        %p980 = scmp.lt.s32.totalorder %s48, 1
        %s981 = scalar_select %p980, %s48, 1
        %s982 = smul.addr %s981, 4
        %s983 = smul.addr %s982, 8
        %s984 = scalar_lea.vmem %s4, %s983
        %p985 = scmp.lt.s32.totalorder %s48, 1
        %s986 = scalar_select %p985, %s48, 1
        %s987 = smul.addr %s986, 4
        %s988 = smul.addr %s987, 8
        %s989 = scalar_lea.vmem %s5, %s988
        %p990 = scmp.lt.s32.totalorder %s48, 1
        %s991 = scalar_select %p990, %s48, 1
        %s992 = smul.addr %s991, 4
        %s993 = scalar_lea.vmem %s10, %s992
        %p994 = scmp.lt.s32.totalorder %s48, 1
        %s995 = scalar_select %p994, %s48, 1
        %s996 = smul.addr %s995, 4
        %s997 = smul.addr %s996, 2
        %s998 = scalar_lea.vmem %s11, %s997
        %p999 = scmp.lt.s32.totalorder %s48, 1
        %s1000 = scalar_select %p999, %s48, 1
        %s1001 = smul.addr %s1000, 4
        %s1002 = smul.addr %s1001, 8
        %s1003 = scalar_lea.vmem %s12, %s1002
        %p1004 = scmp.lt.s32.totalorder %s48, 1
        %s1005 = scalar_select %p1004, %s48, 1
        %s1006 = smul.addr %s1005, 4
        %s1007 = scalar_lea.vmem %s13, %s1006
        %p1008 = scmp.lt.s32.totalorder %s48, 1
        %s1009 = scalar_select %p1008, %s48, 1
        %s1010 = smul.addr %s1009, 4
        %s1011 = smul.addr %s1010, 8
        %s1012 = scalar_lea.vmem %s14, %s1011
        %p1013 = scmp.lt.s32.totalorder %s48, 1
        %s1014 = scalar_select %p1013, %s48, 1
        %s1015 = scalar_lea.vmem %s15, %s1014
        %p1016 = scmp.lt.s32.totalorder %s48, 1
        %s1017 = scalar_select %p1016, %s48, 1
        %s1018 = smul.addr %s1017, 8
        %s1019 = smul.addr %s1018, 8
        %s1020 = scalar_lea.vmem %s16, %s1019
        %p1021 = scmp.lt.s32.totalorder %s48, 1
        %s1022 = scalar_select %p1021, %s48, 1
        %s1023 = scalar_lea.vmem %s17, %s1022
        %p1024 = scmp.lt.s32.totalorder %s47, 1
        %s1025 = scalar_select %p1024, %s47, 1
        %s1026 = scalar_lea.vmem %s22, %s1025
        %p1027 = scmp.lt.s32.totalorder %s47, 1
        %s1028 = scalar_select %p1027, %s47, 1
        %s1029 = scalar_lea.vmem %s25, %s1028
        %p1030 = scmp.eq.s32.totalorder %s48, 0
        // Predicated region
        $region113: #{xlnet_forward.1} parent=111 // pred_check
          %p1031 = pneg %p1030
        $region114: #{xlnet_forward.1} parent=111 // pred_check_branch
          %1033 = sbr.rel (%p1031) target = $region116
        $region115: #{xlnet_forward.1} parent=111 // pred_region
          %v1034 = vld [vmem:[%s969] sm:$0xff]
          %vm1035 = vcmask 261120
          %1036 = vst.msk [vmem:[#allocation2] sm:$0xff] %vm1035, %v1034
        $region116: #{xlnet_forward.1} parent=111 // pred_fallthru
          _
        %v1037 = vld [vmem:[#allocation2] sm:$0xff]
        %v1038 = vld [vmem:[%s984] sm:$0xff]
        %v1039 = vld [vmem:[%s984 + $0x8] sm:$0xff]
        %v1040 = vld [vmem:[%s984 + $0x10] sm:$0xff]
        %v1041 = vld [vmem:[%s984 + $0x18] sm:$0xff]
        %vm1042 = vcmask 261120
        %v1044 = vsel %vm1042, %v1037, 0
        %1046 = vmatprep.subr.mxu0 0.0
        %1047 = vmatpush1.msra.mxu0 0.0
        %1048 = vmatprep.subr.mxu0 0.0
        %1049 = vmatpush1.msra.mxu0 0.0
        %1050 = vmatprep.subr.mxu0 0.0
        %1051 = vmatpush1.msra.mxu0 0.0
        %1052 = vmatprep.subr.mxu0 0.0
        %1053 = vmatpush1.msra.mxu0 0.0
        %1054 = vmatprep.subr.mxu0 0.0
        %1055 = vmatpush1.msra.mxu0 0.0
        %1056 = vmatprep.subr.mxu0 0.0
        %1057 = vmatpush1.msra.mxu0 0.0
        %1058 = vmatprep.subr.mxu0 0.0
        %1059 = vmatpush1.msra.mxu0 0.0
        %1060 = vmatprep.subr.mxu0 0.0
        %1061 = vmatpush1.msra.mxu0 0.0
        %1062 = vmatprep.subr.mxu0 0.0
        %1063 = vmatpush1.msra.mxu0 0.0
        %1064 = vmatprep.subr.mxu0 0.0
        %1065 = vmatpush1.msra.mxu0 0.0
        %1066 = vmatprep.subr.mxu0 0.0
        %1067 = vmatpush1.msra.mxu0 0.0
        %1068 = vmatprep.subr.mxu0 0.0
        %1069 = vmatpush1.msra.mxu0 0.0
        %1070 = vmatprep.subr.mxu0 0.0
        %1071 = vmatpush1.msra.mxu0 %v1041
        %1072 = vmatprep.subr.mxu0 0.0
        %1073 = vmatpush1.msra.mxu0 %v1040
        %1074 = vmatprep.subr.mxu0 0.0
        %1075 = vmatpush1.msra.mxu0 %v1039
        %1076 = vmatprep.subr.mxu0 0.0
        %1077 = vmatpush1.msra.mxu0 %v1038
        %1078 = vmatprep.subr.mxu0 0.0
        %1079 = vmatpush2.msra.mxu0 0.0
        %1080 = vmatprep.subr.mxu0 0.0
        %1081 = vmatpush2.msra.mxu0 0.0
        %1082 = vmatprep.subr.mxu0 0.0
        %1083 = vmatpush2.msra.mxu0 0.0
        %1084 = vmatprep.subr.mxu0 0.0
        %1085 = vmatpush2.msra.mxu0 0.0
        %1086 = vmatprep.subr.mxu0 0.0
        %1087 = vmatpush2.msra.mxu0 0.0
        %1088 = vmatprep.subr.mxu0 0.0
        %1089 = vmatpush2.msra.mxu0 0.0
        %1090 = vmatprep.subr.mxu0 0.0
        %1091 = vmatpush2.msra.mxu0 0.0
        %1092 = vmatprep.subr.mxu0 0.0
        %1093 = vmatpush2.msra.mxu0 0.0
        %1094 = vmatprep.subr.mxu0 0.0
        %1095 = vmatpush2.msra.mxu0 0.0
        %1096 = vmatprep.subr.mxu0 0.0
        %1097 = vmatpush2.msra.mxu0 0.0
        %1098 = vmatprep.subr.mxu0 0.0
        %1099 = vmatpush2.msra.mxu0 0.0
        %1100 = vmatprep.subr.mxu0 0.0
        %1101 = vmatpush2.msra.mxu0 0.0
        %1102 = vmatprep.subr.mxu0 0.0
        %1103 = vmatpush2.msra.mxu0 0.0
        %1104 = vmatprep.subr.mxu0 0.0
        %1105 = vmatpush2.msra.mxu0 0.0
        %1106 = vmatprep.subr.mxu0 0.0
        %1107 = vmatpush2.msra.mxu0 0.0
        %1108 = vmatprep.subr.mxu0 0.0
        %1109 = vmatpush2.msra.mxu0 0.0
        %1110 = vmatprep.mubr.f32.mxu0 0.0
        %1111 = vmatmul.mubr.f32.gmra.mxu0 %v1044
        %v1112 = vpop.f32.mrf.mxu0
        %v1113 = vadd.f32 0.0, %v1112
        %v1114 = vpop.f32.mrf.mxu0
        %1115 = vdwg.mxu0
        %v1116 = vld [vmem:[%s993] sm:$0x7]
        %v1117 = vlaneseq
        %v1118 = vshrl.u32 %v1117, 7
        %v1119 = vsub.s32 0, %v1118
        %v1120 = vrot.slane %v1116, %v1119
        %v1121 = vadd.f32 %v1113, %v1120
        %v1122 = vmul.f32 %v1121, 0.35355338
        %v1123 = vlaneseq
        %v1124 = vshrl.u32 %v1123, 7
        %v1125 = vsub.s32 1, %v1124
        %v1126 = vrot.slane %v1116, %v1125
        %v1127 = vadd.f32 %v1113, %v1126
        %v1128 = vmul.f32 %v1127, 0.35355338
        %v1129 = vlaneseq
        %v1130 = vshrl.u32 %v1129, 7
        %v1131 = vsub.s32 2, %v1130
        %v1132 = vrot.slane %v1116, %v1131
        %v1133 = vadd.f32 %v1113, %v1132
        %v1134 = vmul.f32 %v1133, 0.35355338
        %1136 = vrot.lane.b32.xlu0 %v1122, 120
        %v1137 = vpop.permute.xlu0 %1136
        %1138 = vrot.lane.b32.xlu0 %v1122, 112
        %v1139 = vpop.permute.xlu0 %1138
        %1140 = vrot.lane.b32.xlu0 %v1122, 104
        %v1141 = vpop.permute.xlu0 %1140
        %1143 = vrot.lane.b32.xlu0 %v1128, 120
        %v1144 = vpop.permute.xlu0 %1143
        %1145 = vrot.lane.b32.xlu0 %v1128, 112
        %v1146 = vpop.permute.xlu0 %1145
        %1147 = vrot.lane.b32.xlu0 %v1128, 104
        %v1148 = vpop.permute.xlu0 %1147
        %1150 = vrot.lane.b32.xlu0 %v1134, 120
        %v1151 = vpop.permute.xlu0 %1150
        %1152 = vrot.lane.b32.xlu0 %v1134, 112
        %v1153 = vpop.permute.xlu0 %1152
        %1154 = vrot.lane.b32.xlu0 %v1134, 104
        %v1155 = vpop.permute.xlu0 %1154
        %1157 = vrot.lane.b32.xlu0 %v1113, 120
        %v1158 = vpop.permute.xlu0 %1157
        %1159 = vrot.lane.b32.xlu0 %v1113, 112
        %v1160 = vpop.permute.xlu0 %1159
        %1161 = vrot.lane.b32.xlu0 %v1113, 104
        %v1162 = vpop.permute.xlu0 %1161
        %v1163 = vld [vmem:[%s989] sm:$0xff]
        %v1164 = vld [vmem:[%s989 + $0x8] sm:$0xff]
        %v1165 = vld [vmem:[%s989 + $0x10] sm:$0xff]
        %v1166 = vld [vmem:[%s989 + $0x18] sm:$0xff]
        %vm1167 = vcmask 64512
        %v1168 = vsel %vm1167, %v1128, 0
        %1170 = vmatprep.subr.mxu0 0.0
        %1171 = vmatpush1.msra.mxu0 0.0
        %1172 = vmatprep.subr.mxu0 0.0
        %1173 = vmatpush1.msra.mxu0 0.0
        %1174 = vmatprep.subr.mxu0 0.0
        %1175 = vmatpush1.msra.mxu0 0.0
        %1176 = vmatprep.subr.mxu0 0.0
        %1177 = vmatpush1.msra.mxu0 0.0
        %1178 = vmatprep.subr.mxu0 0.0
        %1179 = vmatpush1.msra.mxu0 0.0
        %1180 = vmatprep.subr.mxu0 0.0
        %1181 = vmatpush1.msra.mxu0 0.0
        %1182 = vmatprep.subr.mxu0 0.0
        %1183 = vmatpush1.msra.mxu0 0.0
        %1184 = vmatprep.subr.mxu0 0.0
        %1185 = vmatpush1.msra.mxu0 0.0
        %1186 = vmatprep.subr.mxu0 0.0
        %1187 = vmatpush1.msra.mxu0 0.0
        %1188 = vmatprep.subr.mxu0 0.0
        %1189 = vmatpush1.msra.mxu0 0.0
        %1190 = vmatprep.subr.mxu0 0.0
        %1191 = vmatpush1.msra.mxu0 0.0
        %1192 = vmatprep.subr.mxu0 0.0
        %1193 = vmatpush1.msra.mxu0 0.0
        %1194 = vmatprep.subr.mxu0 0.0
        %1195 = vmatpush1.msra.mxu0 0.0
        %1196 = vmatprep.subr.mxu0 0.0
        %1197 = vmatpush1.msra.mxu0 0.0
        %1198 = vmatprep.subr.mxu0 0.0
        %1199 = vmatpush1.msra.mxu0 0.0
        %1200 = vmatprep.subr.mxu0 0.0
        %1201 = vmatpush1.msra.mxu0 %v1163
        %1202 = vmatprep.subr.mxu0 0.0
        %1203 = vmatpush2.msra.mxu0 0.0
        %1204 = vmatprep.subr.mxu0 0.0
        %1205 = vmatpush2.msra.mxu0 0.0
        %1206 = vmatprep.subr.mxu0 0.0
        %1207 = vmatpush2.msra.mxu0 0.0
        %1208 = vmatprep.subr.mxu0 0.0
        %1209 = vmatpush2.msra.mxu0 0.0
        %1210 = vmatprep.subr.mxu0 0.0
        %1211 = vmatpush2.msra.mxu0 0.0
        %1212 = vmatprep.subr.mxu0 0.0
        %1213 = vmatpush2.msra.mxu0 0.0
        %1214 = vmatprep.subr.mxu0 0.0
        %1215 = vmatpush2.msra.mxu0 0.0
        %1216 = vmatprep.subr.mxu0 0.0
        %1217 = vmatpush2.msra.mxu0 0.0
        %1218 = vmatprep.subr.mxu0 0.0
        %1219 = vmatpush2.msra.mxu0 0.0
        %1220 = vmatprep.subr.mxu0 0.0
        %1221 = vmatpush2.msra.mxu0 0.0
        %1222 = vmatprep.subr.mxu0 0.0
        %1223 = vmatpush2.msra.mxu0 0.0
        %1224 = vmatprep.subr.mxu0 0.0
        %1225 = vmatpush2.msra.mxu0 0.0
        %1226 = vmatprep.subr.mxu0 0.0
        %1227 = vmatpush2.msra.mxu0 0.0
        %1228 = vmatprep.subr.mxu0 0.0
        %1229 = vmatpush2.msra.mxu0 0.0
        %1230 = vmatprep.subr.mxu0 0.0
        %1231 = vmatpush2.msra.mxu0 0.0
        %1232 = vmatprep.subr.mxu0 0.0
        %1233 = vmatpush2.msra.mxu0 0.0
        %1234 = vmatprep.mubr.f32.mxu0 0.0
        %1235 = vmatmul.mubr.f32.gmra.mxu0 %v1168
        %v1236 = vpop.f32.mrf.mxu0
        %v1237 = vadd.f32 0.0, %v1236
        %v1238 = vpop.f32.mrf.mxu0
        %1239 = vdwg.mxu0
        %v1240 = vsel %vm1167, %v1144, 0
        %1242 = vmatprep.subr.mxu0 0.0
        %1243 = vmatpush1.msra.mxu0 0.0
        %1244 = vmatprep.subr.mxu0 0.0
        %1245 = vmatpush1.msra.mxu0 0.0
        %1246 = vmatprep.subr.mxu0 0.0
        %1247 = vmatpush1.msra.mxu0 0.0
        %1248 = vmatprep.subr.mxu0 0.0
        %1249 = vmatpush1.msra.mxu0 0.0
        %1250 = vmatprep.subr.mxu0 0.0
        %1251 = vmatpush1.msra.mxu0 0.0
        %1252 = vmatprep.subr.mxu0 0.0
        %1253 = vmatpush1.msra.mxu0 0.0
        %1254 = vmatprep.subr.mxu0 0.0
        %1255 = vmatpush1.msra.mxu0 0.0
        %1256 = vmatprep.subr.mxu0 0.0
        %1257 = vmatpush1.msra.mxu0 0.0
        %1258 = vmatprep.subr.mxu0 0.0
        %1259 = vmatpush1.msra.mxu0 0.0
        %1260 = vmatprep.subr.mxu0 0.0
        %1261 = vmatpush1.msra.mxu0 0.0
        %1262 = vmatprep.subr.mxu0 0.0
        %1263 = vmatpush1.msra.mxu0 0.0
        %1264 = vmatprep.subr.mxu0 0.0
        %1265 = vmatpush1.msra.mxu0 0.0
        %1266 = vmatprep.subr.mxu0 0.0
        %1267 = vmatpush1.msra.mxu0 0.0
        %1268 = vmatprep.subr.mxu0 0.0
        %1269 = vmatpush1.msra.mxu0 0.0
        %1270 = vmatprep.subr.mxu0 0.0
        %1271 = vmatpush1.msra.mxu0 0.0
        %1272 = vmatprep.subr.mxu0 0.0
        %1273 = vmatpush1.msra.mxu0 %v1164
        %1274 = vmatprep.subr.mxu0 0.0
        %1275 = vmatpush2.msra.mxu0 0.0
        %1276 = vmatprep.subr.mxu0 0.0
        %1277 = vmatpush2.msra.mxu0 0.0
        %1278 = vmatprep.subr.mxu0 0.0
        %1279 = vmatpush2.msra.mxu0 0.0
        %1280 = vmatprep.subr.mxu0 0.0
        %1281 = vmatpush2.msra.mxu0 0.0
        %1282 = vmatprep.subr.mxu0 0.0
        %1283 = vmatpush2.msra.mxu0 0.0
        %1284 = vmatprep.subr.mxu0 0.0
        %1285 = vmatpush2.msra.mxu0 0.0
        %1286 = vmatprep.subr.mxu0 0.0
        %1287 = vmatpush2.msra.mxu0 0.0
        %1288 = vmatprep.subr.mxu0 0.0
        %1289 = vmatpush2.msra.mxu0 0.0
        %1290 = vmatprep.subr.mxu0 0.0
        %1291 = vmatpush2.msra.mxu0 0.0
        %1292 = vmatprep.subr.mxu0 0.0
        %1293 = vmatpush2.msra.mxu0 0.0
        %1294 = vmatprep.subr.mxu0 0.0
        %1295 = vmatpush2.msra.mxu0 0.0
        %1296 = vmatprep.subr.mxu0 0.0
        %1297 = vmatpush2.msra.mxu0 0.0
        %1298 = vmatprep.subr.mxu0 0.0
        %1299 = vmatpush2.msra.mxu0 0.0
        %1300 = vmatprep.subr.mxu0 0.0
        %1301 = vmatpush2.msra.mxu0 0.0
        %1302 = vmatprep.subr.mxu0 0.0
        %1303 = vmatpush2.msra.mxu0 0.0
        %1304 = vmatprep.subr.mxu0 0.0
        %1305 = vmatpush2.msra.mxu0 0.0
        %1306 = vmatprep.mubr.f32.mxu0 0.0
        %1307 = vmatmul.mubr.f32.gmra.mxu0 %v1240
        %v1308 = vpop.f32.mrf.mxu0
        %v1309 = vadd.f32 0.0, %v1308
        %v1310 = vpop.f32.mrf.mxu0
        %1311 = vdwg.mxu0
        %v1312 = vsel %vm1167, %v1146, 0
        %1314 = vmatprep.subr.mxu0 0.0
        %1315 = vmatpush1.msra.mxu0 0.0
        %1316 = vmatprep.subr.mxu0 0.0
        %1317 = vmatpush1.msra.mxu0 0.0
        %1318 = vmatprep.subr.mxu0 0.0
        %1319 = vmatpush1.msra.mxu0 0.0
        %1320 = vmatprep.subr.mxu0 0.0
        %1321 = vmatpush1.msra.mxu0 0.0
        %1322 = vmatprep.subr.mxu0 0.0
        %1323 = vmatpush1.msra.mxu0 0.0
        %1324 = vmatprep.subr.mxu0 0.0
        %1325 = vmatpush1.msra.mxu0 0.0
        %1326 = vmatprep.subr.mxu0 0.0
        %1327 = vmatpush1.msra.mxu0 0.0
        %1328 = vmatprep.subr.mxu0 0.0
        %1329 = vmatpush1.msra.mxu0 0.0
        %1330 = vmatprep.subr.mxu0 0.0
        %1331 = vmatpush1.msra.mxu0 0.0
        %1332 = vmatprep.subr.mxu0 0.0
        %1333 = vmatpush1.msra.mxu0 0.0
        %1334 = vmatprep.subr.mxu0 0.0
        %1335 = vmatpush1.msra.mxu0 0.0
        %1336 = vmatprep.subr.mxu0 0.0
        %1337 = vmatpush1.msra.mxu0 0.0
        %1338 = vmatprep.subr.mxu0 0.0
        %1339 = vmatpush1.msra.mxu0 0.0
        %1340 = vmatprep.subr.mxu0 0.0
        %1341 = vmatpush1.msra.mxu0 0.0
        %1342 = vmatprep.subr.mxu0 0.0
        %1343 = vmatpush1.msra.mxu0 0.0
        %1344 = vmatprep.subr.mxu0 0.0
        %1345 = vmatpush1.msra.mxu0 %v1165
        %1346 = vmatprep.subr.mxu0 0.0
        %1347 = vmatpush2.msra.mxu0 0.0
        %1348 = vmatprep.subr.mxu0 0.0
        %1349 = vmatpush2.msra.mxu0 0.0
        %1350 = vmatprep.subr.mxu0 0.0
        %1351 = vmatpush2.msra.mxu0 0.0
        %1352 = vmatprep.subr.mxu0 0.0
        %1353 = vmatpush2.msra.mxu0 0.0
        %1354 = vmatprep.subr.mxu0 0.0
        %1355 = vmatpush2.msra.mxu0 0.0
        %1356 = vmatprep.subr.mxu0 0.0
        %1357 = vmatpush2.msra.mxu0 0.0
        %1358 = vmatprep.subr.mxu0 0.0
        %1359 = vmatpush2.msra.mxu0 0.0
        %1360 = vmatprep.subr.mxu0 0.0
        %1361 = vmatpush2.msra.mxu0 0.0
        %1362 = vmatprep.subr.mxu0 0.0
        %1363 = vmatpush2.msra.mxu0 0.0
        %1364 = vmatprep.subr.mxu0 0.0
        %1365 = vmatpush2.msra.mxu0 0.0
        %1366 = vmatprep.subr.mxu0 0.0
        %1367 = vmatpush2.msra.mxu0 0.0
        %1368 = vmatprep.subr.mxu0 0.0
        %1369 = vmatpush2.msra.mxu0 0.0
        %1370 = vmatprep.subr.mxu0 0.0
        %1371 = vmatpush2.msra.mxu0 0.0
        %1372 = vmatprep.subr.mxu0 0.0
        %1373 = vmatpush2.msra.mxu0 0.0
        %1374 = vmatprep.subr.mxu0 0.0
        %1375 = vmatpush2.msra.mxu0 0.0
        %1376 = vmatprep.subr.mxu0 0.0
        %1377 = vmatpush2.msra.mxu0 0.0
        %1378 = vmatprep.mubr.f32.mxu0 0.0
        %1379 = vmatmul.mubr.f32.gmra.mxu0 %v1312
        %v1380 = vpop.f32.mrf.mxu0
        %v1381 = vadd.f32 0.0, %v1380
        %v1382 = vpop.f32.mrf.mxu0
        %1383 = vdwg.mxu0
        %v1384 = vsel %vm1167, %v1148, 0
        %1386 = vmatprep.subr.mxu0 0.0
        %1387 = vmatpush1.msra.mxu0 0.0
        %1388 = vmatprep.subr.mxu0 0.0
        %1389 = vmatpush1.msra.mxu0 0.0
        %1390 = vmatprep.subr.mxu0 0.0
        %1391 = vmatpush1.msra.mxu0 0.0
        %1392 = vmatprep.subr.mxu0 0.0
        %1393 = vmatpush1.msra.mxu0 0.0
        %1394 = vmatprep.subr.mxu0 0.0
        %1395 = vmatpush1.msra.mxu0 0.0
        %1396 = vmatprep.subr.mxu0 0.0
        %1397 = vmatpush1.msra.mxu0 0.0
        %1398 = vmatprep.subr.mxu0 0.0
        %1399 = vmatpush1.msra.mxu0 0.0
        %1400 = vmatprep.subr.mxu0 0.0
        %1401 = vmatpush1.msra.mxu0 0.0
        %1402 = vmatprep.subr.mxu0 0.0
        %1403 = vmatpush1.msra.mxu0 0.0
        %1404 = vmatprep.subr.mxu0 0.0
        %1405 = vmatpush1.msra.mxu0 0.0
        %1406 = vmatprep.subr.mxu0 0.0
        %1407 = vmatpush1.msra.mxu0 0.0
        %1408 = vmatprep.subr.mxu0 0.0
        %1409 = vmatpush1.msra.mxu0 0.0
        %1410 = vmatprep.subr.mxu0 0.0
        %1411 = vmatpush1.msra.mxu0 0.0
        %1412 = vmatprep.subr.mxu0 0.0
        %1413 = vmatpush1.msra.mxu0 0.0
        %1414 = vmatprep.subr.mxu0 0.0
        %1415 = vmatpush1.msra.mxu0 0.0
        %1416 = vmatprep.subr.mxu0 0.0
        %1417 = vmatpush1.msra.mxu0 %v1166
        %1418 = vmatprep.subr.mxu0 0.0
        %1419 = vmatpush2.msra.mxu0 0.0
        %1420 = vmatprep.subr.mxu0 0.0
        %1421 = vmatpush2.msra.mxu0 0.0
        %1422 = vmatprep.subr.mxu0 0.0
        %1423 = vmatpush2.msra.mxu0 0.0
        %1424 = vmatprep.subr.mxu0 0.0
        %1425 = vmatpush2.msra.mxu0 0.0
        %1426 = vmatprep.subr.mxu0 0.0
        %1427 = vmatpush2.msra.mxu0 0.0
        %1428 = vmatprep.subr.mxu0 0.0
        %1429 = vmatpush2.msra.mxu0 0.0
        %1430 = vmatprep.subr.mxu0 0.0
        %1431 = vmatpush2.msra.mxu0 0.0
        %1432 = vmatprep.subr.mxu0 0.0
        %1433 = vmatpush2.msra.mxu0 0.0
        %1434 = vmatprep.subr.mxu0 0.0
        %1435 = vmatpush2.msra.mxu0 0.0
        %1436 = vmatprep.subr.mxu0 0.0
        %1437 = vmatpush2.msra.mxu0 0.0
        %1438 = vmatprep.subr.mxu0 0.0
        %1439 = vmatpush2.msra.mxu0 0.0
        %1440 = vmatprep.subr.mxu0 0.0
        %1441 = vmatpush2.msra.mxu0 0.0
        %1442 = vmatprep.subr.mxu0 0.0
        %1443 = vmatpush2.msra.mxu0 0.0
        %1444 = vmatprep.subr.mxu0 0.0
        %1445 = vmatpush2.msra.mxu0 0.0
        %1446 = vmatprep.subr.mxu0 0.0
        %1447 = vmatpush2.msra.mxu0 0.0
        %1448 = vmatprep.subr.mxu0 0.0
        %1449 = vmatpush2.msra.mxu0 0.0
        %1450 = vmatprep.mubr.f32.mxu0 0.0
        %1451 = vmatmul.mubr.f32.gmra.mxu0 %v1384
        %v1452 = vpop.f32.mrf.mxu0
        %v1453 = vadd.f32 0.0, %v1452
        %v1454 = vpop.f32.mrf.mxu0
        %1455 = vdwg.mxu0
        %v1456 = vld [vmem:[%s6] sm:$0xff]
        %v1457 = vld [vmem:[%s7] sm:$0xff]
        %v1458 = vmul.f32 %v1237, %v1456
        %v1459 = vmul.f32 %v1309, %v1456
        %v1460 = vmul.f32 %v1381, %v1456
        %v1461 = vmul.f32 %v1453, %v1456
        %1463 = vrot.lane.b32.xlu0 %v1457, 16
        %v1464 = vpop.permute.xlu0 %1463
        %v1466 = vmul.f32 %v1237, %v1464
        %v1467 = vmul.f32 %v1309, %v1464
        %v1468 = vmul.f32 %v1381, %v1464
        %v1469 = vmul.f32 %v1453, %v1464
        %1474 = vrot.lane.b32.xlu0 %v1466, 112
        %v1475 = vpop.permute.xlu0 %1474
        %1476 = vrot.lane.b32.xlu0 %v1467, 112
        %v1477 = vpop.permute.xlu0 %1476
        %1478 = vrot.lane.b32.xlu0 %v1468, 112
        %v1479 = vpop.permute.xlu0 %1478
        %1480 = vrot.lane.b32.xlu0 %v1469, 112
        %v1481 = vpop.permute.xlu0 %1480
        %v1486 = vadd.f32 %v1458, %v1475
        %v1487 = vadd.f32 %v1459, %v1477
        %v1488 = vadd.f32 %v1460, %v1479
        %v1489 = vadd.f32 %v1461, %v1481
        %1491 = vrot.lane.b32.xlu0 %v1456, 16
        %v1492 = vpop.permute.xlu0 %1491
        %v1494 = vmul.f32 %v1237, %v1492
        %v1495 = vmul.f32 %v1309, %v1492
        %v1496 = vmul.f32 %v1381, %v1492
        %v1497 = vmul.f32 %v1453, %v1492
        %v1498 = vmul.f32 %v1237, %v1457
        %v1499 = vmul.f32 %v1309, %v1457
        %v1500 = vmul.f32 %v1381, %v1457
        %v1501 = vmul.f32 %v1453, %v1457
        %1506 = vrot.lane.b32.xlu0 %v1498, 16
        %v1507 = vpop.permute.xlu0 %1506
        %1508 = vrot.lane.b32.xlu0 %v1499, 16
        %v1509 = vpop.permute.xlu0 %1508
        %1510 = vrot.lane.b32.xlu0 %v1500, 16
        %v1511 = vpop.permute.xlu0 %1510
        %1512 = vrot.lane.b32.xlu0 %v1501, 16
        %v1513 = vpop.permute.xlu0 %1512
        %v1518 = vsub.f32 %v1494, %v1507
        %v1519 = vsub.f32 %v1495, %v1509
        %v1520 = vsub.f32 %v1496, %v1511
        %v1521 = vsub.f32 %v1497, %v1513
        %v1522 = vld [vmem:[%s8] sm:$0xff]
        %v1523 = vld [vmem:[%s8 + $0x8] sm:$0xff]
        %v1524 = vld [vmem:[%s9] sm:$0xff]
        %v1525 = vld [vmem:[%s9 + $0x8] sm:$0xff]
        %1530 = vrot.lane.b32.xlu0 %v1518, 112
        %v1531 = vpop.permute.xlu0 %1530
        %1532 = vrot.lane.b32.xlu0 %v1519, 112
        %v1533 = vpop.permute.xlu0 %1532
        %1534 = vrot.lane.b32.xlu0 %v1520, 112
        %v1535 = vpop.permute.xlu0 %1534
        %1536 = vrot.lane.b32.xlu0 %v1521, 112
        %v1537 = vpop.permute.xlu0 %1536
        %vm1538 = vcmask 130048
        %v1539 = vsel %vm1538, %v1531, 0
        %v1541 = vsel %vm1538, %v1533, 0
        %v1543 = vsel %vm1538, %v1535, 0
        %v1545 = vsel %vm1538, %v1537, 0
        %1547 = vmatprep.subr.mxu0 0.0
        %1548 = vmatpush1.msra.mxu0 0.0
        %1549 = vmatprep.subr.mxu0 0.0
        %1550 = vmatpush1.msra.mxu0 0.0
        %1551 = vmatprep.subr.mxu0 0.0
        %1552 = vmatpush1.msra.mxu0 0.0
        %1553 = vmatprep.subr.mxu0 0.0
        %1554 = vmatpush1.msra.mxu0 0.0
        %1555 = vmatprep.subr.mxu0 0.0
        %1556 = vmatpush1.msra.mxu0 0.0
        %1557 = vmatprep.subr.mxu0 0.0
        %1558 = vmatpush1.msra.mxu0 0.0
        %1559 = vmatprep.subr.mxu0 0.0
        %1560 = vmatpush1.msra.mxu0 0.0
        %1561 = vmatprep.subr.mxu0 0.0
        %1562 = vmatpush1.msra.mxu0 0.0
        %1563 = vmatprep.subr.mxu0 0.0
        %1564 = vmatpush1.msra.mxu0 0.0
        %1565 = vmatprep.subr.mxu0 0.0
        %1566 = vmatpush1.msra.mxu0 0.0
        %1567 = vmatprep.subr.mxu0 0.0
        %1568 = vmatpush1.msra.mxu0 0.0
        %1569 = vmatprep.subr.mxu0 0.0
        %1570 = vmatpush1.msra.mxu0 0.0
        %1571 = vmatprep.subr.mxu0 0.0
        %1572 = vmatpush1.msra.mxu0 0.0
        %1573 = vmatprep.subr.mxu0 0.0
        %1574 = vmatpush1.msra.mxu0 0.0
        %1575 = vmatprep.subr.mxu0 0.0
        %1576 = vmatpush1.msra.mxu0 %v1525
        %1577 = vmatprep.subr.mxu0 0.0
        %1578 = vmatpush1.msra.mxu0 %v1524
        %1579 = vmatprep.subr.mxu0 0.0
        %1580 = vmatpush2.msra.mxu0 0.0
        %1581 = vmatprep.subr.mxu0 0.0
        %1582 = vmatpush2.msra.mxu0 0.0
        %1583 = vmatprep.subr.mxu0 0.0
        %1584 = vmatpush2.msra.mxu0 0.0
        %1585 = vmatprep.subr.mxu0 0.0
        %1586 = vmatpush2.msra.mxu0 0.0
        %1587 = vmatprep.subr.mxu0 0.0
        %1588 = vmatpush2.msra.mxu0 0.0
        %1589 = vmatprep.subr.mxu0 0.0
        %1590 = vmatpush2.msra.mxu0 0.0
        %1591 = vmatprep.subr.mxu0 0.0
        %1592 = vmatpush2.msra.mxu0 0.0
        %1593 = vmatprep.subr.mxu0 0.0
        %1594 = vmatpush2.msra.mxu0 0.0
        %1595 = vmatprep.subr.mxu0 0.0
        %1596 = vmatpush2.msra.mxu0 0.0
        %1597 = vmatprep.subr.mxu0 0.0
        %1598 = vmatpush2.msra.mxu0 0.0
        %1599 = vmatprep.subr.mxu0 0.0
        %1600 = vmatpush2.msra.mxu0 0.0
        %1601 = vmatprep.subr.mxu0 0.0
        %1602 = vmatpush2.msra.mxu0 0.0
        %1603 = vmatprep.subr.mxu0 0.0
        %1604 = vmatpush2.msra.mxu0 0.0
        %1605 = vmatprep.subr.mxu0 0.0
        %1606 = vmatpush2.msra.mxu0 0.0
        %1607 = vmatprep.subr.mxu0 0.0
        %1608 = vmatpush2.msra.mxu0 0.0
        %1609 = vmatprep.subr.mxu0 0.0
        %1610 = vmatpush2.msra.mxu0 0.0
        %1611 = vmatprep.mubr.f32.mxu0 0.0
        %1612 = vmatmul.mubr.f32.gmra.mxu0 %v1539
        %v1613 = vpop.f32.mrf.mxu0
        %v1614 = vadd.f32 0.0, %v1613
        %v1615 = vpop.f32.mrf.mxu0
        %1616 = vmatprep.mubr.f32.mxu0 0.0
        %1617 = vmatmul.mubr.f32.gmra.mxu0 %v1541
        %v1618 = vpop.f32.mrf.mxu0
        %v1619 = vadd.f32 0.0, %v1618
        %v1620 = vpop.f32.mrf.mxu0
        %1621 = vmatprep.mubr.f32.mxu0 0.0
        %1622 = vmatmul.mubr.f32.gmra.mxu0 %v1543
        %v1623 = vpop.f32.mrf.mxu0
        %v1624 = vadd.f32 0.0, %v1623
        %v1625 = vpop.f32.mrf.mxu0
        %1626 = vmatprep.mubr.f32.mxu0 0.0
        %1627 = vmatmul.mubr.f32.gmra.mxu0 %v1545
        %v1628 = vpop.f32.mrf.mxu0
        %v1629 = vadd.f32 0.0, %v1628
        %v1630 = vpop.f32.mrf.mxu0
        %1631 = vdwg.mxu0
        %v1633 = vsel %vm1538, %v1486, 0
        %v1636 = vsel %vm1538, %v1487, 0
        %v1639 = vsel %vm1538, %v1488, 0
        %v1642 = vsel %vm1538, %v1489, 0
        %1644 = vmatprep.subr.mxu0 0.0
        %1645 = vmatpush1.msra.mxu0 0.0
        %1646 = vmatprep.subr.mxu0 0.0
        %1647 = vmatpush1.msra.mxu0 0.0
        %1648 = vmatprep.subr.mxu0 0.0
        %1649 = vmatpush1.msra.mxu0 0.0
        %1650 = vmatprep.subr.mxu0 0.0
        %1651 = vmatpush1.msra.mxu0 0.0
        %1652 = vmatprep.subr.mxu0 0.0
        %1653 = vmatpush1.msra.mxu0 0.0
        %1654 = vmatprep.subr.mxu0 0.0
        %1655 = vmatpush1.msra.mxu0 0.0
        %1656 = vmatprep.subr.mxu0 0.0
        %1657 = vmatpush1.msra.mxu0 0.0
        %1658 = vmatprep.subr.mxu0 0.0
        %1659 = vmatpush1.msra.mxu0 0.0
        %1660 = vmatprep.subr.mxu0 0.0
        %1661 = vmatpush1.msra.mxu0 0.0
        %1662 = vmatprep.subr.mxu0 0.0
        %1663 = vmatpush1.msra.mxu0 0.0
        %1664 = vmatprep.subr.mxu0 0.0
        %1665 = vmatpush1.msra.mxu0 0.0
        %1666 = vmatprep.subr.mxu0 0.0
        %1667 = vmatpush1.msra.mxu0 0.0
        %1668 = vmatprep.subr.mxu0 0.0
        %1669 = vmatpush1.msra.mxu0 0.0
        %1670 = vmatprep.subr.mxu0 0.0
        %1671 = vmatpush1.msra.mxu0 0.0
        %1672 = vmatprep.subr.mxu0 0.0
        %1673 = vmatpush1.msra.mxu0 %v1523
        %1674 = vmatprep.subr.mxu0 0.0
        %1675 = vmatpush1.msra.mxu0 %v1522
        %1676 = vmatprep.subr.mxu0 0.0
        %1677 = vmatpush2.msra.mxu0 0.0
        %1678 = vmatprep.subr.mxu0 0.0
        %1679 = vmatpush2.msra.mxu0 0.0
        %1680 = vmatprep.subr.mxu0 0.0
        %1681 = vmatpush2.msra.mxu0 0.0
        %1682 = vmatprep.subr.mxu0 0.0
        %1683 = vmatpush2.msra.mxu0 0.0
        %1684 = vmatprep.subr.mxu0 0.0
        %1685 = vmatpush2.msra.mxu0 0.0
        %1686 = vmatprep.subr.mxu0 0.0
        %1687 = vmatpush2.msra.mxu0 0.0
        %1688 = vmatprep.subr.mxu0 0.0
        %1689 = vmatpush2.msra.mxu0 0.0
        %1690 = vmatprep.subr.mxu0 0.0
        %1691 = vmatpush2.msra.mxu0 0.0
        %1692 = vmatprep.subr.mxu0 0.0
        %1693 = vmatpush2.msra.mxu0 0.0
        %1694 = vmatprep.subr.mxu0 0.0
        %1695 = vmatpush2.msra.mxu0 0.0
        %1696 = vmatprep.subr.mxu0 0.0
        %1697 = vmatpush2.msra.mxu0 0.0
        %1698 = vmatprep.subr.mxu0 0.0
        %1699 = vmatpush2.msra.mxu0 0.0
        %1700 = vmatprep.subr.mxu0 0.0
        %1701 = vmatpush2.msra.mxu0 0.0
        %1702 = vmatprep.subr.mxu0 0.0
        %1703 = vmatpush2.msra.mxu0 0.0
        %1704 = vmatprep.subr.mxu0 0.0
        %1705 = vmatpush2.msra.mxu0 0.0
        %1706 = vmatprep.subr.mxu0 0.0
        %1707 = vmatpush2.msra.mxu0 0.0
        %1708 = vmatprep.mubr.f32.mxu0 0.0
        %1709 = vmatmul.mubr.f32.gmra.mxu0 %v1633
        %v1710 = vpop.f32.mrf.mxu0
        %v1711 = vadd.f32 %v1614, %v1710
        %v1712 = vpop.f32.mrf.mxu0
        %1713 = vmatprep.mubr.f32.mxu0 0.0
        %1714 = vmatmul.mubr.f32.gmra.mxu0 %v1636
        %v1715 = vpop.f32.mrf.mxu0
        %v1716 = vadd.f32 %v1619, %v1715
        %v1717 = vpop.f32.mrf.mxu0
        %1718 = vmatprep.mubr.f32.mxu0 0.0
        %1719 = vmatmul.mubr.f32.gmra.mxu0 %v1639
        %v1720 = vpop.f32.mrf.mxu0
        %v1721 = vadd.f32 %v1624, %v1720
        %v1722 = vpop.f32.mrf.mxu0
        %1723 = vmatprep.mubr.f32.mxu0 0.0
        %1724 = vmatmul.mubr.f32.gmra.mxu0 %v1642
        %v1725 = vpop.f32.mrf.mxu0
        %v1726 = vadd.f32 %v1629, %v1725
        %v1727 = vpop.f32.mrf.mxu0
        %1728 = vdwg.mxu0
        %v1729 = vld [vmem:[%s998] sm:$0x3]
        %v1730 = vld [vmem:[%s998 + $0x2] sm:$0x3]
        %v1731 = vld [vmem:[%s998 + $0x4] sm:$0x3]
        %v1732 = vld [vmem:[%s998 + $0x6] sm:$0x3]
        %v1733 = vsel %vm1167, %v1134, 0
        %v1736 = vsel %vm1167, %v1729, 0
        %1738 = vmatprep.subr.mxu0 0.0
        %1739 = vmatpush1.xpose.msra.mxu0 0.0
        %1740 = vmatprep.subr.mxu0 0.0
        %1741 = vmatpush1.xpose.msra.mxu0 0.0
        %1742 = vmatprep.subr.mxu0 0.0
        %1743 = vmatpush1.xpose.msra.mxu0 0.0
        %1744 = vmatprep.subr.mxu0 0.0
        %1745 = vmatpush1.xpose.msra.mxu0 0.0
        %1746 = vmatprep.subr.mxu0 0.0
        %1747 = vmatpush1.xpose.msra.mxu0 0.0
        %1748 = vmatprep.subr.mxu0 0.0
        %1749 = vmatpush1.xpose.msra.mxu0 0.0
        %1750 = vmatprep.subr.mxu0 0.0
        %1751 = vmatpush1.xpose.msra.mxu0 0.0
        %1752 = vmatprep.subr.mxu0 0.0
        %1753 = vmatpush1.xpose.msra.mxu0 0.0
        %1754 = vmatprep.subr.mxu0 0.0
        %1755 = vmatpush1.xpose.msra.mxu0 0.0
        %1756 = vmatprep.subr.mxu0 0.0
        %1757 = vmatpush1.xpose.msra.mxu0 0.0
        %1758 = vmatprep.subr.mxu0 0.0
        %1759 = vmatpush1.xpose.msra.mxu0 0.0
        %1760 = vmatprep.subr.mxu0 0.0
        %1761 = vmatpush1.xpose.msra.mxu0 0.0
        %1762 = vmatprep.subr.mxu0 0.0
        %1763 = vmatpush1.xpose.msra.mxu0 0.0
        %1764 = vmatprep.subr.mxu0 0.0
        %1765 = vmatpush1.xpose.msra.mxu0 0.0
        %1766 = vmatprep.subr.mxu0 0.0
        %1767 = vmatpush1.xpose.msra.mxu0 0.0
        %1768 = vmatprep.subr.mxu0 0.0
        %1769 = vmatpush1.xpose.msra.mxu0 %v1736
        %1770 = vmatprep.subr.mxu0 0.0
        %1771 = vmatpush2.xpose.msra.mxu0 0.0
        %1772 = vmatprep.subr.mxu0 0.0
        %1773 = vmatpush2.xpose.msra.mxu0 0.0
        %1774 = vmatprep.subr.mxu0 0.0
        %1775 = vmatpush2.xpose.msra.mxu0 0.0
        %1776 = vmatprep.subr.mxu0 0.0
        %1777 = vmatpush2.xpose.msra.mxu0 0.0
        %1778 = vmatprep.subr.mxu0 0.0
        %1779 = vmatpush2.xpose.msra.mxu0 0.0
        %1780 = vmatprep.subr.mxu0 0.0
        %1781 = vmatpush2.xpose.msra.mxu0 0.0
        %1782 = vmatprep.subr.mxu0 0.0
        %1783 = vmatpush2.xpose.msra.mxu0 0.0
        %1784 = vmatprep.subr.mxu0 0.0
        %1785 = vmatpush2.xpose.msra.mxu0 0.0
        %1786 = vmatprep.subr.mxu0 0.0
        %1787 = vmatpush2.xpose.msra.mxu0 0.0
        %1788 = vmatprep.subr.mxu0 0.0
        %1789 = vmatpush2.xpose.msra.mxu0 0.0
        %1790 = vmatprep.subr.mxu0 0.0
        %1791 = vmatpush2.xpose.msra.mxu0 0.0
        %1792 = vmatprep.subr.mxu0 0.0
        %1793 = vmatpush2.xpose.msra.mxu0 0.0
        %1794 = vmatprep.subr.mxu0 0.0
        %1795 = vmatpush2.xpose.msra.mxu0 0.0
        %1796 = vmatprep.subr.mxu0 0.0
        %1797 = vmatpush2.xpose.msra.mxu0 0.0
        %1798 = vmatprep.subr.mxu0 0.0
        %1799 = vmatpush2.xpose.msra.mxu0 0.0
        %1800 = vmatprep.subr.mxu0 0.0
        %1801 = vmatpush2.xpose.msra.mxu0 0.0
        %1802 = vmatprep.mubr.f32.mxu0 0.0
        %1803 = vmatmul.mubr.f32.gmra.mxu0 %v1733
        %v1804 = vpop.f32.mrf.mxu0
        %v1805 = vadd.f32 0.0, %v1804
        %v1806 = vpop.f32.mrf.mxu0
        %1807 = vdwg.mxu0
        %v1808 = vsel %vm1167, %v1151, 0
        %v1811 = vsel %vm1167, %v1730, 0
        %1813 = vmatprep.subr.mxu0 0.0
        %1814 = vmatpush1.xpose.msra.mxu0 0.0
        %1815 = vmatprep.subr.mxu0 0.0
        %1816 = vmatpush1.xpose.msra.mxu0 0.0
        %1817 = vmatprep.subr.mxu0 0.0
        %1818 = vmatpush1.xpose.msra.mxu0 0.0
        %1819 = vmatprep.subr.mxu0 0.0
        %1820 = vmatpush1.xpose.msra.mxu0 0.0
        %1821 = vmatprep.subr.mxu0 0.0
        %1822 = vmatpush1.xpose.msra.mxu0 0.0
        %1823 = vmatprep.subr.mxu0 0.0
        %1824 = vmatpush1.xpose.msra.mxu0 0.0
        %1825 = vmatprep.subr.mxu0 0.0
        %1826 = vmatpush1.xpose.msra.mxu0 0.0
        %1827 = vmatprep.subr.mxu0 0.0
        %1828 = vmatpush1.xpose.msra.mxu0 0.0
        %1829 = vmatprep.subr.mxu0 0.0
        %1830 = vmatpush1.xpose.msra.mxu0 0.0
        %1831 = vmatprep.subr.mxu0 0.0
        %1832 = vmatpush1.xpose.msra.mxu0 0.0
        %1833 = vmatprep.subr.mxu0 0.0
        %1834 = vmatpush1.xpose.msra.mxu0 0.0
        %1835 = vmatprep.subr.mxu0 0.0
        %1836 = vmatpush1.xpose.msra.mxu0 0.0
        %1837 = vmatprep.subr.mxu0 0.0
        %1838 = vmatpush1.xpose.msra.mxu0 0.0
        %1839 = vmatprep.subr.mxu0 0.0
        %1840 = vmatpush1.xpose.msra.mxu0 0.0
        %1841 = vmatprep.subr.mxu0 0.0
        %1842 = vmatpush1.xpose.msra.mxu0 0.0
        %1843 = vmatprep.subr.mxu0 0.0
        %1844 = vmatpush1.xpose.msra.mxu0 %v1811
        %1845 = vmatprep.subr.mxu0 0.0
        %1846 = vmatpush2.xpose.msra.mxu0 0.0
        %1847 = vmatprep.subr.mxu0 0.0
        %1848 = vmatpush2.xpose.msra.mxu0 0.0
        %1849 = vmatprep.subr.mxu0 0.0
        %1850 = vmatpush2.xpose.msra.mxu0 0.0
        %1851 = vmatprep.subr.mxu0 0.0
        %1852 = vmatpush2.xpose.msra.mxu0 0.0
        %1853 = vmatprep.subr.mxu0 0.0
        %1854 = vmatpush2.xpose.msra.mxu0 0.0
        %1855 = vmatprep.subr.mxu0 0.0
        %1856 = vmatpush2.xpose.msra.mxu0 0.0
        %1857 = vmatprep.subr.mxu0 0.0
        %1858 = vmatpush2.xpose.msra.mxu0 0.0
        %1859 = vmatprep.subr.mxu0 0.0
        %1860 = vmatpush2.xpose.msra.mxu0 0.0
        %1861 = vmatprep.subr.mxu0 0.0
        %1862 = vmatpush2.xpose.msra.mxu0 0.0
        %1863 = vmatprep.subr.mxu0 0.0
        %1864 = vmatpush2.xpose.msra.mxu0 0.0
        %1865 = vmatprep.subr.mxu0 0.0
        %1866 = vmatpush2.xpose.msra.mxu0 0.0
        %1867 = vmatprep.subr.mxu0 0.0
        %1868 = vmatpush2.xpose.msra.mxu0 0.0
        %1869 = vmatprep.subr.mxu0 0.0
        %1870 = vmatpush2.xpose.msra.mxu0 0.0
        %1871 = vmatprep.subr.mxu0 0.0
        %1872 = vmatpush2.xpose.msra.mxu0 0.0
        %1873 = vmatprep.subr.mxu0 0.0
        %1874 = vmatpush2.xpose.msra.mxu0 0.0
        %1875 = vmatprep.subr.mxu0 0.0
        %1876 = vmatpush2.xpose.msra.mxu0 0.0
        %1877 = vmatprep.mubr.f32.mxu0 0.0
        %1878 = vmatmul.mubr.f32.gmra.mxu0 %v1808
        %v1879 = vpop.f32.mrf.mxu0
        %v1880 = vadd.f32 0.0, %v1879
        %v1881 = vpop.f32.mrf.mxu0
        %1882 = vdwg.mxu0
        %v1883 = vsel %vm1167, %v1153, 0
        %v1886 = vsel %vm1167, %v1731, 0
        %1888 = vmatprep.subr.mxu0 0.0
        %1889 = vmatpush1.xpose.msra.mxu0 0.0
        %1890 = vmatprep.subr.mxu0 0.0
        %1891 = vmatpush1.xpose.msra.mxu0 0.0
        %1892 = vmatprep.subr.mxu0 0.0
        %1893 = vmatpush1.xpose.msra.mxu0 0.0
        %1894 = vmatprep.subr.mxu0 0.0
        %1895 = vmatpush1.xpose.msra.mxu0 0.0
        %1896 = vmatprep.subr.mxu0 0.0
        %1897 = vmatpush1.xpose.msra.mxu0 0.0
        %1898 = vmatprep.subr.mxu0 0.0
        %1899 = vmatpush1.xpose.msra.mxu0 0.0
        %1900 = vmatprep.subr.mxu0 0.0
        %1901 = vmatpush1.xpose.msra.mxu0 0.0
        %1902 = vmatprep.subr.mxu0 0.0
        %1903 = vmatpush1.xpose.msra.mxu0 0.0
        %1904 = vmatprep.subr.mxu0 0.0
        %1905 = vmatpush1.xpose.msra.mxu0 0.0
        %1906 = vmatprep.subr.mxu0 0.0
        %1907 = vmatpush1.xpose.msra.mxu0 0.0
        %1908 = vmatprep.subr.mxu0 0.0
        %1909 = vmatpush1.xpose.msra.mxu0 0.0
        %1910 = vmatprep.subr.mxu0 0.0
        %1911 = vmatpush1.xpose.msra.mxu0 0.0
        %1912 = vmatprep.subr.mxu0 0.0
        %1913 = vmatpush1.xpose.msra.mxu0 0.0
        %1914 = vmatprep.subr.mxu0 0.0
        %1915 = vmatpush1.xpose.msra.mxu0 0.0
        %1916 = vmatprep.subr.mxu0 0.0
        %1917 = vmatpush1.xpose.msra.mxu0 0.0
        %1918 = vmatprep.subr.mxu0 0.0
        %1919 = vmatpush1.xpose.msra.mxu0 %v1886
        %1920 = vmatprep.subr.mxu0 0.0
        %1921 = vmatpush2.xpose.msra.mxu0 0.0
        %1922 = vmatprep.subr.mxu0 0.0
        %1923 = vmatpush2.xpose.msra.mxu0 0.0
        %1924 = vmatprep.subr.mxu0 0.0
        %1925 = vmatpush2.xpose.msra.mxu0 0.0
        %1926 = vmatprep.subr.mxu0 0.0
        %1927 = vmatpush2.xpose.msra.mxu0 0.0
        %1928 = vmatprep.subr.mxu0 0.0
        %1929 = vmatpush2.xpose.msra.mxu0 0.0
        %1930 = vmatprep.subr.mxu0 0.0
        %1931 = vmatpush2.xpose.msra.mxu0 0.0
        %1932 = vmatprep.subr.mxu0 0.0
        %1933 = vmatpush2.xpose.msra.mxu0 0.0
        %1934 = vmatprep.subr.mxu0 0.0
        %1935 = vmatpush2.xpose.msra.mxu0 0.0
        %1936 = vmatprep.subr.mxu0 0.0
        %1937 = vmatpush2.xpose.msra.mxu0 0.0
        %1938 = vmatprep.subr.mxu0 0.0
        %1939 = vmatpush2.xpose.msra.mxu0 0.0
        %1940 = vmatprep.subr.mxu0 0.0
        %1941 = vmatpush2.xpose.msra.mxu0 0.0
        %1942 = vmatprep.subr.mxu0 0.0
        %1943 = vmatpush2.xpose.msra.mxu0 0.0
        %1944 = vmatprep.subr.mxu0 0.0
        %1945 = vmatpush2.xpose.msra.mxu0 0.0
        %1946 = vmatprep.subr.mxu0 0.0
        %1947 = vmatpush2.xpose.msra.mxu0 0.0
        %1948 = vmatprep.subr.mxu0 0.0
        %1949 = vmatpush2.xpose.msra.mxu0 0.0
        %1950 = vmatprep.subr.mxu0 0.0
        %1951 = vmatpush2.xpose.msra.mxu0 0.0
        %1952 = vmatprep.mubr.f32.mxu0 0.0
        %1953 = vmatmul.mubr.f32.gmra.mxu0 %v1883
        %v1954 = vpop.f32.mrf.mxu0
        %v1955 = vadd.f32 0.0, %v1954
        %v1956 = vpop.f32.mrf.mxu0
        %1957 = vdwg.mxu0
        %v1958 = vsel %vm1167, %v1155, 0
        %v1961 = vsel %vm1167, %v1732, 0
        %1963 = vmatprep.subr.mxu0 0.0
        %1964 = vmatpush1.xpose.msra.mxu0 0.0
        %1965 = vmatprep.subr.mxu0 0.0
        %1966 = vmatpush1.xpose.msra.mxu0 0.0
        %1967 = vmatprep.subr.mxu0 0.0
        %1968 = vmatpush1.xpose.msra.mxu0 0.0
        %1969 = vmatprep.subr.mxu0 0.0
        %1970 = vmatpush1.xpose.msra.mxu0 0.0
        %1971 = vmatprep.subr.mxu0 0.0
        %1972 = vmatpush1.xpose.msra.mxu0 0.0
        %1973 = vmatprep.subr.mxu0 0.0
        %1974 = vmatpush1.xpose.msra.mxu0 0.0
        %1975 = vmatprep.subr.mxu0 0.0
        %1976 = vmatpush1.xpose.msra.mxu0 0.0
        %1977 = vmatprep.subr.mxu0 0.0
        %1978 = vmatpush1.xpose.msra.mxu0 0.0
        %1979 = vmatprep.subr.mxu0 0.0
        %1980 = vmatpush1.xpose.msra.mxu0 0.0
        %1981 = vmatprep.subr.mxu0 0.0
        %1982 = vmatpush1.xpose.msra.mxu0 0.0
        %1983 = vmatprep.subr.mxu0 0.0
        %1984 = vmatpush1.xpose.msra.mxu0 0.0
        %1985 = vmatprep.subr.mxu0 0.0
        %1986 = vmatpush1.xpose.msra.mxu0 0.0
        %1987 = vmatprep.subr.mxu0 0.0
        %1988 = vmatpush1.xpose.msra.mxu0 0.0
        %1989 = vmatprep.subr.mxu0 0.0
        %1990 = vmatpush1.xpose.msra.mxu0 0.0
        %1991 = vmatprep.subr.mxu0 0.0
        %1992 = vmatpush1.xpose.msra.mxu0 0.0
        %1993 = vmatprep.subr.mxu0 0.0
        %1994 = vmatpush1.xpose.msra.mxu0 %v1961
        %1995 = vmatprep.subr.mxu0 0.0
        %1996 = vmatpush2.xpose.msra.mxu0 0.0
        %1997 = vmatprep.subr.mxu0 0.0
        %1998 = vmatpush2.xpose.msra.mxu0 0.0
        %1999 = vmatprep.subr.mxu0 0.0
        %2000 = vmatpush2.xpose.msra.mxu0 0.0
        %2001 = vmatprep.subr.mxu0 0.0
        %2002 = vmatpush2.xpose.msra.mxu0 0.0
        %2003 = vmatprep.subr.mxu0 0.0
        %2004 = vmatpush2.xpose.msra.mxu0 0.0
        %2005 = vmatprep.subr.mxu0 0.0
        %2006 = vmatpush2.xpose.msra.mxu0 0.0
        %2007 = vmatprep.subr.mxu0 0.0
        %2008 = vmatpush2.xpose.msra.mxu0 0.0
        %2009 = vmatprep.subr.mxu0 0.0
        %2010 = vmatpush2.xpose.msra.mxu0 0.0
        %2011 = vmatprep.subr.mxu0 0.0
        %2012 = vmatpush2.xpose.msra.mxu0 0.0
        %2013 = vmatprep.subr.mxu0 0.0
        %2014 = vmatpush2.xpose.msra.mxu0 0.0
        %2015 = vmatprep.subr.mxu0 0.0
        %2016 = vmatpush2.xpose.msra.mxu0 0.0
        %2017 = vmatprep.subr.mxu0 0.0
        %2018 = vmatpush2.xpose.msra.mxu0 0.0
        %2019 = vmatprep.subr.mxu0 0.0
        %2020 = vmatpush2.xpose.msra.mxu0 0.0
        %2021 = vmatprep.subr.mxu0 0.0
        %2022 = vmatpush2.xpose.msra.mxu0 0.0
        %2023 = vmatprep.subr.mxu0 0.0
        %2024 = vmatpush2.xpose.msra.mxu0 0.0
        %2025 = vmatprep.subr.mxu0 0.0
        %2026 = vmatpush2.xpose.msra.mxu0 0.0
        %2027 = vmatprep.mubr.f32.mxu0 0.0
        %2028 = vmatmul.mubr.f32.gmra.mxu0 %v1958
        %v2029 = vpop.f32.mrf.mxu0
        %v2030 = vadd.f32 0.0, %v2029
        %v2031 = vpop.f32.mrf.mxu0
        %2032 = vdwg.mxu0
        %v2033 = vld [vmem:[%s976] sm:$0xff]
        %v2034 = vld [vmem:[%s979] sm:$0x1]
        %2036 = vset.pattern.permute.xlu0 0
        %2037 = vperm.xlu0 %2036, %v2033
        %v2038 = vpop.permute.xlu0 %2037
        %v2041 = vlaneseq
        %v2042 = vshrl.u32 %v2041, 7
        %v2043 = vsub.s32 0, %v2042
        %v2044 = vrot.slane %v2034, %v2043
        %vm2046 = vcmp.ne.f32.partialorder %v2038, %v2044
        %v2047 = vsel %vm2046, 1, 0
        %v2048 = vcvt.s32.f32 %v2047
        %2053 = vrot.lane.b32.xlu0 %v1805, 1
        %v2054 = vpop.permute.xlu0 %2053
        %2055 = vrot.lane.b32.xlu0 %v1880, 1
        %v2056 = vpop.permute.xlu0 %2055
        %2057 = vrot.lane.b32.xlu0 %v1955, 1
        %v2058 = vpop.permute.xlu0 %2057
        %2059 = vrot.lane.b32.xlu0 %v2030, 1
        %v2060 = vpop.permute.xlu0 %2059
        %v2065 = vsub.f32 %v1805, %v2054
        %v2066 = vsub.f32 %v1880, %v2056
        %v2067 = vsub.f32 %v1955, %v2058
        %v2068 = vsub.f32 %v2030, %v2060
        %2070 = vset.pattern.permute.xlu0 1
        %2071 = vperm.xlu0 %2070, %v2065
        %v2072 = vpop.permute.xlu0 %2071
        %2075 = vset.pattern.permute.xlu0 1
        %2076 = vperm.xlu0 %2075, %v2066
        %v2077 = vpop.permute.xlu0 %2076
        %2080 = vset.pattern.permute.xlu0 1
        %2081 = vperm.xlu0 %2080, %v2067
        %v2082 = vpop.permute.xlu0 %2081
        %2085 = vset.pattern.permute.xlu0 1
        %2086 = vperm.xlu0 %2085, %v2068
        %v2087 = vpop.permute.xlu0 %2086
        %v2089 = vmul.f32 %v2072, %v2048
        %v2090 = vmul.f32 %v2077, %v2048
        %v2091 = vmul.f32 %v2082, %v2048
        %v2092 = vmul.f32 %v2087, %v2048
        %2093 = vset.pattern.permute.xlu0 0
        %2094 = vperm.xlu0 %2093, %v1805
        %v2095 = vpop.permute.xlu0 %2094
        %2097 = vset.pattern.permute.xlu0 0
        %2098 = vperm.xlu0 %2097, %v1880
        %v2099 = vpop.permute.xlu0 %2098
        %2101 = vset.pattern.permute.xlu0 0
        %2102 = vperm.xlu0 %2101, %v1955
        %v2103 = vpop.permute.xlu0 %2102
        %2105 = vset.pattern.permute.xlu0 0
        %2106 = vperm.xlu0 %2105, %v2030
        %v2107 = vpop.permute.xlu0 %2106
        %v2109 = vadd.f32 %v2095, %v2089
        %v2110 = vadd.f32 %v2099, %v2090
        %v2111 = vadd.f32 %v2103, %v2091
        %v2112 = vadd.f32 %v2107, %v2092
        %2113 = vrot.lane.b32.xlu0 %v1113, 96
        %v2114 = vpop.permute.xlu0 %2113
        %v2115 = vsel %vm1167, %v1122, 0
        %v2117 = vsel %vm1167, %v2114, 0
        %2119 = vmatprep.subr.mxu0 0.0
        %2120 = vmatpush1.xpose.msra.mxu0 0.0
        %2121 = vmatprep.subr.mxu0 0.0
        %2122 = vmatpush1.xpose.msra.mxu0 0.0
        %2123 = vmatprep.subr.mxu0 0.0
        %2124 = vmatpush1.xpose.msra.mxu0 0.0
        %2125 = vmatprep.subr.mxu0 0.0
        %2126 = vmatpush1.xpose.msra.mxu0 0.0
        %2127 = vmatprep.subr.mxu0 0.0
        %2128 = vmatpush1.xpose.msra.mxu0 0.0
        %2129 = vmatprep.subr.mxu0 0.0
        %2130 = vmatpush1.xpose.msra.mxu0 0.0
        %2131 = vmatprep.subr.mxu0 0.0
        %2132 = vmatpush1.xpose.msra.mxu0 0.0
        %2133 = vmatprep.subr.mxu0 0.0
        %2134 = vmatpush1.xpose.msra.mxu0 0.0
        %2135 = vmatprep.subr.mxu0 0.0
        %2136 = vmatpush1.xpose.msra.mxu0 0.0
        %2137 = vmatprep.subr.mxu0 0.0
        %2138 = vmatpush1.xpose.msra.mxu0 0.0
        %2139 = vmatprep.subr.mxu0 0.0
        %2140 = vmatpush1.xpose.msra.mxu0 0.0
        %2141 = vmatprep.subr.mxu0 0.0
        %2142 = vmatpush1.xpose.msra.mxu0 0.0
        %2143 = vmatprep.subr.mxu0 0.0
        %2144 = vmatpush1.xpose.msra.mxu0 0.0
        %2145 = vmatprep.subr.mxu0 0.0
        %2146 = vmatpush1.xpose.msra.mxu0 0.0
        %2147 = vmatprep.subr.mxu0 0.0
        %2148 = vmatpush1.xpose.msra.mxu0 0.0
        %2149 = vmatprep.subr.mxu0 0.0
        %2150 = vmatpush1.xpose.msra.mxu0 %v2117
        %2151 = vmatprep.subr.mxu0 0.0
        %2152 = vmatpush2.xpose.msra.mxu0 0.0
        %2153 = vmatprep.subr.mxu0 0.0
        %2154 = vmatpush2.xpose.msra.mxu0 0.0
        %2155 = vmatprep.subr.mxu0 0.0
        %2156 = vmatpush2.xpose.msra.mxu0 0.0
        %2157 = vmatprep.subr.mxu0 0.0
        %2158 = vmatpush2.xpose.msra.mxu0 0.0
        %2159 = vmatprep.subr.mxu0 0.0
        %2160 = vmatpush2.xpose.msra.mxu0 0.0
        %2161 = vmatprep.subr.mxu0 0.0
        %2162 = vmatpush2.xpose.msra.mxu0 0.0
        %2163 = vmatprep.subr.mxu0 0.0
        %2164 = vmatpush2.xpose.msra.mxu0 0.0
        %2165 = vmatprep.subr.mxu0 0.0
        %2166 = vmatpush2.xpose.msra.mxu0 0.0
        %2167 = vmatprep.subr.mxu0 0.0
        %2168 = vmatpush2.xpose.msra.mxu0 0.0
        %2169 = vmatprep.subr.mxu0 0.0
        %2170 = vmatpush2.xpose.msra.mxu0 0.0
        %2171 = vmatprep.subr.mxu0 0.0
        %2172 = vmatpush2.xpose.msra.mxu0 0.0
        %2173 = vmatprep.subr.mxu0 0.0
        %2174 = vmatpush2.xpose.msra.mxu0 0.0
        %2175 = vmatprep.subr.mxu0 0.0
        %2176 = vmatpush2.xpose.msra.mxu0 0.0
        %2177 = vmatprep.subr.mxu0 0.0
        %2178 = vmatpush2.xpose.msra.mxu0 0.0
        %2179 = vmatprep.subr.mxu0 0.0
        %2180 = vmatpush2.xpose.msra.mxu0 0.0
        %2181 = vmatprep.subr.mxu0 0.0
        %2182 = vmatpush2.xpose.msra.mxu0 0.0
        %2183 = vmatprep.mubr.f32.mxu0 0.0
        %2184 = vmatmul.mubr.f32.gmra.mxu0 %v2115
        %v2185 = vpop.f32.mrf.mxu0
        %v2186 = vadd.f32 %v1711, %v2185
        %v2187 = vpop.f32.mrf.mxu0
        %2188 = vdwg.mxu0
        %2189 = vrot.lane.b32.xlu0 %v1158, 96
        %v2190 = vpop.permute.xlu0 %2189
        %v2191 = vsel %vm1167, %v1137, 0
        %v2193 = vsel %vm1167, %v2190, 0
        %2195 = vmatprep.subr.mxu0 0.0
        %2196 = vmatpush1.xpose.msra.mxu0 0.0
        %2197 = vmatprep.subr.mxu0 0.0
        %2198 = vmatpush1.xpose.msra.mxu0 0.0
        %2199 = vmatprep.subr.mxu0 0.0
        %2200 = vmatpush1.xpose.msra.mxu0 0.0
        %2201 = vmatprep.subr.mxu0 0.0
        %2202 = vmatpush1.xpose.msra.mxu0 0.0
        %2203 = vmatprep.subr.mxu0 0.0
        %2204 = vmatpush1.xpose.msra.mxu0 0.0
        %2205 = vmatprep.subr.mxu0 0.0
        %2206 = vmatpush1.xpose.msra.mxu0 0.0
        %2207 = vmatprep.subr.mxu0 0.0
        %2208 = vmatpush1.xpose.msra.mxu0 0.0
        %2209 = vmatprep.subr.mxu0 0.0
        %2210 = vmatpush1.xpose.msra.mxu0 0.0
        %2211 = vmatprep.subr.mxu0 0.0
        %2212 = vmatpush1.xpose.msra.mxu0 0.0
        %2213 = vmatprep.subr.mxu0 0.0
        %2214 = vmatpush1.xpose.msra.mxu0 0.0
        %2215 = vmatprep.subr.mxu0 0.0
        %2216 = vmatpush1.xpose.msra.mxu0 0.0
        %2217 = vmatprep.subr.mxu0 0.0
        %2218 = vmatpush1.xpose.msra.mxu0 0.0
        %2219 = vmatprep.subr.mxu0 0.0
        %2220 = vmatpush1.xpose.msra.mxu0 0.0
        %2221 = vmatprep.subr.mxu0 0.0
        %2222 = vmatpush1.xpose.msra.mxu0 0.0
        %2223 = vmatprep.subr.mxu0 0.0
        %2224 = vmatpush1.xpose.msra.mxu0 0.0
        %2225 = vmatprep.subr.mxu0 0.0
        %2226 = vmatpush1.xpose.msra.mxu0 %v2193
        %2227 = vmatprep.subr.mxu0 0.0
        %2228 = vmatpush2.xpose.msra.mxu0 0.0
        %2229 = vmatprep.subr.mxu0 0.0
        %2230 = vmatpush2.xpose.msra.mxu0 0.0
        %2231 = vmatprep.subr.mxu0 0.0
        %2232 = vmatpush2.xpose.msra.mxu0 0.0
        %2233 = vmatprep.subr.mxu0 0.0
        %2234 = vmatpush2.xpose.msra.mxu0 0.0
        %2235 = vmatprep.subr.mxu0 0.0
        %2236 = vmatpush2.xpose.msra.mxu0 0.0
        %2237 = vmatprep.subr.mxu0 0.0
        %2238 = vmatpush2.xpose.msra.mxu0 0.0
        %2239 = vmatprep.subr.mxu0 0.0
        %2240 = vmatpush2.xpose.msra.mxu0 0.0
        %2241 = vmatprep.subr.mxu0 0.0
        %2242 = vmatpush2.xpose.msra.mxu0 0.0
        %2243 = vmatprep.subr.mxu0 0.0
        %2244 = vmatpush2.xpose.msra.mxu0 0.0
        %2245 = vmatprep.subr.mxu0 0.0
        %2246 = vmatpush2.xpose.msra.mxu0 0.0
        %2247 = vmatprep.subr.mxu0 0.0
        %2248 = vmatpush2.xpose.msra.mxu0 0.0
        %2249 = vmatprep.subr.mxu0 0.0
        %2250 = vmatpush2.xpose.msra.mxu0 0.0
        %2251 = vmatprep.subr.mxu0 0.0
        %2252 = vmatpush2.xpose.msra.mxu0 0.0
        %2253 = vmatprep.subr.mxu0 0.0
        %2254 = vmatpush2.xpose.msra.mxu0 0.0
        %2255 = vmatprep.subr.mxu0 0.0
        %2256 = vmatpush2.xpose.msra.mxu0 0.0
        %2257 = vmatprep.subr.mxu0 0.0
        %2258 = vmatpush2.xpose.msra.mxu0 0.0
        %2259 = vmatprep.mubr.f32.mxu0 0.0
        %2260 = vmatmul.mubr.f32.gmra.mxu0 %v2191
        %v2261 = vpop.f32.mrf.mxu0
        %v2262 = vadd.f32 %v1716, %v2261
        %v2263 = vpop.f32.mrf.mxu0
        %2264 = vdwg.mxu0
        %2265 = vrot.lane.b32.xlu0 %v1160, 96
        %v2266 = vpop.permute.xlu0 %2265
        %v2267 = vsel %vm1167, %v1139, 0
        %v2269 = vsel %vm1167, %v2266, 0
        %2271 = vmatprep.subr.mxu0 0.0
        %2272 = vmatpush1.xpose.msra.mxu0 0.0
        %2273 = vmatprep.subr.mxu0 0.0
        %2274 = vmatpush1.xpose.msra.mxu0 0.0
        %2275 = vmatprep.subr.mxu0 0.0
        %2276 = vmatpush1.xpose.msra.mxu0 0.0
        %2277 = vmatprep.subr.mxu0 0.0
        %2278 = vmatpush1.xpose.msra.mxu0 0.0
        %2279 = vmatprep.subr.mxu0 0.0
        %2280 = vmatpush1.xpose.msra.mxu0 0.0
        %2281 = vmatprep.subr.mxu0 0.0
        %2282 = vmatpush1.xpose.msra.mxu0 0.0
        %2283 = vmatprep.subr.mxu0 0.0
        %2284 = vmatpush1.xpose.msra.mxu0 0.0
        %2285 = vmatprep.subr.mxu0 0.0
        %2286 = vmatpush1.xpose.msra.mxu0 0.0
        %2287 = vmatprep.subr.mxu0 0.0
        %2288 = vmatpush1.xpose.msra.mxu0 0.0
        %2289 = vmatprep.subr.mxu0 0.0
        %2290 = vmatpush1.xpose.msra.mxu0 0.0
        %2291 = vmatprep.subr.mxu0 0.0
        %2292 = vmatpush1.xpose.msra.mxu0 0.0
        %2293 = vmatprep.subr.mxu0 0.0
        %2294 = vmatpush1.xpose.msra.mxu0 0.0
        %2295 = vmatprep.subr.mxu0 0.0
        %2296 = vmatpush1.xpose.msra.mxu0 0.0
        %2297 = vmatprep.subr.mxu0 0.0
        %2298 = vmatpush1.xpose.msra.mxu0 0.0
        %2299 = vmatprep.subr.mxu0 0.0
        %2300 = vmatpush1.xpose.msra.mxu0 0.0
        %2301 = vmatprep.subr.mxu0 0.0
        %2302 = vmatpush1.xpose.msra.mxu0 %v2269
        %2303 = vmatprep.subr.mxu0 0.0
        %2304 = vmatpush2.xpose.msra.mxu0 0.0
        %2305 = vmatprep.subr.mxu0 0.0
        %2306 = vmatpush2.xpose.msra.mxu0 0.0
        %2307 = vmatprep.subr.mxu0 0.0
        %2308 = vmatpush2.xpose.msra.mxu0 0.0
        %2309 = vmatprep.subr.mxu0 0.0
        %2310 = vmatpush2.xpose.msra.mxu0 0.0
        %2311 = vmatprep.subr.mxu0 0.0
        %2312 = vmatpush2.xpose.msra.mxu0 0.0
        %2313 = vmatprep.subr.mxu0 0.0
        %2314 = vmatpush2.xpose.msra.mxu0 0.0
        %2315 = vmatprep.subr.mxu0 0.0
        %2316 = vmatpush2.xpose.msra.mxu0 0.0
        %2317 = vmatprep.subr.mxu0 0.0
        %2318 = vmatpush2.xpose.msra.mxu0 0.0
        %2319 = vmatprep.subr.mxu0 0.0
        %2320 = vmatpush2.xpose.msra.mxu0 0.0
        %2321 = vmatprep.subr.mxu0 0.0
        %2322 = vmatpush2.xpose.msra.mxu0 0.0
        %2323 = vmatprep.subr.mxu0 0.0
        %2324 = vmatpush2.xpose.msra.mxu0 0.0
        %2325 = vmatprep.subr.mxu0 0.0
        %2326 = vmatpush2.xpose.msra.mxu0 0.0
        %2327 = vmatprep.subr.mxu0 0.0
        %2328 = vmatpush2.xpose.msra.mxu0 0.0
        %2329 = vmatprep.subr.mxu0 0.0
        %2330 = vmatpush2.xpose.msra.mxu0 0.0
        %2331 = vmatprep.subr.mxu0 0.0
        %2332 = vmatpush2.xpose.msra.mxu0 0.0
        %2333 = vmatprep.subr.mxu0 0.0
        %2334 = vmatpush2.xpose.msra.mxu0 0.0
        %2335 = vmatprep.mubr.f32.mxu0 0.0
        %2336 = vmatmul.mubr.f32.gmra.mxu0 %v2267
        %v2337 = vpop.f32.mrf.mxu0
        %v2338 = vadd.f32 %v1721, %v2337
        %v2339 = vpop.f32.mrf.mxu0
        %2340 = vdwg.mxu0
        %2341 = vrot.lane.b32.xlu0 %v1162, 96
        %v2342 = vpop.permute.xlu0 %2341
        %v2343 = vsel %vm1167, %v1141, 0
        %v2345 = vsel %vm1167, %v2342, 0
        %2347 = vmatprep.subr.mxu0 0.0
        %2348 = vmatpush1.xpose.msra.mxu0 0.0
        %2349 = vmatprep.subr.mxu0 0.0
        %2350 = vmatpush1.xpose.msra.mxu0 0.0
        %2351 = vmatprep.subr.mxu0 0.0
        %2352 = vmatpush1.xpose.msra.mxu0 0.0
        %2353 = vmatprep.subr.mxu0 0.0
        %2354 = vmatpush1.xpose.msra.mxu0 0.0
        %2355 = vmatprep.subr.mxu0 0.0
        %2356 = vmatpush1.xpose.msra.mxu0 0.0
        %2357 = vmatprep.subr.mxu0 0.0
        %2358 = vmatpush1.xpose.msra.mxu0 0.0
        %2359 = vmatprep.subr.mxu0 0.0
        %2360 = vmatpush1.xpose.msra.mxu0 0.0
        %2361 = vmatprep.subr.mxu0 0.0
        %2362 = vmatpush1.xpose.msra.mxu0 0.0
        %2363 = vmatprep.subr.mxu0 0.0
        %2364 = vmatpush1.xpose.msra.mxu0 0.0
        %2365 = vmatprep.subr.mxu0 0.0
        %2366 = vmatpush1.xpose.msra.mxu0 0.0
        %2367 = vmatprep.subr.mxu0 0.0
        %2368 = vmatpush1.xpose.msra.mxu0 0.0
        %2369 = vmatprep.subr.mxu0 0.0
        %2370 = vmatpush1.xpose.msra.mxu0 0.0
        %2371 = vmatprep.subr.mxu0 0.0
        %2372 = vmatpush1.xpose.msra.mxu0 0.0
        %2373 = vmatprep.subr.mxu0 0.0
        %2374 = vmatpush1.xpose.msra.mxu0 0.0
        %2375 = vmatprep.subr.mxu0 0.0
        %2376 = vmatpush1.xpose.msra.mxu0 0.0
        %2377 = vmatprep.subr.mxu0 0.0
        %2378 = vmatpush1.xpose.msra.mxu0 %v2345
        %2379 = vmatprep.subr.mxu0 0.0
        %2380 = vmatpush2.xpose.msra.mxu0 0.0
        %2381 = vmatprep.subr.mxu0 0.0
        %2382 = vmatpush2.xpose.msra.mxu0 0.0
        %2383 = vmatprep.subr.mxu0 0.0
        %2384 = vmatpush2.xpose.msra.mxu0 0.0
        %2385 = vmatprep.subr.mxu0 0.0
        %2386 = vmatpush2.xpose.msra.mxu0 0.0
        %2387 = vmatprep.subr.mxu0 0.0
        %2388 = vmatpush2.xpose.msra.mxu0 0.0
        %2389 = vmatprep.subr.mxu0 0.0
        %2390 = vmatpush2.xpose.msra.mxu0 0.0
        %2391 = vmatprep.subr.mxu0 0.0
        %2392 = vmatpush2.xpose.msra.mxu0 0.0
        %2393 = vmatprep.subr.mxu0 0.0
        %2394 = vmatpush2.xpose.msra.mxu0 0.0
        %2395 = vmatprep.subr.mxu0 0.0
        %2396 = vmatpush2.xpose.msra.mxu0 0.0
        %2397 = vmatprep.subr.mxu0 0.0
        %2398 = vmatpush2.xpose.msra.mxu0 0.0
        %2399 = vmatprep.subr.mxu0 0.0
        %2400 = vmatpush2.xpose.msra.mxu0 0.0
        %2401 = vmatprep.subr.mxu0 0.0
        %2402 = vmatpush2.xpose.msra.mxu0 0.0
        %2403 = vmatprep.subr.mxu0 0.0
        %2404 = vmatpush2.xpose.msra.mxu0 0.0
        %2405 = vmatprep.subr.mxu0 0.0
        %2406 = vmatpush2.xpose.msra.mxu0 0.0
        %2407 = vmatprep.subr.mxu0 0.0
        %2408 = vmatpush2.xpose.msra.mxu0 0.0
        %2409 = vmatprep.subr.mxu0 0.0
        %2410 = vmatpush2.xpose.msra.mxu0 0.0
        %2411 = vmatprep.mubr.f32.mxu0 0.0
        %2412 = vmatmul.mubr.f32.gmra.mxu0 %v2343
        %v2413 = vpop.f32.mrf.mxu0
        %v2414 = vadd.f32 %v1726, %v2413
        %v2415 = vpop.f32.mrf.mxu0
        %2416 = vdwg.mxu0
        %v2417 = vadd.f32 %v2186, %v2109
        %v2418 = vadd.f32 %v2262, %v2110
        %v2419 = vadd.f32 %v2338, %v2111
        %v2420 = vadd.f32 %v2414, %v2112
        %v2421 = vld [vmem:[%s972] sm:$0x1]
        %v2423 = vlaneseq
        %v2424 = vshrl.u32 %v2423, 7
        %v2425 = vsub.s32 0, %v2424
        %v2426 = vrot.slane %v2421, %v2425
        %v2428 = vadd.f32 %v2417, %v2426
        %v2429 = vadd.f32 %v2418, %v2426
        %v2430 = vadd.f32 %v2419, %v2426
        %v2431 = vadd.f32 %v2420, %v2426
        %v2432 = vsel %vm1167, %v2428, -inf
        %2433 = vmax.xlane.f32.xlu0 %v2432
        %v2434 = vpop.xlane.xlu0 %2433
        %v2435 = vsel %vm1167, %v2429, -inf
        %2436 = vmax.xlane.f32.xlu0 %v2435
        %v2437 = vpop.xlane.xlu0 %2436
        %v2438 = vsel %vm1167, %v2430, -inf
        %2439 = vmax.xlane.f32.xlu0 %v2438
        %v2440 = vpop.xlane.xlu0 %2439
        %v2441 = vsel %vm1167, %v2431, -inf
        %2442 = vmax.xlane.f32.xlu0 %v2441
        %v2443 = vpop.xlane.xlu0 %2442
        %v2444 = vsub.f32 %v2428, %v2434
        %v2445 = vsub.f32 %v2429, %v2437
        %v2446 = vsub.f32 %v2430, %v2440
        %v2447 = vsub.f32 %v2431, %v2443
        %v2448 = vmul.f32 %v2444, 1.442695
        %v2449 = vpow.pop %v2448
        %v2450 = vmul.f32 %v2445, 1.442695
        %v2451 = vpow.pop %v2450
        %v2452 = vmul.f32 %v2446, 1.442695
        %v2453 = vpow.pop %v2452
        %v2454 = vmul.f32 %v2447, 1.442695
        %v2455 = vpow.pop %v2454
        %v2456 = vsel %vm1167, %v2449, 0.0
        %2457 = vadd.xlane.f32.xlu0 %v2456
        %v2458 = vpop.xlane.xlu0 %2457
        %v2459 = vsel %vm1167, %v2451, 0.0
        %2460 = vadd.xlane.f32.xlu0 %v2459
        %v2461 = vpop.xlane.xlu0 %2460
        %v2462 = vsel %vm1167, %v2453, 0.0
        %2463 = vadd.xlane.f32.xlu0 %v2462
        %v2464 = vpop.xlane.xlu0 %2463
        %v2465 = vsel %vm1167, %v2455, 0.0
        %2466 = vadd.xlane.f32.xlu0 %v2465
        %v2467 = vpop.xlane.xlu0 %2466
        %v2468 = vrcp.pop %v2458
        %v2469 = vmul.f32 %v2449, %v2468
        %v2470 = vrcp.pop %v2461
        %v2471 = vmul.f32 %v2451, %v2470
        %v2472 = vrcp.pop %v2464
        %v2473 = vmul.f32 %v2453, %v2472
        %v2474 = vrcp.pop %v2467
        %v2475 = vmul.f32 %v2455, %v2474
        %2476 = vrot.lane.b32.xlu0 %v1113, 64
        %v2477 = vpop.permute.xlu0 %2476
        %v2480 = vsel %vm1167, %v2469, 0
        %2482 = vmatprep.subr.mxu0 0.0
        %2483 = vmatpush1.msra.mxu0 0.0
        %2484 = vmatprep.subr.mxu0 0.0
        %2485 = vmatpush1.msra.mxu0 0.0
        %2486 = vmatprep.subr.mxu0 0.0
        %2487 = vmatpush1.msra.mxu0 0.0
        %2488 = vmatprep.subr.mxu0 0.0
        %2489 = vmatpush1.msra.mxu0 0.0
        %2490 = vmatprep.subr.mxu0 0.0
        %2491 = vmatpush1.msra.mxu0 0.0
        %2492 = vmatprep.subr.mxu0 0.0
        %2493 = vmatpush1.msra.mxu0 0.0
        %2494 = vmatprep.subr.mxu0 0.0
        %2495 = vmatpush1.msra.mxu0 0.0
        %2496 = vmatprep.subr.mxu0 0.0
        %2497 = vmatpush1.msra.mxu0 0.0
        %2498 = vmatprep.subr.mxu0 0.0
        %2499 = vmatpush1.msra.mxu0 0.0
        %2500 = vmatprep.subr.mxu0 0.0
        %2501 = vmatpush1.msra.mxu0 0.0
        %2502 = vmatprep.subr.mxu0 0.0
        %2503 = vmatpush1.msra.mxu0 0.0
        %2504 = vmatprep.subr.mxu0 0.0
        %2505 = vmatpush1.msra.mxu0 0.0
        %2506 = vmatprep.subr.mxu0 0.0
        %2507 = vmatpush1.msra.mxu0 0.0
        %2508 = vmatprep.subr.mxu0 0.0
        %2509 = vmatpush1.msra.mxu0 0.0
        %2510 = vmatprep.subr.mxu0 0.0
        %2511 = vmatpush1.msra.mxu0 0.0
        %2512 = vmatprep.subr.mxu0 0.0
        %2513 = vmatpush1.msra.mxu0 %v2477
        %2514 = vmatprep.subr.mxu0 0.0
        %2515 = vmatpush2.msra.mxu0 0.0
        %2516 = vmatprep.subr.mxu0 0.0
        %2517 = vmatpush2.msra.mxu0 0.0
        %2518 = vmatprep.subr.mxu0 0.0
        %2519 = vmatpush2.msra.mxu0 0.0
        %2520 = vmatprep.subr.mxu0 0.0
        %2521 = vmatpush2.msra.mxu0 0.0
        %2522 = vmatprep.subr.mxu0 0.0
        %2523 = vmatpush2.msra.mxu0 0.0
        %2524 = vmatprep.subr.mxu0 0.0
        %2525 = vmatpush2.msra.mxu0 0.0
        %2526 = vmatprep.subr.mxu0 0.0
        %2527 = vmatpush2.msra.mxu0 0.0
        %2528 = vmatprep.subr.mxu0 0.0
        %2529 = vmatpush2.msra.mxu0 0.0
        %2530 = vmatprep.subr.mxu0 0.0
        %2531 = vmatpush2.msra.mxu0 0.0
        %2532 = vmatprep.subr.mxu0 0.0
        %2533 = vmatpush2.msra.mxu0 0.0
        %2534 = vmatprep.subr.mxu0 0.0
        %2535 = vmatpush2.msra.mxu0 0.0
        %2536 = vmatprep.subr.mxu0 0.0
        %2537 = vmatpush2.msra.mxu0 0.0
        %2538 = vmatprep.subr.mxu0 0.0
        %2539 = vmatpush2.msra.mxu0 0.0
        %2540 = vmatprep.subr.mxu0 0.0
        %2541 = vmatpush2.msra.mxu0 0.0
        %2542 = vmatprep.subr.mxu0 0.0
        %2543 = vmatpush2.msra.mxu0 0.0
        %2544 = vmatprep.subr.mxu0 0.0
        %2545 = vmatpush2.msra.mxu0 0.0
        %2546 = vmatprep.mubr.f32.mxu0 0.0
        %2547 = vmatmul.mubr.f32.gmra.mxu0 %v2480
        %v2548 = vpop.f32.mrf.mxu0
        %v2549 = vadd.f32 0.0, %v2548
        %v2550 = vpop.f32.mrf.mxu0
        %2551 = vdwg.mxu0
        %2552 = vrot.lane.b32.xlu0 %v1158, 64
        %v2553 = vpop.permute.xlu0 %2552
        %v2556 = vsel %vm1167, %v2471, 0
        %2558 = vmatprep.subr.mxu0 0.0
        %2559 = vmatpush1.msra.mxu0 0.0
        %2560 = vmatprep.subr.mxu0 0.0
        %2561 = vmatpush1.msra.mxu0 0.0
        %2562 = vmatprep.subr.mxu0 0.0
        %2563 = vmatpush1.msra.mxu0 0.0
        %2564 = vmatprep.subr.mxu0 0.0
        %2565 = vmatpush1.msra.mxu0 0.0
        %2566 = vmatprep.subr.mxu0 0.0
        %2567 = vmatpush1.msra.mxu0 0.0
        %2568 = vmatprep.subr.mxu0 0.0
        %2569 = vmatpush1.msra.mxu0 0.0
        %2570 = vmatprep.subr.mxu0 0.0
        %2571 = vmatpush1.msra.mxu0 0.0
        %2572 = vmatprep.subr.mxu0 0.0
        %2573 = vmatpush1.msra.mxu0 0.0
        %2574 = vmatprep.subr.mxu0 0.0
        %2575 = vmatpush1.msra.mxu0 0.0
        %2576 = vmatprep.subr.mxu0 0.0
        %2577 = vmatpush1.msra.mxu0 0.0
        %2578 = vmatprep.subr.mxu0 0.0
        %2579 = vmatpush1.msra.mxu0 0.0
        %2580 = vmatprep.subr.mxu0 0.0
        %2581 = vmatpush1.msra.mxu0 0.0
        %2582 = vmatprep.subr.mxu0 0.0
        %2583 = vmatpush1.msra.mxu0 0.0
        %2584 = vmatprep.subr.mxu0 0.0
        %2585 = vmatpush1.msra.mxu0 0.0
        %2586 = vmatprep.subr.mxu0 0.0
        %2587 = vmatpush1.msra.mxu0 0.0
        %2588 = vmatprep.subr.mxu0 0.0
        %2589 = vmatpush1.msra.mxu0 %v2553
        %2590 = vmatprep.subr.mxu0 0.0
        %2591 = vmatpush2.msra.mxu0 0.0
        %2592 = vmatprep.subr.mxu0 0.0
        %2593 = vmatpush2.msra.mxu0 0.0
        %2594 = vmatprep.subr.mxu0 0.0
        %2595 = vmatpush2.msra.mxu0 0.0
        %2596 = vmatprep.subr.mxu0 0.0
        %2597 = vmatpush2.msra.mxu0 0.0
        %2598 = vmatprep.subr.mxu0 0.0
        %2599 = vmatpush2.msra.mxu0 0.0
        %2600 = vmatprep.subr.mxu0 0.0
        %2601 = vmatpush2.msra.mxu0 0.0
        %2602 = vmatprep.subr.mxu0 0.0
        %2603 = vmatpush2.msra.mxu0 0.0
        %2604 = vmatprep.subr.mxu0 0.0
        %2605 = vmatpush2.msra.mxu0 0.0
        %2606 = vmatprep.subr.mxu0 0.0
        %2607 = vmatpush2.msra.mxu0 0.0
        %2608 = vmatprep.subr.mxu0 0.0
        %2609 = vmatpush2.msra.mxu0 0.0
        %2610 = vmatprep.subr.mxu0 0.0
        %2611 = vmatpush2.msra.mxu0 0.0
        %2612 = vmatprep.subr.mxu0 0.0
        %2613 = vmatpush2.msra.mxu0 0.0
        %2614 = vmatprep.subr.mxu0 0.0
        %2615 = vmatpush2.msra.mxu0 0.0
        %2616 = vmatprep.subr.mxu0 0.0
        %2617 = vmatpush2.msra.mxu0 0.0
        %2618 = vmatprep.subr.mxu0 0.0
        %2619 = vmatpush2.msra.mxu0 0.0
        %2620 = vmatprep.subr.mxu0 0.0
        %2621 = vmatpush2.msra.mxu0 0.0
        %2622 = vmatprep.mubr.f32.mxu0 0.0
        %2623 = vmatmul.mubr.f32.gmra.mxu0 %v2556
        %v2624 = vpop.f32.mrf.mxu0
        %v2625 = vadd.f32 0.0, %v2624
        %v2626 = vpop.f32.mrf.mxu0
        %2627 = vdwg.mxu0
        %2628 = vrot.lane.b32.xlu0 %v1160, 64
        %v2629 = vpop.permute.xlu0 %2628
        %v2632 = vsel %vm1167, %v2473, 0
        %2634 = vmatprep.subr.mxu0 0.0
        %2635 = vmatpush1.msra.mxu0 0.0
        %2636 = vmatprep.subr.mxu0 0.0
        %2637 = vmatpush1.msra.mxu0 0.0
        %2638 = vmatprep.subr.mxu0 0.0
        %2639 = vmatpush1.msra.mxu0 0.0
        %2640 = vmatprep.subr.mxu0 0.0
        %2641 = vmatpush1.msra.mxu0 0.0
        %2642 = vmatprep.subr.mxu0 0.0
        %2643 = vmatpush1.msra.mxu0 0.0
        %2644 = vmatprep.subr.mxu0 0.0
        %2645 = vmatpush1.msra.mxu0 0.0
        %2646 = vmatprep.subr.mxu0 0.0
        %2647 = vmatpush1.msra.mxu0 0.0
        %2648 = vmatprep.subr.mxu0 0.0
        %2649 = vmatpush1.msra.mxu0 0.0
        %2650 = vmatprep.subr.mxu0 0.0
        %2651 = vmatpush1.msra.mxu0 0.0
        %2652 = vmatprep.subr.mxu0 0.0
        %2653 = vmatpush1.msra.mxu0 0.0
        %2654 = vmatprep.subr.mxu0 0.0
        %2655 = vmatpush1.msra.mxu0 0.0
        %2656 = vmatprep.subr.mxu0 0.0
        %2657 = vmatpush1.msra.mxu0 0.0
        %2658 = vmatprep.subr.mxu0 0.0
        %2659 = vmatpush1.msra.mxu0 0.0
        %2660 = vmatprep.subr.mxu0 0.0
        %2661 = vmatpush1.msra.mxu0 0.0
        %2662 = vmatprep.subr.mxu0 0.0
        %2663 = vmatpush1.msra.mxu0 0.0
        %2664 = vmatprep.subr.mxu0 0.0
        %2665 = vmatpush1.msra.mxu0 %v2629
        %2666 = vmatprep.subr.mxu0 0.0
        %2667 = vmatpush2.msra.mxu0 0.0
        %2668 = vmatprep.subr.mxu0 0.0
        %2669 = vmatpush2.msra.mxu0 0.0
        %2670 = vmatprep.subr.mxu0 0.0
        %2671 = vmatpush2.msra.mxu0 0.0
        %2672 = vmatprep.subr.mxu0 0.0
        %2673 = vmatpush2.msra.mxu0 0.0
        %2674 = vmatprep.subr.mxu0 0.0
        %2675 = vmatpush2.msra.mxu0 0.0
        %2676 = vmatprep.subr.mxu0 0.0
        %2677 = vmatpush2.msra.mxu0 0.0
        %2678 = vmatprep.subr.mxu0 0.0
        %2679 = vmatpush2.msra.mxu0 0.0
        %2680 = vmatprep.subr.mxu0 0.0
        %2681 = vmatpush2.msra.mxu0 0.0
        %2682 = vmatprep.subr.mxu0 0.0
        %2683 = vmatpush2.msra.mxu0 0.0
        %2684 = vmatprep.subr.mxu0 0.0
        %2685 = vmatpush2.msra.mxu0 0.0
        %2686 = vmatprep.subr.mxu0 0.0
        %2687 = vmatpush2.msra.mxu0 0.0
        %2688 = vmatprep.subr.mxu0 0.0
        %2689 = vmatpush2.msra.mxu0 0.0
        %2690 = vmatprep.subr.mxu0 0.0
        %2691 = vmatpush2.msra.mxu0 0.0
        %2692 = vmatprep.subr.mxu0 0.0
        %2693 = vmatpush2.msra.mxu0 0.0
        %2694 = vmatprep.subr.mxu0 0.0
        %2695 = vmatpush2.msra.mxu0 0.0
        %2696 = vmatprep.subr.mxu0 0.0
        %2697 = vmatpush2.msra.mxu0 0.0
        %2698 = vmatprep.mubr.f32.mxu0 0.0
        %2699 = vmatmul.mubr.f32.gmra.mxu0 %v2632
        %v2700 = vpop.f32.mrf.mxu0
        %v2701 = vadd.f32 0.0, %v2700
        %v2702 = vpop.f32.mrf.mxu0
        %2703 = vdwg.mxu0
        %2704 = vrot.lane.b32.xlu0 %v1162, 64
        %v2705 = vpop.permute.xlu0 %2704
        %v2708 = vsel %vm1167, %v2475, 0
        %2710 = vmatprep.subr.mxu0 0.0
        %2711 = vmatpush1.msra.mxu0 0.0
        %2712 = vmatprep.subr.mxu0 0.0
        %2713 = vmatpush1.msra.mxu0 0.0
        %2714 = vmatprep.subr.mxu0 0.0
        %2715 = vmatpush1.msra.mxu0 0.0
        %2716 = vmatprep.subr.mxu0 0.0
        %2717 = vmatpush1.msra.mxu0 0.0
        %2718 = vmatprep.subr.mxu0 0.0
        %2719 = vmatpush1.msra.mxu0 0.0
        %2720 = vmatprep.subr.mxu0 0.0
        %2721 = vmatpush1.msra.mxu0 0.0
        %2722 = vmatprep.subr.mxu0 0.0
        %2723 = vmatpush1.msra.mxu0 0.0
        %2724 = vmatprep.subr.mxu0 0.0
        %2725 = vmatpush1.msra.mxu0 0.0
        %2726 = vmatprep.subr.mxu0 0.0
        %2727 = vmatpush1.msra.mxu0 0.0
        %2728 = vmatprep.subr.mxu0 0.0
        %2729 = vmatpush1.msra.mxu0 0.0
        %2730 = vmatprep.subr.mxu0 0.0
        %2731 = vmatpush1.msra.mxu0 0.0
        %2732 = vmatprep.subr.mxu0 0.0
        %2733 = vmatpush1.msra.mxu0 0.0
        %2734 = vmatprep.subr.mxu0 0.0
        %2735 = vmatpush1.msra.mxu0 0.0
        %2736 = vmatprep.subr.mxu0 0.0
        %2737 = vmatpush1.msra.mxu0 0.0
        %2738 = vmatprep.subr.mxu0 0.0
        %2739 = vmatpush1.msra.mxu0 0.0
        %2740 = vmatprep.subr.mxu0 0.0
        %2741 = vmatpush1.msra.mxu0 %v2705
        %2742 = vmatprep.subr.mxu0 0.0
        %2743 = vmatpush2.msra.mxu0 0.0
        %2744 = vmatprep.subr.mxu0 0.0
        %2745 = vmatpush2.msra.mxu0 0.0
        %2746 = vmatprep.subr.mxu0 0.0
        %2747 = vmatpush2.msra.mxu0 0.0
        %2748 = vmatprep.subr.mxu0 0.0
        %2749 = vmatpush2.msra.mxu0 0.0
        %2750 = vmatprep.subr.mxu0 0.0
        %2751 = vmatpush2.msra.mxu0 0.0
        %2752 = vmatprep.subr.mxu0 0.0
        %2753 = vmatpush2.msra.mxu0 0.0
        %2754 = vmatprep.subr.mxu0 0.0
        %2755 = vmatpush2.msra.mxu0 0.0
        %2756 = vmatprep.subr.mxu0 0.0
        %2757 = vmatpush2.msra.mxu0 0.0
        %2758 = vmatprep.subr.mxu0 0.0
        %2759 = vmatpush2.msra.mxu0 0.0
        %2760 = vmatprep.subr.mxu0 0.0
        %2761 = vmatpush2.msra.mxu0 0.0
        %2762 = vmatprep.subr.mxu0 0.0
        %2763 = vmatpush2.msra.mxu0 0.0
        %2764 = vmatprep.subr.mxu0 0.0
        %2765 = vmatpush2.msra.mxu0 0.0
        %2766 = vmatprep.subr.mxu0 0.0
        %2767 = vmatpush2.msra.mxu0 0.0
        %2768 = vmatprep.subr.mxu0 0.0
        %2769 = vmatpush2.msra.mxu0 0.0
        %2770 = vmatprep.subr.mxu0 0.0
        %2771 = vmatpush2.msra.mxu0 0.0
        %2772 = vmatprep.subr.mxu0 0.0
        %2773 = vmatpush2.msra.mxu0 0.0
        %2774 = vmatprep.mubr.f32.mxu0 0.0
        %2775 = vmatmul.mubr.f32.gmra.mxu0 %v2708
        %v2776 = vpop.f32.mrf.mxu0
        %v2777 = vadd.f32 0.0, %v2776
        %v2778 = vpop.f32.mrf.mxu0
        %2779 = vdwg.mxu0
        %v2780 = vld [vmem:[%s1003] sm:$0xff]
        %v2781 = vld [vmem:[%s1003 + $0x8] sm:$0xff]
        %v2782 = vld [vmem:[%s1003 + $0x10] sm:$0xff]
        %v2783 = vld [vmem:[%s1003 + $0x18] sm:$0xff]
        %v2785 = vsel %vm1167, %v2549, 0
        %2787 = vmatprep.subr.mxu0 0.0
        %2788 = vmatpush1.msra.mxu0 0.0
        %2789 = vmatprep.subr.mxu0 0.0
        %2790 = vmatpush1.msra.mxu0 0.0
        %2791 = vmatprep.subr.mxu0 0.0
        %2792 = vmatpush1.msra.mxu0 0.0
        %2793 = vmatprep.subr.mxu0 0.0
        %2794 = vmatpush1.msra.mxu0 0.0
        %2795 = vmatprep.subr.mxu0 0.0
        %2796 = vmatpush1.msra.mxu0 0.0
        %2797 = vmatprep.subr.mxu0 0.0
        %2798 = vmatpush1.msra.mxu0 0.0
        %2799 = vmatprep.subr.mxu0 0.0
        %2800 = vmatpush1.msra.mxu0 0.0
        %2801 = vmatprep.subr.mxu0 0.0
        %2802 = vmatpush1.msra.mxu0 0.0
        %2803 = vmatprep.subr.mxu0 0.0
        %2804 = vmatpush1.msra.mxu0 0.0
        %2805 = vmatprep.subr.mxu0 0.0
        %2806 = vmatpush1.msra.mxu0 0.0
        %2807 = vmatprep.subr.mxu0 0.0
        %2808 = vmatpush1.msra.mxu0 0.0
        %2809 = vmatprep.subr.mxu0 0.0
        %2810 = vmatpush1.msra.mxu0 0.0
        %2811 = vmatprep.subr.mxu0 0.0
        %2812 = vmatpush1.msra.mxu0 0.0
        %2813 = vmatprep.subr.mxu0 0.0
        %2814 = vmatpush1.msra.mxu0 0.0
        %2815 = vmatprep.subr.mxu0 0.0
        %2816 = vmatpush1.msra.mxu0 0.0
        %2817 = vmatprep.subr.mxu0 0.0
        %2818 = vmatpush1.msra.mxu0 %v2780
        %2819 = vmatprep.subr.mxu0 0.0
        %2820 = vmatpush2.msra.mxu0 0.0
        %2821 = vmatprep.subr.mxu0 0.0
        %2822 = vmatpush2.msra.mxu0 0.0
        %2823 = vmatprep.subr.mxu0 0.0
        %2824 = vmatpush2.msra.mxu0 0.0
        %2825 = vmatprep.subr.mxu0 0.0
        %2826 = vmatpush2.msra.mxu0 0.0
        %2827 = vmatprep.subr.mxu0 0.0
        %2828 = vmatpush2.msra.mxu0 0.0
        %2829 = vmatprep.subr.mxu0 0.0
        %2830 = vmatpush2.msra.mxu0 0.0
        %2831 = vmatprep.subr.mxu0 0.0
        %2832 = vmatpush2.msra.mxu0 0.0
        %2833 = vmatprep.subr.mxu0 0.0
        %2834 = vmatpush2.msra.mxu0 0.0
        %2835 = vmatprep.subr.mxu0 0.0
        %2836 = vmatpush2.msra.mxu0 0.0
        %2837 = vmatprep.subr.mxu0 0.0
        %2838 = vmatpush2.msra.mxu0 0.0
        %2839 = vmatprep.subr.mxu0 0.0
        %2840 = vmatpush2.msra.mxu0 0.0
        %2841 = vmatprep.subr.mxu0 0.0
        %2842 = vmatpush2.msra.mxu0 0.0
        %2843 = vmatprep.subr.mxu0 0.0
        %2844 = vmatpush2.msra.mxu0 0.0
        %2845 = vmatprep.subr.mxu0 0.0
        %2846 = vmatpush2.msra.mxu0 0.0
        %2847 = vmatprep.subr.mxu0 0.0
        %2848 = vmatpush2.msra.mxu0 0.0
        %2849 = vmatprep.subr.mxu0 0.0
        %2850 = vmatpush2.msra.mxu0 0.0
        %2851 = vmatprep.mubr.f32.mxu0 0.0
        %2852 = vmatmul.mubr.f32.gmra.mxu0 %v2785
        %v2853 = vpop.f32.mrf.mxu0
        %v2854 = vadd.f32 0.0, %v2853
        %v2855 = vpop.f32.mrf.mxu0
        %2856 = vdwg.mxu0
        %v2858 = vsel %vm1167, %v2625, 0
        %2860 = vmatprep.subr.mxu0 0.0
        %2861 = vmatpush1.msra.mxu0 0.0
        %2862 = vmatprep.subr.mxu0 0.0
        %2863 = vmatpush1.msra.mxu0 0.0
        %2864 = vmatprep.subr.mxu0 0.0
        %2865 = vmatpush1.msra.mxu0 0.0
        %2866 = vmatprep.subr.mxu0 0.0
        %2867 = vmatpush1.msra.mxu0 0.0
        %2868 = vmatprep.subr.mxu0 0.0
        %2869 = vmatpush1.msra.mxu0 0.0
        %2870 = vmatprep.subr.mxu0 0.0
        %2871 = vmatpush1.msra.mxu0 0.0
        %2872 = vmatprep.subr.mxu0 0.0
        %2873 = vmatpush1.msra.mxu0 0.0
        %2874 = vmatprep.subr.mxu0 0.0
        %2875 = vmatpush1.msra.mxu0 0.0
        %2876 = vmatprep.subr.mxu0 0.0
        %2877 = vmatpush1.msra.mxu0 0.0
        %2878 = vmatprep.subr.mxu0 0.0
        %2879 = vmatpush1.msra.mxu0 0.0
        %2880 = vmatprep.subr.mxu0 0.0
        %2881 = vmatpush1.msra.mxu0 0.0
        %2882 = vmatprep.subr.mxu0 0.0
        %2883 = vmatpush1.msra.mxu0 0.0
        %2884 = vmatprep.subr.mxu0 0.0
        %2885 = vmatpush1.msra.mxu0 0.0
        %2886 = vmatprep.subr.mxu0 0.0
        %2887 = vmatpush1.msra.mxu0 0.0
        %2888 = vmatprep.subr.mxu0 0.0
        %2889 = vmatpush1.msra.mxu0 0.0
        %2890 = vmatprep.subr.mxu0 0.0
        %2891 = vmatpush1.msra.mxu0 %v2781
        %2892 = vmatprep.subr.mxu0 0.0
        %2893 = vmatpush2.msra.mxu0 0.0
        %2894 = vmatprep.subr.mxu0 0.0
        %2895 = vmatpush2.msra.mxu0 0.0
        %2896 = vmatprep.subr.mxu0 0.0
        %2897 = vmatpush2.msra.mxu0 0.0
        %2898 = vmatprep.subr.mxu0 0.0
        %2899 = vmatpush2.msra.mxu0 0.0
        %2900 = vmatprep.subr.mxu0 0.0
        %2901 = vmatpush2.msra.mxu0 0.0
        %2902 = vmatprep.subr.mxu0 0.0
        %2903 = vmatpush2.msra.mxu0 0.0
        %2904 = vmatprep.subr.mxu0 0.0
        %2905 = vmatpush2.msra.mxu0 0.0
        %2906 = vmatprep.subr.mxu0 0.0
        %2907 = vmatpush2.msra.mxu0 0.0
        %2908 = vmatprep.subr.mxu0 0.0
        %2909 = vmatpush2.msra.mxu0 0.0
        %2910 = vmatprep.subr.mxu0 0.0
        %2911 = vmatpush2.msra.mxu0 0.0
        %2912 = vmatprep.subr.mxu0 0.0
        %2913 = vmatpush2.msra.mxu0 0.0
        %2914 = vmatprep.subr.mxu0 0.0
        %2915 = vmatpush2.msra.mxu0 0.0
        %2916 = vmatprep.subr.mxu0 0.0
        %2917 = vmatpush2.msra.mxu0 0.0
        %2918 = vmatprep.subr.mxu0 0.0
        %2919 = vmatpush2.msra.mxu0 0.0
        %2920 = vmatprep.subr.mxu0 0.0
        %2921 = vmatpush2.msra.mxu0 0.0
        %2922 = vmatprep.subr.mxu0 0.0
        %2923 = vmatpush2.msra.mxu0 0.0
        %2924 = vmatprep.mubr.f32.mxu0 0.0
        %2925 = vmatmul.mubr.f32.gmra.mxu0 %v2858
        %v2926 = vpop.f32.mrf.mxu0
        %v2927 = vadd.f32 0.0, %v2926
        %v2928 = vpop.f32.mrf.mxu0
        %2929 = vdwg.mxu0
        %v2931 = vsel %vm1167, %v2701, 0
        %2933 = vmatprep.subr.mxu0 0.0
        %2934 = vmatpush1.msra.mxu0 0.0
        %2935 = vmatprep.subr.mxu0 0.0
        %2936 = vmatpush1.msra.mxu0 0.0
        %2937 = vmatprep.subr.mxu0 0.0
        %2938 = vmatpush1.msra.mxu0 0.0
        %2939 = vmatprep.subr.mxu0 0.0
        %2940 = vmatpush1.msra.mxu0 0.0
        %2941 = vmatprep.subr.mxu0 0.0
        %2942 = vmatpush1.msra.mxu0 0.0
        %2943 = vmatprep.subr.mxu0 0.0
        %2944 = vmatpush1.msra.mxu0 0.0
        %2945 = vmatprep.subr.mxu0 0.0
        %2946 = vmatpush1.msra.mxu0 0.0
        %2947 = vmatprep.subr.mxu0 0.0
        %2948 = vmatpush1.msra.mxu0 0.0
        %2949 = vmatprep.subr.mxu0 0.0
        %2950 = vmatpush1.msra.mxu0 0.0
        %2951 = vmatprep.subr.mxu0 0.0
        %2952 = vmatpush1.msra.mxu0 0.0
        %2953 = vmatprep.subr.mxu0 0.0
        %2954 = vmatpush1.msra.mxu0 0.0
        %2955 = vmatprep.subr.mxu0 0.0
        %2956 = vmatpush1.msra.mxu0 0.0
        %2957 = vmatprep.subr.mxu0 0.0
        %2958 = vmatpush1.msra.mxu0 0.0
        %2959 = vmatprep.subr.mxu0 0.0
        %2960 = vmatpush1.msra.mxu0 0.0
        %2961 = vmatprep.subr.mxu0 0.0
        %2962 = vmatpush1.msra.mxu0 0.0
        %2963 = vmatprep.subr.mxu0 0.0
        %2964 = vmatpush1.msra.mxu0 %v2782
        %2965 = vmatprep.subr.mxu0 0.0
        %2966 = vmatpush2.msra.mxu0 0.0
        %2967 = vmatprep.subr.mxu0 0.0
        %2968 = vmatpush2.msra.mxu0 0.0
        %2969 = vmatprep.subr.mxu0 0.0
        %2970 = vmatpush2.msra.mxu0 0.0
        %2971 = vmatprep.subr.mxu0 0.0
        %2972 = vmatpush2.msra.mxu0 0.0
        %2973 = vmatprep.subr.mxu0 0.0
        %2974 = vmatpush2.msra.mxu0 0.0
        %2975 = vmatprep.subr.mxu0 0.0
        %2976 = vmatpush2.msra.mxu0 0.0
        %2977 = vmatprep.subr.mxu0 0.0
        %2978 = vmatpush2.msra.mxu0 0.0
        %2979 = vmatprep.subr.mxu0 0.0
        %2980 = vmatpush2.msra.mxu0 0.0
        %2981 = vmatprep.subr.mxu0 0.0
        %2982 = vmatpush2.msra.mxu0 0.0
        %2983 = vmatprep.subr.mxu0 0.0
        %2984 = vmatpush2.msra.mxu0 0.0
        %2985 = vmatprep.subr.mxu0 0.0
        %2986 = vmatpush2.msra.mxu0 0.0
        %2987 = vmatprep.subr.mxu0 0.0
        %2988 = vmatpush2.msra.mxu0 0.0
        %2989 = vmatprep.subr.mxu0 0.0
        %2990 = vmatpush2.msra.mxu0 0.0
        %2991 = vmatprep.subr.mxu0 0.0
        %2992 = vmatpush2.msra.mxu0 0.0
        %2993 = vmatprep.subr.mxu0 0.0
        %2994 = vmatpush2.msra.mxu0 0.0
        %2995 = vmatprep.subr.mxu0 0.0
        %2996 = vmatpush2.msra.mxu0 0.0
        %2997 = vmatprep.mubr.f32.mxu0 0.0
        %2998 = vmatmul.mubr.f32.gmra.mxu0 %v2931
        %v2999 = vpop.f32.mrf.mxu0
        %v3000 = vadd.f32 0.0, %v2999
        %v3001 = vpop.f32.mrf.mxu0
        %3002 = vdwg.mxu0
        %v3004 = vsel %vm1167, %v2777, 0
        %3006 = vmatprep.subr.mxu0 0.0
        %3007 = vmatpush1.msra.mxu0 0.0
        %3008 = vmatprep.subr.mxu0 0.0
        %3009 = vmatpush1.msra.mxu0 0.0
        %3010 = vmatprep.subr.mxu0 0.0
        %3011 = vmatpush1.msra.mxu0 0.0
        %3012 = vmatprep.subr.mxu0 0.0
        %3013 = vmatpush1.msra.mxu0 0.0
        %3014 = vmatprep.subr.mxu0 0.0
        %3015 = vmatpush1.msra.mxu0 0.0
        %3016 = vmatprep.subr.mxu0 0.0
        %3017 = vmatpush1.msra.mxu0 0.0
        %3018 = vmatprep.subr.mxu0 0.0
        %3019 = vmatpush1.msra.mxu0 0.0
        %3020 = vmatprep.subr.mxu0 0.0
        %3021 = vmatpush1.msra.mxu0 0.0
        %3022 = vmatprep.subr.mxu0 0.0
        %3023 = vmatpush1.msra.mxu0 0.0
        %3024 = vmatprep.subr.mxu0 0.0
        %3025 = vmatpush1.msra.mxu0 0.0
        %3026 = vmatprep.subr.mxu0 0.0
        %3027 = vmatpush1.msra.mxu0 0.0
        %3028 = vmatprep.subr.mxu0 0.0
        %3029 = vmatpush1.msra.mxu0 0.0
        %3030 = vmatprep.subr.mxu0 0.0
        %3031 = vmatpush1.msra.mxu0 0.0
        %3032 = vmatprep.subr.mxu0 0.0
        %3033 = vmatpush1.msra.mxu0 0.0
        %3034 = vmatprep.subr.mxu0 0.0
        %3035 = vmatpush1.msra.mxu0 0.0
        %3036 = vmatprep.subr.mxu0 0.0
        %3037 = vmatpush1.msra.mxu0 %v2783
        %3038 = vmatprep.subr.mxu0 0.0
        %3039 = vmatpush2.msra.mxu0 0.0
        %3040 = vmatprep.subr.mxu0 0.0
        %3041 = vmatpush2.msra.mxu0 0.0
        %3042 = vmatprep.subr.mxu0 0.0
        %3043 = vmatpush2.msra.mxu0 0.0
        %3044 = vmatprep.subr.mxu0 0.0
        %3045 = vmatpush2.msra.mxu0 0.0
        %3046 = vmatprep.subr.mxu0 0.0
        %3047 = vmatpush2.msra.mxu0 0.0
        %3048 = vmatprep.subr.mxu0 0.0
        %3049 = vmatpush2.msra.mxu0 0.0
        %3050 = vmatprep.subr.mxu0 0.0
        %3051 = vmatpush2.msra.mxu0 0.0
        %3052 = vmatprep.subr.mxu0 0.0
        %3053 = vmatpush2.msra.mxu0 0.0
        %3054 = vmatprep.subr.mxu0 0.0
        %3055 = vmatpush2.msra.mxu0 0.0
        %3056 = vmatprep.subr.mxu0 0.0
        %3057 = vmatpush2.msra.mxu0 0.0
        %3058 = vmatprep.subr.mxu0 0.0
        %3059 = vmatpush2.msra.mxu0 0.0
        %3060 = vmatprep.subr.mxu0 0.0
        %3061 = vmatpush2.msra.mxu0 0.0
        %3062 = vmatprep.subr.mxu0 0.0
        %3063 = vmatpush2.msra.mxu0 0.0
        %3064 = vmatprep.subr.mxu0 0.0
        %3065 = vmatpush2.msra.mxu0 0.0
        %3066 = vmatprep.subr.mxu0 0.0
        %3067 = vmatpush2.msra.mxu0 0.0
        %3068 = vmatprep.subr.mxu0 0.0
        %3069 = vmatpush2.msra.mxu0 0.0
        %3070 = vmatprep.mubr.f32.mxu0 0.0
        %3071 = vmatmul.mubr.f32.gmra.mxu0 %v3004
        %v3072 = vpop.f32.mrf.mxu0
        %v3073 = vadd.f32 0.0, %v3072
        %v3074 = vpop.f32.mrf.mxu0
        %3075 = vdwg.mxu0
        %v3076 = vsel %vm1042, %v2854, 0.0
        %v3077 = vsel %vm1042, %v2927, 0.0
        %v3078 = vadd.f32 %v3076, %v3077
        %v3079 = vsel %vm1042, %v3000, 0.0
        %v3080 = vadd.f32 %v3078, %v3079
        %v3081 = vsel %vm1042, %v3073, 0.0
        %v3082 = vadd.f32 %v3080, %v3081
        %v3083 = vld [vmem:[%s1007] sm:$0xf]
        %v3084 = vadd.f32 %v3082, %v1037
        %v3085 = vsel %vm1042, %v3084, 0.0
        %3086 = vadd.xlane.f32.xlu0 %v3085
        %v3087 = vpop.xlane.xlu0 %3086
        %v3088 = vrcp.pop 32.0
        %v3089 = vmul.f32 %v3087, %v3088
        %v3090 = vsub.f32 %v3084, %v3089
        %v3091 = vmul.f32 %v3090, %v3090
        %v3092 = vsel %vm1042, %v3091, 0.0
        %3093 = vadd.xlane.f32.xlu0 %v3092
        %v3094 = vpop.xlane.xlu0 %3093
        %v3095 = vmul.f32 %v3094, %v3088
        %v3096 = vadd.f32 %v3095, 1e-12
        %v3097 = vrsqrt.pop %v3096
        %v3098 = vmul.f32 %v3090, %v3097
        %v3099 = vlaneseq
        %v3100 = vshrl.u32 %v3099, 7
        %v3101 = vsub.s32 0, %v3100
        %v3102 = vrot.slane %v3083, %v3101
        %v3103 = vmul.f32 %v3098, %v3102
        %v3104 = vlaneseq
        %v3105 = vshrl.u32 %v3104, 7
        %v3106 = vsub.s32 1, %v3105
        %v3107 = vrot.slane %v3083, %v3106
        %v3108 = vadd.f32 %v3103, %v3107
        %v3109 = vld [vmem:[%s1012] sm:$0xff]
        %v3110 = vld [vmem:[%s1012 + $0x8] sm:$0xff]
        %v3111 = vld [vmem:[%s1012 + $0x10] sm:$0xff]
        %v3112 = vld [vmem:[%s1012 + $0x18] sm:$0xff]
        %v3113 = vld [vmem:[%s1015] sm:$0x1]
        %v3115 = vlaneseq
        %v3116 = vshrl.u32 %v3115, 7
        %v3117 = vsub.s32 0, %v3116
        %v3118 = vrot.slane %v3113, %v3117
        %v3121 = vsel %vm1042, %v3108, 0
        %3123 = vmatprep.subr.mxu0 0.0
        %3124 = vmatpush1.msra.mxu0 0.0
        %3125 = vmatprep.subr.mxu0 0.0
        %3126 = vmatpush1.msra.mxu0 0.0
        %3127 = vmatprep.subr.mxu0 0.0
        %3128 = vmatpush1.msra.mxu0 0.0
        %3129 = vmatprep.subr.mxu0 0.0
        %3130 = vmatpush1.msra.mxu0 0.0
        %3131 = vmatprep.subr.mxu0 0.0
        %3132 = vmatpush1.msra.mxu0 0.0
        %3133 = vmatprep.subr.mxu0 0.0
        %3134 = vmatpush1.msra.mxu0 0.0
        %3135 = vmatprep.subr.mxu0 0.0
        %3136 = vmatpush1.msra.mxu0 0.0
        %3137 = vmatprep.subr.mxu0 0.0
        %3138 = vmatpush1.msra.mxu0 0.0
        %3139 = vmatprep.subr.mxu0 0.0
        %3140 = vmatpush1.msra.mxu0 0.0
        %3141 = vmatprep.subr.mxu0 0.0
        %3142 = vmatpush1.msra.mxu0 0.0
        %3143 = vmatprep.subr.mxu0 0.0
        %3144 = vmatpush1.msra.mxu0 0.0
        %3145 = vmatprep.subr.mxu0 0.0
        %3146 = vmatpush1.msra.mxu0 0.0
        %3147 = vmatprep.subr.mxu0 0.0
        %3148 = vmatpush1.msra.mxu0 %v3112
        %3149 = vmatprep.subr.mxu0 0.0
        %3150 = vmatpush1.msra.mxu0 %v3111
        %3151 = vmatprep.subr.mxu0 0.0
        %3152 = vmatpush1.msra.mxu0 %v3110
        %3153 = vmatprep.subr.mxu0 0.0
        %3154 = vmatpush1.msra.mxu0 %v3109
        %3155 = vmatprep.subr.mxu0 0.0
        %3156 = vmatpush2.msra.mxu0 0.0
        %3157 = vmatprep.subr.mxu0 0.0
        %3158 = vmatpush2.msra.mxu0 0.0
        %3159 = vmatprep.subr.mxu0 0.0
        %3160 = vmatpush2.msra.mxu0 0.0
        %3161 = vmatprep.subr.mxu0 0.0
        %3162 = vmatpush2.msra.mxu0 0.0
        %3163 = vmatprep.subr.mxu0 0.0
        %3164 = vmatpush2.msra.mxu0 0.0
        %3165 = vmatprep.subr.mxu0 0.0
        %3166 = vmatpush2.msra.mxu0 0.0
        %3167 = vmatprep.subr.mxu0 0.0
        %3168 = vmatpush2.msra.mxu0 0.0
        %3169 = vmatprep.subr.mxu0 0.0
        %3170 = vmatpush2.msra.mxu0 0.0
        %3171 = vmatprep.subr.mxu0 0.0
        %3172 = vmatpush2.msra.mxu0 0.0
        %3173 = vmatprep.subr.mxu0 0.0
        %3174 = vmatpush2.msra.mxu0 0.0
        %3175 = vmatprep.subr.mxu0 0.0
        %3176 = vmatpush2.msra.mxu0 0.0
        %3177 = vmatprep.subr.mxu0 0.0
        %3178 = vmatpush2.msra.mxu0 0.0
        %3179 = vmatprep.subr.mxu0 0.0
        %3180 = vmatpush2.msra.mxu0 0.0
        %3181 = vmatprep.subr.mxu0 0.0
        %3182 = vmatpush2.msra.mxu0 0.0
        %3183 = vmatprep.subr.mxu0 0.0
        %3184 = vmatpush2.msra.mxu0 0.0
        %3185 = vmatprep.subr.mxu0 0.0
        %3186 = vmatpush2.msra.mxu0 0.0
        %3187 = vmatprep.mubr.f32.mxu0 0.0
        %3188 = vmatmul.mubr.f32.gmra.mxu0 %v3121
        %v3189 = vpop.f32.mrf.mxu0
        %v3190 = vadd.f32 %v3118, %v3189
        %v3191 = vpop.f32.mrf.mxu0
        %3192 = vdwg.mxu0
        %v3193 = vmul.f32 %v3190, 0.5
        %v3194 = vmul.f32 %v3190, 0.044715
        %v3195 = vmul.f32 %v3194, %v3190
        %v3196 = vmul.f32 %v3195, %v3190
        %v3197 = vadd.f32 %v3190, %v3196
        %v3198 = vmul.f32 %v3197, 0.7978846
        %v3199 = vtanh.pop %v3198
        %v3200 = vadd.f32 %v3199, 1.0
        %v3201 = vmul.f32 %v3193, %v3200
        %v3202 = vld [vmem:[%s1020] sm:$0xff]
        %v3203 = vld [vmem:[%s1020 + $0x8] sm:$0xff]
        %v3204 = vld [vmem:[%s1020 + $0x10] sm:$0xff]
        %v3205 = vld [vmem:[%s1020 + $0x18] sm:$0xff]
        %v3206 = vld [vmem:[%s1020 + $0x20] sm:$0xff]
        %v3207 = vld [vmem:[%s1020 + $0x28] sm:$0xff]
        %v3208 = vld [vmem:[%s1020 + $0x30] sm:$0xff]
        %v3209 = vld [vmem:[%s1020 + $0x38] sm:$0xff]
        %v3210 = vld [vmem:[%s1023] sm:$0x1]
        %v3212 = vlaneseq
        %v3213 = vshrl.u32 %v3212, 7
        %v3214 = vsub.s32 0, %v3213
        %v3215 = vrot.slane %v3210, %v3214
        %vm3217 = vcmask 523264
        %v3219 = vsel %vm3217, %v3201, 0
        %3221 = vmatprep.subr.mxu0 0.0
        %3222 = vmatpush1.msra.mxu0 0.0
        %3223 = vmatprep.subr.mxu0 0.0
        %3224 = vmatpush1.msra.mxu0 0.0
        %3225 = vmatprep.subr.mxu0 0.0
        %3226 = vmatpush1.msra.mxu0 0.0
        %3227 = vmatprep.subr.mxu0 0.0
        %3228 = vmatpush1.msra.mxu0 0.0
        %3229 = vmatprep.subr.mxu0 0.0
        %3230 = vmatpush1.msra.mxu0 0.0
        %3231 = vmatprep.subr.mxu0 0.0
        %3232 = vmatpush1.msra.mxu0 0.0
        %3233 = vmatprep.subr.mxu0 0.0
        %3234 = vmatpush1.msra.mxu0 0.0
        %3235 = vmatprep.subr.mxu0 0.0
        %3236 = vmatpush1.msra.mxu0 0.0
        %3237 = vmatprep.subr.mxu0 0.0
        %3238 = vmatpush1.msra.mxu0 %v3209
        %3239 = vmatprep.subr.mxu0 0.0
        %3240 = vmatpush1.msra.mxu0 %v3208
        %3241 = vmatprep.subr.mxu0 0.0
        %3242 = vmatpush1.msra.mxu0 %v3207
        %3243 = vmatprep.subr.mxu0 0.0
        %3244 = vmatpush1.msra.mxu0 %v3206
        %3245 = vmatprep.subr.mxu0 0.0
        %3246 = vmatpush1.msra.mxu0 %v3205
        %3247 = vmatprep.subr.mxu0 0.0
        %3248 = vmatpush1.msra.mxu0 %v3204
        %3249 = vmatprep.subr.mxu0 0.0
        %3250 = vmatpush1.msra.mxu0 %v3203
        %3251 = vmatprep.subr.mxu0 0.0
        %3252 = vmatpush1.msra.mxu0 %v3202
        %3253 = vmatprep.subr.mxu0 0.0
        %3254 = vmatpush2.msra.mxu0 0.0
        %3255 = vmatprep.subr.mxu0 0.0
        %3256 = vmatpush2.msra.mxu0 0.0
        %3257 = vmatprep.subr.mxu0 0.0
        %3258 = vmatpush2.msra.mxu0 0.0
        %3259 = vmatprep.subr.mxu0 0.0
        %3260 = vmatpush2.msra.mxu0 0.0
        %3261 = vmatprep.subr.mxu0 0.0
        %3262 = vmatpush2.msra.mxu0 0.0
        %3263 = vmatprep.subr.mxu0 0.0
        %3264 = vmatpush2.msra.mxu0 0.0
        %3265 = vmatprep.subr.mxu0 0.0
        %3266 = vmatpush2.msra.mxu0 0.0
        %3267 = vmatprep.subr.mxu0 0.0
        %3268 = vmatpush2.msra.mxu0 0.0
        %3269 = vmatprep.subr.mxu0 0.0
        %3270 = vmatpush2.msra.mxu0 0.0
        %3271 = vmatprep.subr.mxu0 0.0
        %3272 = vmatpush2.msra.mxu0 0.0
        %3273 = vmatprep.subr.mxu0 0.0
        %3274 = vmatpush2.msra.mxu0 0.0
        %3275 = vmatprep.subr.mxu0 0.0
        %3276 = vmatpush2.msra.mxu0 0.0
        %3277 = vmatprep.subr.mxu0 0.0
        %3278 = vmatpush2.msra.mxu0 0.0
        %3279 = vmatprep.subr.mxu0 0.0
        %3280 = vmatpush2.msra.mxu0 0.0
        %3281 = vmatprep.subr.mxu0 0.0
        %3282 = vmatpush2.msra.mxu0 0.0
        %3283 = vmatprep.subr.mxu0 0.0
        %3284 = vmatpush2.msra.mxu0 0.0
        %3285 = vmatprep.mubr.f32.mxu0 0.0
        %3286 = vmatmul.mubr.f32.gmra.mxu0 %v3219
        %v3287 = vpop.f32.mrf.mxu0
        %v3288 = vadd.f32 %v3215, %v3287
        %v3289 = vpop.f32.mrf.mxu0
        %3290 = vdwg.mxu0
        %v3291 = vadd.f32 %v3288, %v3108
        %v3292 = vsel %vm1042, %v3291, 0.0
        %3293 = vadd.xlane.f32.xlu0 %v3292
        %v3294 = vpop.xlane.xlu0 %3293
        %v3295 = vmul.f32 %v3294, %v3088
        %v3296 = vsub.f32 %v3291, %v3295
        %v3297 = vmul.f32 %v3296, %v3296
        %v3298 = vsel %vm1042, %v3297, 0.0
        %3299 = vadd.xlane.f32.xlu0 %v3298
        %v3300 = vpop.xlane.xlu0 %3299
        %v3301 = vmul.f32 %v3300, %v3088
        %v3302 = vadd.f32 %v3301, 1e-12
        %v3303 = vrsqrt.pop %v3302
        %v3304 = vmul.f32 %v3296, %v3303
        %v3305 = vlaneseq
        %v3306 = vshrl.u32 %v3305, 7
        %v3307 = vsub.s32 2, %v3306
        %v3308 = vrot.slane %v3083, %v3307
        %v3309 = vmul.f32 %v3304, %v3308
        %v3310 = vlaneseq
        %v3311 = vshrl.u32 %v3310, 7
        %v3312 = vsub.s32 3, %v3311
        %v3313 = vrot.slane %v3083, %v3312
        %v3314 = vadd.f32 %v3309, %v3313
        %3315 = vst.msk [vmem:[#allocation2] sm:$0xff] %vm1042, %v3314
        %p3316 = scmp.eq.s32.totalorder %s48, 1
        // Predicated region
        $region117: #{xlnet_forward.1} parent=111 // pred_check
          %p3317 = pneg %p3316
        $region118: #{xlnet_forward.1} parent=111 // pred_check_branch
          %3319 = sbr.rel (%p3317) target = $region120
        $region119: #{xlnet_forward.1} parent=111 // pred_region
          %v3320 = vld [vmem:[%s18] sm:$0xff]
          %v3321 = vld [vmem:[%s18 + $0x8] sm:$0xff]
          %v3322 = vld [vmem:[%s18 + $0x10] sm:$0xff]
          %v3323 = vld [vmem:[%s18 + $0x18] sm:$0xff]
          %v3324 = vld [vmem:[%s19] sm:$0x1]
          %v3326 = vrot.slane %v3314, 7
          %v3327 = vsel %vm1042, %v3326, 0
          %3329 = vmatprep.subr.mxu0 0.0
          %3330 = vmatpush1.msra.mxu0 0.0
          %3331 = vmatprep.subr.mxu0 0.0
          %3332 = vmatpush1.msra.mxu0 0.0
          %3333 = vmatprep.subr.mxu0 0.0
          %3334 = vmatpush1.msra.mxu0 0.0
          %3335 = vmatprep.subr.mxu0 0.0
          %3336 = vmatpush1.msra.mxu0 0.0
          %3337 = vmatprep.subr.mxu0 0.0
          %3338 = vmatpush1.msra.mxu0 0.0
          %3339 = vmatprep.subr.mxu0 0.0
          %3340 = vmatpush1.msra.mxu0 0.0
          %3341 = vmatprep.subr.mxu0 0.0
          %3342 = vmatpush1.msra.mxu0 0.0
          %3343 = vmatprep.subr.mxu0 0.0
          %3344 = vmatpush1.msra.mxu0 0.0
          %3345 = vmatprep.subr.mxu0 0.0
          %3346 = vmatpush1.msra.mxu0 0.0
          %3347 = vmatprep.subr.mxu0 0.0
          %3348 = vmatpush1.msra.mxu0 0.0
          %3349 = vmatprep.subr.mxu0 0.0
          %3350 = vmatpush1.msra.mxu0 0.0
          %3351 = vmatprep.subr.mxu0 0.0
          %3352 = vmatpush1.msra.mxu0 0.0
          %3353 = vmatprep.subr.mxu0 0.0
          %3354 = vmatpush1.msra.mxu0 %v3323
          %3355 = vmatprep.subr.mxu0 0.0
          %3356 = vmatpush1.msra.mxu0 %v3322
          %3357 = vmatprep.subr.mxu0 0.0
          %3358 = vmatpush1.msra.mxu0 %v3321
          %3359 = vmatprep.subr.mxu0 0.0
          %3360 = vmatpush1.msra.mxu0 %v3320
          %3361 = vmatprep.subr.mxu0 0.0
          %3362 = vmatpush2.msra.mxu0 0.0
          %3363 = vmatprep.subr.mxu0 0.0
          %3364 = vmatpush2.msra.mxu0 0.0
          %3365 = vmatprep.subr.mxu0 0.0
          %3366 = vmatpush2.msra.mxu0 0.0
          %3367 = vmatprep.subr.mxu0 0.0
          %3368 = vmatpush2.msra.mxu0 0.0
          %3369 = vmatprep.subr.mxu0 0.0
          %3370 = vmatpush2.msra.mxu0 0.0
          %3371 = vmatprep.subr.mxu0 0.0
          %3372 = vmatpush2.msra.mxu0 0.0
          %3373 = vmatprep.subr.mxu0 0.0
          %3374 = vmatpush2.msra.mxu0 0.0
          %3375 = vmatprep.subr.mxu0 0.0
          %3376 = vmatpush2.msra.mxu0 0.0
          %3377 = vmatprep.subr.mxu0 0.0
          %3378 = vmatpush2.msra.mxu0 0.0
          %3379 = vmatprep.subr.mxu0 0.0
          %3380 = vmatpush2.msra.mxu0 0.0
          %3381 = vmatprep.subr.mxu0 0.0
          %3382 = vmatpush2.msra.mxu0 0.0
          %3383 = vmatprep.subr.mxu0 0.0
          %3384 = vmatpush2.msra.mxu0 0.0
          %3385 = vmatprep.subr.mxu0 0.0
          %3386 = vmatpush2.msra.mxu0 0.0
          %3387 = vmatprep.subr.mxu0 0.0
          %3388 = vmatpush2.msra.mxu0 0.0
          %3389 = vmatprep.subr.mxu0 0.0
          %3390 = vmatpush2.msra.mxu0 0.0
          %3391 = vmatprep.subr.mxu0 0.0
          %3392 = vmatpush2.msra.mxu0 0.0
          %3393 = vmatprep.mubr.f32.mxu0 0.0
          %3394 = vmatmul.mubr.f32.gmra.mxu0 %v3327
          %v3395 = vpop.f32.mrf.mxu0
          %v3396 = vadd.f32 %v3324, %v3395
          %v3397 = vpop.f32.mrf.mxu0
          %3398 = vdwg.mxu0
          %v3399 = vtanh.pop %v3396
          %v3400 = vld [vmem:[%s20] sm:$0xff]
          %v3401 = vld [vmem:[%s20 + $0x8] sm:$0xff]
          %v3402 = vld [vmem:[%s20 + $0x10] sm:$0xff]
          %v3403 = vld [vmem:[%s20 + $0x18] sm:$0xff]
          %v3404 = vld [vmem:[%s21] sm:$0x1]
          %v3406 = vsel %vm1042, %v3399, 0
          %3408 = vmatprep.subr.mxu0 0.0
          %3409 = vmatpush1.msra.mxu0 0.0
          %3410 = vmatprep.subr.mxu0 0.0
          %3411 = vmatpush1.msra.mxu0 0.0
          %3412 = vmatprep.subr.mxu0 0.0
          %3413 = vmatpush1.msra.mxu0 0.0
          %3414 = vmatprep.subr.mxu0 0.0
          %3415 = vmatpush1.msra.mxu0 0.0
          %3416 = vmatprep.subr.mxu0 0.0
          %3417 = vmatpush1.msra.mxu0 0.0
          %3418 = vmatprep.subr.mxu0 0.0
          %3419 = vmatpush1.msra.mxu0 0.0
          %3420 = vmatprep.subr.mxu0 0.0
          %3421 = vmatpush1.msra.mxu0 0.0
          %3422 = vmatprep.subr.mxu0 0.0
          %3423 = vmatpush1.msra.mxu0 0.0
          %3424 = vmatprep.subr.mxu0 0.0
          %3425 = vmatpush1.msra.mxu0 0.0
          %3426 = vmatprep.subr.mxu0 0.0
          %3427 = vmatpush1.msra.mxu0 0.0
          %3428 = vmatprep.subr.mxu0 0.0
          %3429 = vmatpush1.msra.mxu0 0.0
          %3430 = vmatprep.subr.mxu0 0.0
          %3431 = vmatpush1.msra.mxu0 0.0
          %3432 = vmatprep.subr.mxu0 0.0
          %3433 = vmatpush1.msra.mxu0 %v3403
          %3434 = vmatprep.subr.mxu0 0.0
          %3435 = vmatpush1.msra.mxu0 %v3402
          %3436 = vmatprep.subr.mxu0 0.0
          %3437 = vmatpush1.msra.mxu0 %v3401
          %3438 = vmatprep.subr.mxu0 0.0
          %3439 = vmatpush1.msra.mxu0 %v3400
          %3440 = vmatprep.subr.mxu0 0.0
          %3441 = vmatpush2.msra.mxu0 0.0
          %3442 = vmatprep.subr.mxu0 0.0
          %3443 = vmatpush2.msra.mxu0 0.0
          %3444 = vmatprep.subr.mxu0 0.0
          %3445 = vmatpush2.msra.mxu0 0.0
          %3446 = vmatprep.subr.mxu0 0.0
          %3447 = vmatpush2.msra.mxu0 0.0
          %3448 = vmatprep.subr.mxu0 0.0
          %3449 = vmatpush2.msra.mxu0 0.0
          %3450 = vmatprep.subr.mxu0 0.0
          %3451 = vmatpush2.msra.mxu0 0.0
          %3452 = vmatprep.subr.mxu0 0.0
          %3453 = vmatpush2.msra.mxu0 0.0
          %3454 = vmatprep.subr.mxu0 0.0
          %3455 = vmatpush2.msra.mxu0 0.0
          %3456 = vmatprep.subr.mxu0 0.0
          %3457 = vmatpush2.msra.mxu0 0.0
          %3458 = vmatprep.subr.mxu0 0.0
          %3459 = vmatpush2.msra.mxu0 0.0
          %3460 = vmatprep.subr.mxu0 0.0
          %3461 = vmatpush2.msra.mxu0 0.0
          %3462 = vmatprep.subr.mxu0 0.0
          %3463 = vmatpush2.msra.mxu0 0.0
          %3464 = vmatprep.subr.mxu0 0.0
          %3465 = vmatpush2.msra.mxu0 0.0
          %3466 = vmatprep.subr.mxu0 0.0
          %3467 = vmatpush2.msra.mxu0 0.0
          %3468 = vmatprep.subr.mxu0 0.0
          %3469 = vmatpush2.msra.mxu0 0.0
          %3470 = vmatprep.subr.mxu0 0.0
          %3471 = vmatpush2.msra.mxu0 0.0
          %3472 = vmatprep.mubr.f32.mxu0 0.0
          %3473 = vmatmul.mubr.f32.gmra.mxu0 %v3406
          %v3474 = vpop.f32.mrf.mxu0
          %v3475 = vadd.f32 %v3404, %v3474
          %v3476 = vpop.f32.mrf.mxu0
          %3477 = vdwg.mxu0
          %vm3478 = vcmask 8192
          %v3479 = vsel %vm3478, %v3475, -inf
          %3480 = vmax.xlane.f32.xlu0 %v3479
          %v3481 = vpop.xlane.xlu0 %3480
          %v3482 = vsub.f32 %v3475, %v3481
          %v3483 = vmul.f32 %v3482, 1.442695
          %v3484 = vpow.pop %v3483
          %v3485 = vsel %vm3478, %v3484, 0.0
          %3486 = vadd.xlane.f32.xlu0 %v3485
          %v3487 = vpop.xlane.xlu0 %3486
          %v3488 = vlog2.pop %v3487
          %v3489 = vmul.f32 %v3488, 0.6931472
          %v3490 = vsub.f32 %v3482, %v3489
          %3491 = vst.msk [vmem:[%s954] sm:$0x1] %vm3478, %v3475
          %v3492 = vrcp.pop %v3487
          %v3493 = vmul.f32 %v3484, %v3492
          %3494 = vst.msk [vmem:[%s960] sm:$0x1] %vm3478, %v3493
          %v3495 = vld [vmem:[%s1026] sm:$0x1]
          %v3496 = vmul.f32 %v3495, %v3490
          %v3497 = vsel %vm3478, %v3496, 0.0
          %3498 = vadd.xlane.f32.xlu0 %v3497
          %v3499 = vpop.xlane.xlu0 %3498
          %v3500 = vsub.f32 0.0, %v3499
          %vm3501 = vcmask 0
          %3502 = vst.msk [vmem:[%s1029] sm:$0x1] %vm3501, %v3500
        $region120: #{xlnet_forward.1} parent=111 // pred_fallthru
          _
        %s3503 = sand.u32 %s621, 1
        %s3504 = scalar_lea.sflag [#allocation4], %s3503
        %s3505 = sand.u32 %s621, 1
        %s3506 = scalar_lea.vmem [#allocation3], %s3505
        %s3507 = sand.u32 %s647, 1
        %s3508 = scalar_lea.sflag [#allocation6], %s3507
        %s3509 = sand.u32 %s647, 1
        %s3510 = scalar_lea.vmem [#allocation5], %s3509
        %p3511 = scmp.lt.s32.totalorder %s47, 1
        %s3512 = scalar_select %p3511, %s47, 1
        %s3513 = scalar_lea.vmem %s25, %s3512
        // Predicated region
        $region121: #{xlnet_forward.1} parent=111 // pred_check
          %p3514 = pneg %p631
        $region122: #{xlnet_forward.1} parent=111 // pred_check_branch
          %3516 = sbr.rel (%p3514) target = $region124
        $region123: #{xlnet_forward.1} parent=111 // pred_region
          %s3518 = ssub.s32 16, 16
          %3519 = vsyncadd %s3504, %s3518
          %s3520 = smul.addr %s47, 16
          %s3521 = scalar_lea.hbm %s23, %s3520
          %s3523 = sshll.u32 %s3506, 4
          %s3524 = int_to_ptr.vmem [resolvable:$true] %s3523
          %3526 = dma.vmem_to_hbm [thread:$0]  %s3524, 16, %s3521, %s3504
        $region124: #{xlnet_forward.1} parent=111 // pred_fallthru
          _
        // Predicated region
        $region125: #{xlnet_forward.1} parent=111 // pred_check
          %p3527 = pneg %p657
        $region126: #{xlnet_forward.1} parent=111 // pred_check_branch
          %3529 = sbr.rel (%p3527) target = $region128
        $region127: #{xlnet_forward.1} parent=111 // pred_region
          %s3531 = ssub.s32 16, 16
          %3532 = vsyncadd %s3508, %s3531
          %s3533 = smul.addr %s47, 16
          %s3534 = scalar_lea.hbm %s24, %s3533
          %s3536 = sshll.u32 %s3510, 4
          %s3537 = int_to_ptr.vmem [resolvable:$true] %s3536
          %3539 = dma.vmem_to_hbm [thread:$0]  %s3537, 16, %s3534, %s3508
        $region128: #{xlnet_forward.1} parent=111 // pred_fallthru
          _
        // Predicated region
        $region129: #{xlnet_forward.1} parent=111 // pred_check
          %p3540 = pneg %p683
        $region130: #{xlnet_forward.1} parent=111 // pred_check_branch
          %3542 = sbr.rel (%p3540) target = $region132
        $region131: #{xlnet_forward.1} parent=111 // pred_region
          _
        $region132: #{xlnet_forward.1} parent=111 // pred_fallthru
          _
      $region112: #{xlnet_forward.1} parent=5 // pred_fallthru
        _
      %p3543 = scmp.le.s32.totalorder 2, %s38
      // Predicated region
      $region133: #{xlnet_forward.1} parent=5 // pred_check
        %p3544 = pneg %p3543
      $region134: #{xlnet_forward.1} parent=5 // pred_check_branch
        %3546 = sbr.rel (%p3544) target = $region136
      $region135: #{xlnet_forward.1} parent=5 // pred_region
        %s3547 = ssub.s32 %s38, 2
        // Predicated region
        $region137: #{xlnet_forward.1} parent=135 // pred_check
          %p3548 = pneg %p637
        $region138: #{xlnet_forward.1} parent=135 // pred_check_branch
          %3550 = sbr.rel (%p3548) target = $region140
        $region139: #{xlnet_forward.1} parent=135 // pred_region
          %s3551 = sand.u32 %s622, 1
          %s3552 = scalar_lea.sflag [#allocation4], %s3551
          %s3553 = sand.u32 %s622, 1
          %s3554 = scalar_lea.vmem [#allocation3], %s3553
          %3555 = dma.done %s3552, 16
        $region140: #{xlnet_forward.1} parent=135 // pred_fallthru
          _
        // Predicated region
        $region141: #{xlnet_forward.1} parent=135 // pred_check
          %p3556 = pneg %p663
        $region142: #{xlnet_forward.1} parent=135 // pred_check_branch
          %3558 = sbr.rel (%p3556) target = $region144
        $region143: #{xlnet_forward.1} parent=135 // pred_region
          %s3559 = sand.u32 %s648, 1
          %s3560 = scalar_lea.sflag [#allocation6], %s3559
          %s3561 = sand.u32 %s648, 1
          %s3562 = scalar_lea.vmem [#allocation5], %s3561
          %3563 = dma.done %s3560, 16
        $region144: #{xlnet_forward.1} parent=135 // pred_fallthru
          _
        // Predicated region
        $region145: #{xlnet_forward.1} parent=135 // pred_check
          %p3564 = pneg %p689
        $region146: #{xlnet_forward.1} parent=135 // pred_check_branch
          %3566 = sbr.rel (%p3564) target = $region148
        $region147: #{xlnet_forward.1} parent=135 // pred_region
          %p3567 = scmp.lt.s32.totalorder %s49, 1
          %s3568 = scalar_select %p3567, %s49, 1
          %s3569 = scalar_lea.vmem %s25, %s3568
        $region148: #{xlnet_forward.1} parent=135 // pred_fallthru
          _
      $region136: #{xlnet_forward.1} parent=5 // pred_fallthru
        _
    $region6: #{xlnet_forward.1} parent=1 // loop_footer
      %s42 = sadd.s32 1, %s38
    $region7: #{xlnet_forward.1} parent=1 // loop_footer_branch
      %37 = sbr.rel target = $region3
    $region8: #{xlnet_forward.1} parent=1 // loop_exit
      _
    %3570 = vsyncpa [#allocation4], 1
    %s3571 = scalar_lea.sflag [#allocation4], 1
    %3572 = vsyncpa %s3571, 1
    %3573 = vsyncpa [#allocation6], 1
    %s3574 = scalar_lea.sflag [#allocation6], 1
    %3575 = vsyncpa %s3574, 1

</llo_original>
